<compile_context>
chip_gen: v7x
topology: tpu7x:2x2x1
jax: 0.10.0
libtpu: 0.0.40
codegen_flags: <defaults>
</compile_context>

<pallas_src>
import functools

import jax
import jax.numpy as jnp
from jax import lax
from jax.experimental import pallas as pl
from jax.experimental.pallas import tpu as pltpu

NEG_SLOPE = 0.01     # nn.LeakyReLU() default
BN_EPS = 1e-5        # nn.BatchNorm2d default


def _leaky(x):
    return jnp.where(x >= 0.0, x, NEG_SLOPE * x)


def _round_up(n, m):
    return (n + m - 1) // m * m


# --------------------------------- kernels ----------------------------------

def _pool_kernel(x_ref, ph_ref, pw_ref, o_ref, *, cip):
    """AvgPool2d via separable pooling matrices: o[c] = Ph @ x[c] @ Pw."""
    ph = ph_ref[...]
    pw = pw_ref[...]
    for c in range(cip):                                     # static unroll (small C)
        t = jnp.dot(ph, x_ref[c], preferred_element_type=jnp.float32)
        o_ref[c] = jnp.dot(t, pw, preferred_element_type=jnp.float32)


def _fused_kernel(xp_ref, masks_ref, w1_ref, b1_ref, w21a_ref, w21b_ref, b21_ref,
                  w22_ref, b22_ref, w31a_ref, w31b_ref, w31c_ref, b31_ref,
                  w32_ref, b32_ref, out_ref, ssum_ref, ssq_ref, packed_ref,
                  *, H, W, cip, cop):
    """Stages 1-3 of the down block for one image, everything resident in VMEM."""
    HW = H * W

    def conv3x3(xin, cin, w_ref, b_ref):
        # Tap-packed 'same' 3x3 conv: build the (9*cin, HW) shifted+masked operand in
        # scratch (lane rolls + boundary masks implement the zero padding), then one
        # (cop, 9*cin) @ (9*cin, HW) MXU GEMM with f32 accumulation.
        for t in range(9):
            dh, dw = t // 3 - 1, t % 3 - 1
            off = dh * W + dw
            shifted = xin if off == 0 else pltpu.roll(xin, (-off) % HW, axis=1)
            packed_ref[t * cin:(t + 1) * cin, :] = shifted * masks_ref[t]
        packed = packed_ref[0:9 * cin, :].astype(jnp.bfloat16)
        acc = jnp.dot(w_ref[...], packed, preferred_element_type=jnp.float32)
        return acc + b_ref[...]

    xp = xp_ref[...]                                         # (cip, HW) f32
    xp_bf = xp.astype(jnp.bfloat16)

    # stage 1: x1 = LeakyReLU(conv1(x))
    x1 = _leaky(conv3x3(xp, cip, w1_ref, b1_ref))            # (cop, HW) f32
    x1_bf = x1.astype(jnp.bfloat16)

    # stage 2: x22 = LeakyReLU(conv22(conv21(cat(x, x1))))   [cat -> split weights]
    t2 = (jnp.dot(w21a_ref[...], xp_bf, preferred_element_type=jnp.float32)
          + jnp.dot(w21b_ref[...], x1_bf, preferred_element_type=jnp.float32)
          + b21_ref[...])
    x22 = _leaky(conv3x3(t2, cop, w22_ref, b22_ref))
    x22_bf = x22.astype(jnp.bfloat16)

    # stage 3: out = LeakyReLU(conv32(conv31(cat(x, x1, x22)))) + BN partial stats
    t3 = (jnp.dot(w31a_ref[...], xp_bf, preferred_element_type=jnp.float32)
          + jnp.dot(w31b_ref[...], x1_bf, preferred_element_type=jnp.float32)
          + jnp.dot(w31c_ref[...], x22_bf, preferred_element_type=jnp.float32)
          + b31_ref[...])
    out = _leaky(conv3x3(t3, cop, w32_ref, b32_ref))
    out_ref[...] = out
    ssum_ref[...] = jnp.sum(out, axis=1, keepdims=True)
    ssq_ref[...] = jnp.sum(out * out, axis=1, keepdims=True)


def _bn_kernel(x_ref, scale_ref, shift_ref, o_ref):
    o_ref[...] = x_ref[...] * scale_ref[...] + shift_ref[...]


# ------------------------------ host wrappers --------------------------------

def _cparams():
    # 64 MiB: within v7x's physical VMEM, lets v5e/v6e use larger tiles than the default.
    return pltpu.CompilerParams(dimension_semantics=("parallel",),
                                vmem_limit_bytes=64 * 1024 * 1024)


def _img_spec(*dims):
    # One image per grid step; batch dim squeezed out of the kernel view.
    return pl.BlockSpec((None,) + tuple(dims), lambda n: (n,) + (0,) * len(dims))


def _full_spec(shape):
    zeros = (0,) * len(shape)
    return pl.BlockSpec(tuple(shape), lambda n: zeros)


def avg_pool(x4, k):
    """x4: (N, Cp, Hin, Win) f32 -> (N, Cp, Ho, Wo) f32  (nn.AvgPool2d(kernel_size=k))."""
    N, Cp, Hin, Win = x4.shape
    Ho, Wo = Hin // k, Win // k
    ph = (jnp.arange(Hin)[None, :] // k == jnp.arange(Ho)[:, None]).astype(jnp.float32) / k
    pw = (jnp.arange(Win)[:, None] // k == jnp.arange(Wo)[None, :]).astype(jnp.float32) / k
    return pl.pallas_call(
        functools.partial(_pool_kernel, cip=Cp),
        grid=(N,),
        in_specs=[_img_spec(Cp, Hin, Win), _full_spec(ph.shape), _full_spec(pw.shape)],
        out_specs=_img_spec(Cp, Ho, Wo),
        out_shape=jax.ShapeDtypeStruct((N, Cp, Ho, Wo), jnp.float32),
        compiler_params=_cparams(),
    )(x4, ph, pw)


def fused_stages(xp, masks, wts, *, H, W, cip, cop):
    N = xp.shape[0]
    HW = H * W
    flops = N * 2 * HW * (9 * cip * cop + 18 * cop * cop
                          + (cip + cop) * cop + (cip + 2 * cop) * cop)
    byt = (4 * N * HW * (cip + cop) + 8 * N * cop
           + sum(int(w.size) * w.dtype.itemsize for w in wts) + 4 * masks.size)
    return pl.pallas_call(
        functools.partial(_fused_kernel, H=H, W=W, cip=cip, cop=cop),
        grid=(N,),
        in_specs=[_img_spec(cip, HW), _full_spec(masks.shape)]
                 + [_full_spec(w.shape) for w in wts],
        out_specs=(_img_spec(cop, HW), _img_spec(cop, 1), _img_spec(cop, 1)),
        out_shape=(jax.ShapeDtypeStruct((N, cop, HW), jnp.float32),
                   jax.ShapeDtypeStruct((N, cop, 1), jnp.float32),
                   jax.ShapeDtypeStruct((N, cop, 1), jnp.float32)),
        scratch_shapes=[pltpu.VMEM((9 * max(cip, cop), HW), jnp.float32)],
        compiler_params=_cparams(),
        cost_estimate=pl.CostEstimate(flops=int(flops), transcendentals=0,
                                      bytes_accessed=int(byt)),
    )(xp, masks, *wts)


def bn_apply(x, scale, shift):
    N, C, HW = x.shape
    return pl.pallas_call(
        _bn_kernel,
        grid=(N,),
        in_specs=[_img_spec(C, HW), _full_spec(scale.shape), _full_spec(shift.shape)],
        out_specs=_img_spec(C, HW),
        out_shape=jax.ShapeDtypeStruct((N, C, HW), jnp.float32),
        input_output_aliases={0: 0},
        compiler_params=_cparams(),
    )(x, scale, shift)


# --------------------------- weight / constant plumbing ----------------------

def _pad_axis(a, axis, size):
    if a.shape[axis] == size:
        return a
    pad = [(0, 0)] * a.ndim
    pad[axis] = (0, size - a.shape[axis])
    return jnp.pad(a, pad)


def _pack3x3(w_hwio, cin_p, cout_p):
    # HWIO (3,3,ci,co) -> (cout_p, 9*cin_p) bf16; column index = (kh*3+kw)*cin_p + ci.
    w = _pad_axis(_pad_axis(w_hwio.astype(jnp.float32), 2, cin_p), 3, cout_p)
    return jnp.transpose(w, (3, 0, 1, 2)).reshape(cout_p, 9 * cin_p).astype(jnp.bfloat16)


def _mat1x1(w_io, cin_p, cout_p):
    # (ci, co) -> (cout_p, cin_p) bf16 (lane-dense GEMM orientation: W @ X).
    w = _pad_axis(_pad_axis(w_io.astype(jnp.float32), 0, cin_p), 1, cout_p)
    return jnp.transpose(w).astype(jnp.bfloat16)


def _colvec(b, cout_p):
    return _pad_axis(b.astype(jnp.float32), 0, cout_p).reshape(cout_p, 1)


def _tap_masks(H, W):
    # (9, 1, H*W) validity masks for the 9 taps of a 'same' 3x3 conv (zero padding).
    p = jnp.arange(H * W)
    h, w = p // W, p % W
    rows = []
    for t in range(9):
        dh, dw = t // 3 - 1, t % 3 - 1
        rows.append((h + dh >= 0) & (h + dh < H) & (w + dw >= 0) & (w + dw < W))
    return jnp.stack(rows).astype(jnp.float32).reshape(9, 1, H * W)


# --------------------------------- forward -----------------------------------

def densenet2d_down_block(x_nchw, params, *, down_size):
    """Forward of DenseNet2D_down_block (dropout inactive, BatchNorm in training mode)."""
    N, Ci, Hin, Win = x_nchw.shape
    Co = params["b1"].shape[0]
    cip, cop = _round_up(Ci, 8), _round_up(Co, 8)

    x = _pad_axis(x_nchw.astype(jnp.float32), 1, cip)                # (N, cip, Hin, Win)

    if down_size is not None:
        k = int(down_size)
        Ho, Wo = Hin // k, Win // k
        xp = avg_pool(x, k).reshape(N, cip, Ho * Wo)                 # lane-dense (C, H*W)
    else:
        Ho, Wo = Hin, Win
        xp = x.reshape(N, cip, Hin * Win)
    HW = Ho * Wo

    masks = _tap_masks(Ho, Wo)

    # torch.cat inputs are fed separately -> split the 1x1 weights along input channels.
    w21 = params["w21"].reshape(Ci + Co, Co)
    w31 = params["w31"].reshape(Ci + 2 * Co, Co)
    wts = (
        _pack3x3(params["w1"], cip, cop), _colvec(params["b1"], cop),
        _mat1x1(w21[:Ci], cip, cop), _mat1x1(w21[Ci:], cop, cop), _colvec(params["b21"], cop),
        _pack3x3(params["w22"], cop, cop), _colvec(params["b22"], cop),
        _mat1x1(w31[:Ci], cip, cop), _mat1x1(w31[Ci:Ci + Co], cop, cop),
        _mat1x1(w31[Ci + Co:], cop, cop), _colvec(params["b31"], cop),
        _pack3x3(params["w32"], cop, cop), _colvec(params["b32"], cop),
    )

    out, ssum, ssq = fused_stages(xp, masks, wts, H=Ho, W=Wo, cip=cip, cop=cop)

    # BatchNorm2d (training mode): batch statistics from the fused per-image partial sums.
    # TODO(synk): E[x^2]-E[x]^2 in f32 is cancellation-prone when |mean| >> std; a centered
    # second pass would be bit-safer if exact parity with PyTorch matters.
    cnt = float(N * HW)
    s = jnp.sum(ssum[:, :, 0], axis=0)
    ss = jnp.sum(ssq[:, :, 0], axis=0)
    mean = s / cnt
    var = jnp.maximum(ss / cnt - mean * mean, 0.0)
    gamma = _pad_axis(params["gamma"].astype(jnp.float32), 0, cop)   # padded gamma = 0
    beta = _pad_axis(params["beta"].astype(jnp.float32), 0, cop)
    scale = gamma * lax.rsqrt(var + BN_EPS)
    shift = beta - mean * scale

    y = bn_apply(out, scale.reshape(cop, 1), shift.reshape(cop, 1))  # (N, cop, HW)
    return y.reshape(N, cop, Ho, Wo)[:, :Co]                         # drop channel padding


# ---------------------------- pure-JAX reference -----------------------------

def reference_forward(x, params, *, down_size):
    def conv(v, w_hwio, b, pad):
        o = lax.conv_general_dilated(v, w_hwio, (1, 1), [(pad, pad), (pad, pad)],
                                     dimension_numbers=("NCHW", "HWIO", "NCHW"))
        return o + b.reshape(1, -1, 1, 1)

    if down_size is not None:
        k = int(down_size)
        N, C, H, W = x.shape
        x = x[:, :, :H // k * k, :W // k * k].reshape(N, C, H // k, k, W // k, k).mean(axis=(3, 5))
    x1 = _leaky(conv(x, params["w1"], params["b1"], 1))
    x21 = jnp.concatenate([x, x1], axis=1)
    x22 = _leaky(conv(conv(x21, params["w21"], params["b21"], 0),
                      params["w22"], params["b22"], 1))
    x31 = jnp.concatenate([x21, x22], axis=1)
    out = _leaky(conv(conv(x31, params["w31"], params["b31"], 0),
                      params["w32"], params["b32"], 1))
    mean = out.mean(axis=(0, 2, 3), keepdims=True)
    var = ((out - mean) ** 2).mean(axis=(0, 2, 3), keepdims=True)
    g = params["gamma"].reshape(1, -1, 1, 1)
    b = params["beta"].reshape(1, -1, 1, 1)
    return (out - mean) * lax.rsqrt(var + BN_EPS) * g + b


# --------------------------- deterministic params ---------------------------

def init_params(key, in_ch, out_ch):
    keys = jax.random.split(key, 10)

    def conv_init(kw, kb, kh, kwd, ci, co):
        fan_in = ci * kh * kwd
        bound = 1.0 / (fan_in ** 0.5)       # PyTorch default conv init range
        w = jax.random.uniform(kw, (kh, kwd, ci, co), jnp.float32, -bound, bound)
        b = jax.random.uniform(kb, (co,), jnp.float32, -bound, bound)
        return w, b

    w1, b1 = conv_init(keys[0], keys[1], 3, 3, in_ch, out_ch)
    w21, b21 = conv_init(keys[2], keys[3], 1, 1, in_ch + out_ch, out_ch)
    w22, b22 = conv_init(keys[4], keys[5], 3, 3, out_ch, out_ch)
    w31, b31 = conv_init(keys[6], keys[7], 1, 1, in_ch + 2 * out_ch, out_ch)
    w32, b32 = conv_init(keys[8], keys[9], 3, 3, out_ch, out_ch)
    return dict(
        w1=w1, b1=b1, w21=w21, b21=b21, w22=w22, b22=b22,
        w31=w31, b31=b31, w32=w32, b32=b32,
        gamma=jnp.ones((out_ch,), jnp.float32),   # BatchNorm2d default init
        beta=jnp.zeros((out_ch,), jnp.float32),
    )


if __name__ == "__main__":
    in_ch, out_ch, down_size = 4, 8, 2
    key = jax.random.PRNGKey(0)
    kx, kp = jax.random.split(key)
    x = jax.random.normal(kx, (2, in_ch, 32, 32), jnp.float32)   # NCHW
    params = init_params(kp, in_ch, out_ch)

    fwd = jax.jit(functools.partial(densenet2d_down_block, down_size=down_size))
    y = fwd(x, params)
    jax.block_until_ready(y)

    assert y.shape == (2, out_ch, 32 // down_size, 32 // down_size), y.shape
    assert bool(jnp.all(jnp.isfinite(y)))

    y_ref = jax.jit(functools.partial(reference_forward, down_size=down_size))(x, params)
    err = float(jnp.max(jnp.abs(y - y_ref)))
    assert bool(jnp.allclose(y, y_ref, atol=0.1, rtol=0.1)), f"max abs err vs reference: {err}"
    print("KERNEL_OK")
</pallas_src>

<mosaic_0001>
module attributes {stable_mosaic.version = 11 : i64} {
  func.func @_pool_kernel(%arg0: i32, %arg1: memref<1x8x32x32xf32, #tpu.memory_space<vmem>>, %arg2: memref<16x32xf32, #tpu.memory_space<vmem>>, %arg3: memref<32x16xf32, #tpu.memory_space<vmem>>, %arg4: memref<1x8x16x16xf32, #tpu.memory_space<vmem>>) attributes {dimension_semantics = [#tpu.dimension_semantics<parallel>], iteration_bounds = array<i64: 2>, scalar_prefetch = 0 : i64, scratch_operands = 0 : i64, tpu.core_type = #tpu.core_type<tc>, window_params = [{transform_indices = @transform_0, window_bounds = array<i64: 1, 8, 32, 32>}, {pipeline_mode = #tpu.pipeline_mode<synchronous>, transform_indices = @transform_1, window_bounds = array<i64: 16, 32>}, {pipeline_mode = #tpu.pipeline_mode<synchronous>, transform_indices = @transform_2, window_bounds = array<i64: 32, 16>}, {transform_indices = @transform_3, window_bounds = array<i64: 1, 8, 16, 16>}]} {
    %c0 = arith.constant 0 : index
    %c0_0 = arith.constant 0 : index
    %0 = vector.load %arg2[%c0, %c0_0] : memref<16x32xf32, #tpu.memory_space<vmem>>, vector<16x32xf32>
    %c0_1 = arith.constant 0 : index
    %c0_2 = arith.constant 0 : index
    %1 = vector.load %arg3[%c0_1, %c0_2] : memref<32x16xf32, #tpu.memory_space<vmem>>, vector<32x16xf32>
    %c0_3 = arith.constant 0 : index
    %c0_4 = arith.constant 0 : index
    %c0_5 = arith.constant 0 : index
    %c0_6 = arith.constant 0 : index
    %2 = vector.load %arg1[%c0_3, %c0_4, %c0_5, %c0_6] : memref<1x8x32x32xf32, #tpu.memory_space<vmem>>, vector<1x1x32x32xf32>
    %3 = vector.shape_cast %2 : vector<1x1x32x32xf32> to vector<32x32xf32>
    %cst = arith.constant dense<0.000000e+00> : vector<16x32xf32>
    %4 = tpu.matmul %0, %3, %cst {dimension_numbers = #tpu.dot_dimension_numbers<[1], [0], [0], [1], [0, 0, 1, 1], [], []>} : vector<16x32xf32>, vector<32x32xf32>, vector<16x32xf32> -> vector<16x32xf32>
    %cst_7 = arith.constant dense<0.000000e+00> : vector<16x16xf32>
    %5 = tpu.matmul %4, %1, %cst_7 {dimension_numbers = #tpu.dot_dimension_numbers<[1], [0], [0], [1], [0, 0, 1, 1], [], []>} : vector<16x32xf32>, vector<32x16xf32>, vector<16x16xf32> -> vector<16x16xf32>
    %c0_8 = arith.constant 0 : index
    %c0_9 = arith.constant 0 : index
    %c0_10 = arith.constant 0 : index
    %c0_11 = arith.constant 0 : index
    %6 = vector.load %arg4[%c0_8, %c0_9, %c0_10, %c0_11] : memref<1x8x16x16xf32, #tpu.memory_space<vmem>>, vector<1x1x16x16xf32>
    %7 = vector.shape_cast %6 : vector<1x1x16x16xf32> to vector<16x16xf32>
    %8 = vector.shape_cast %5 : vector<16x16xf32> to vector<1x1x16x16xf32>
    tpu.vector_store %arg4[%c0_8, %c0_9, %c0_10, %c0_11], %8 {strides = array<i32>} : memref<1x8x16x16xf32, #tpu.memory_space<vmem>>, vector<1x1x16x16xf32>,
    %c0_12 = arith.constant 0 : index
    %c1 = arith.constant 1 : index
    %c0_13 = arith.constant 0 : index
    %c0_14 = arith.constant 0 : index
    %9 = vector.load %arg1[%c0_12, %c1, %c0_13, %c0_14] : memref<1x8x32x32xf32, #tpu.memory_space<vmem>>, vector<1x1x32x32xf32>
    %10 = vector.shape_cast %9 : vector<1x1x32x32xf32> to vector<32x32xf32>
    %cst_15 = arith.constant dense<0.000000e+00> : vector<16x32xf32>
    %11 = tpu.matmul %0, %10, %cst_15 {dimension_numbers = #tpu.dot_dimension_numbers<[1], [0], [0], [1], [0, 0, 1, 1], [], []>} : vector<16x32xf32>, vector<32x32xf32>, vector<16x32xf32> -> vector<16x32xf32>
    %cst_16 = arith.constant dense<0.000000e+00> : vector<16x16xf32>
    %12 = tpu.matmul %11, %1, %cst_16 {dimension_numbers = #tpu.dot_dimension_numbers<[1], [0], [0], [1], [0, 0, 1, 1], [], []>} : vector<16x32xf32>, vector<32x16xf32>, vector<16x16xf32> -> vector<16x16xf32>
    %c0_17 = arith.constant 0 : index
    %c1_18 = arith.constant 1 : index
    %c0_19 = arith.constant 0 : index
    %c0_20 = arith.constant 0 : index
    %13 = vector.load %arg4[%c0_17, %c1_18, %c0_19, %c0_20] : memref<1x8x16x16xf32, #tpu.memory_space<vmem>>, vector<1x1x16x16xf32>
    %14 = vector.shape_cast %13 : vector<1x1x16x16xf32> to vector<16x16xf32>
    %15 = vector.shape_cast %12 : vector<16x16xf32> to vector<1x1x16x16xf32>
    tpu.vector_store %arg4[%c0_17, %c1_18, %c0_19, %c0_20], %15 {strides = array<i32>} : memref<1x8x16x16xf32, #tpu.memory_space<vmem>>, vector<1x1x16x16xf32>,
    %c0_21 = arith.constant 0 : index
    %c2 = arith.constant 2 : index
    %c0_22 = arith.constant 0 : index
    %c0_23 = arith.constant 0 : index
    %16 = vector.load %arg1[%c0_21, %c2, %c0_22, %c0_23] : memref<1x8x32x32xf32, #tpu.memory_space<vmem>>, vector<1x1x32x32xf32>
    %17 = vector.shape_cast %16 : vector<1x1x32x32xf32> to vector<32x32xf32>
    %cst_24 = arith.constant dense<0.000000e+00> : vector<16x32xf32>
    %18 = tpu.matmul %0, %17, %cst_24 {dimension_numbers = #tpu.dot_dimension_numbers<[1], [0], [0], [1], [0, 0, 1, 1], [], []>} : vector<16x32xf32>, vector<32x32xf32>, vector<16x32xf32> -> vector<16x32xf32>
    %cst_25 = arith.constant dense<0.000000e+00> : vector<16x16xf32>
    %19 = tpu.matmul %18, %1, %cst_25 {dimension_numbers = #tpu.dot_dimension_numbers<[1], [0], [0], [1], [0, 0, 1, 1], [], []>} : vector<16x32xf32>, vector<32x16xf32>, vector<16x16xf32> -> vector<16x16xf32>
    %c0_26 = arith.constant 0 : index
    %c2_27 = arith.constant 2 : index
    %c0_28 = arith.constant 0 : index
    %c0_29 = arith.constant 0 : index
    %20 = vector.load %arg4[%c0_26, %c2_27, %c0_28, %c0_29] : memref<1x8x16x16xf32, #tpu.memory_space<vmem>>, vector<1x1x16x16xf32>
    %21 = vector.shape_cast %20 : vector<1x1x16x16xf32> to vector<16x16xf32>
    %22 = vector.shape_cast %19 : vector<16x16xf32> to vector<1x1x16x16xf32>
    tpu.vector_store %arg4[%c0_26, %c2_27, %c0_28, %c0_29], %22 {strides = array<i32>} : memref<1x8x16x16xf32, #tpu.memory_space<vmem>>, vector<1x1x16x16xf32>,
    %c0_30 = arith.constant 0 : index
    %c3 = arith.constant 3 : index
    %c0_31 = arith.constant 0 : index
    %c0_32 = arith.constant 0 : index
    %23 = vector.load %arg1[%c0_30, %c3, %c0_31, %c0_32] : memref<1x8x32x32xf32, #tpu.memory_space<vmem>>, vector<1x1x32x32xf32>
    %24 = vector.shape_cast %23 : vector<1x1x32x32xf32> to vector<32x32xf32>
    %cst_33 = arith.constant dense<0.000000e+00> : vector<16x32xf32>
    %25 = tpu.matmul %0, %24, %cst_33 {dimension_numbers = #tpu.dot_dimension_numbers<[1], [0], [0], [1], [0, 0, 1, 1], [], []>} : vector<16x32xf32>, vector<32x32xf32>, vector<16x32xf32> -> vector<16x32xf32>
    %cst_34 = arith.constant dense<0.000000e+00> : vector<16x16xf32>
    %26 = tpu.matmul %25, %1, %cst_34 {dimension_numbers = #tpu.dot_dimension_numbers<[1], [0], [0], [1], [0, 0, 1, 1], [], []>} : vector<16x32xf32>, vector<32x16xf32>, vector<16x16xf32> -> vector<16x16xf32>
    %c0_35 = arith.constant 0 : index
    %c3_36 = arith.constant 3 : index
    %c0_37 = arith.constant 0 : index
    %c0_38 = arith.constant 0 : index
    %27 = vector.load %arg4[%c0_35, %c3_36, %c0_37, %c0_38] : memref<1x8x16x16xf32, #tpu.memory_space<vmem>>, vector<1x1x16x16xf32>
    %28 = vector.shape_cast %27 : vector<1x1x16x16xf32> to vector<16x16xf32>
    %29 = vector.shape_cast %26 : vector<16x16xf32> to vector<1x1x16x16xf32>
    tpu.vector_store %arg4[%c0_35, %c3_36, %c0_37, %c0_38], %29 {strides = array<i32>} : memref<1x8x16x16xf32, #tpu.memory_space<vmem>>, vector<1x1x16x16xf32>,
    %c0_39 = arith.constant 0 : index
    %c4 = arith.constant 4 : index
    %c0_40 = arith.constant 0 : index
    %c0_41 = arith.constant 0 : index
    %30 = vector.load %arg1[%c0_39, %c4, %c0_40, %c0_41] : memref<1x8x32x32xf32, #tpu.memory_space<vmem>>, vector<1x1x32x32xf32>
    %31 = vector.shape_cast %30 : vector<1x1x32x32xf32> to vector<32x32xf32>
    %cst_42 = arith.constant dense<0.000000e+00> : vector<16x32xf32>
    %32 = tpu.matmul %0, %31, %cst_42 {dimension_numbers = #tpu.dot_dimension_numbers<[1], [0], [0], [1], [0, 0, 1, 1], [], []>} : vector<16x32xf32>, vector<32x32xf32>, vector<16x32xf32> -> vector<16x32xf32>
    %cst_43 = arith.constant dense<0.000000e+00> : vector<16x16xf32>
    %33 = tpu.matmul %32, %1, %cst_43 {dimension_numbers = #tpu.dot_dimension_numbers<[1], [0], [0], [1], [0, 0, 1, 1], [], []>} : vector<16x32xf32>, vector<32x16xf32>, vector<16x16xf32> -> vector<16x16xf32>
    %c0_44 = arith.constant 0 : index
    %c4_45 = arith.constant 4 : index
    %c0_46 = arith.constant 0 : index
    %c0_47 = arith.constant 0 : index
    %34 = vector.load %arg4[%c0_44, %c4_45, %c0_46, %c0_47] : memref<1x8x16x16xf32, #tpu.memory_space<vmem>>, vector<1x1x16x16xf32>
    %35 = vector.shape_cast %34 : vector<1x1x16x16xf32> to vector<16x16xf32>
    %36 = vector.shape_cast %33 : vector<16x16xf32> to vector<1x1x16x16xf32>
    tpu.vector_store %arg4[%c0_44, %c4_45, %c0_46, %c0_47], %36 {strides = array<i32>} : memref<1x8x16x16xf32, #tpu.memory_space<vmem>>, vector<1x1x16x16xf32>,
    %c0_48 = arith.constant 0 : index
    %c5 = arith.constant 5 : index
    %c0_49 = arith.constant 0 : index
    %c0_50 = arith.constant 0 : index
    %37 = vector.load %arg1[%c0_48, %c5, %c0_49, %c0_50] : memref<1x8x32x32xf32, #tpu.memory_space<vmem>>, vector<1x1x32x32xf32>
    %38 = vector.shape_cast %37 : vector<1x1x32x32xf32> to vector<32x32xf32>
    %cst_51 = arith.constant dense<0.000000e+00> : vector<16x32xf32>
    %39 = tpu.matmul %0, %38, %cst_51 {dimension_numbers = #tpu.dot_dimension_numbers<[1], [0], [0], [1], [0, 0, 1, 1], [], []>} : vector<16x32xf32>, vector<32x32xf32>, vector<16x32xf32> -> vector<16x32xf32>
    %cst_52 = arith.constant dense<0.000000e+00> : vector<16x16xf32>
    %40 = tpu.matmul %39, %1, %cst_52 {dimension_numbers = #tpu.dot_dimension_numbers<[1], [0], [0], [1], [0, 0, 1, 1], [], []>} : vector<16x32xf32>, vector<32x16xf32>, vector<16x16xf32> -> vector<16x16xf32>
    %c0_53 = arith.constant 0 : index
    %c5_54 = arith.constant 5 : index
    %c0_55 = arith.constant 0 : index
    %c0_56 = arith.constant 0 : index
    %41 = vector.load %arg4[%c0_53, %c5_54, %c0_55, %c0_56] : memref<1x8x16x16xf32, #tpu.memory_space<vmem>>, vector<1x1x16x16xf32>
    %42 = vector.shape_cast %41 : vector<1x1x16x16xf32> to vector<16x16xf32>
    %43 = vector.shape_cast %40 : vector<16x16xf32> to vector<1x1x16x16xf32>
    tpu.vector_store %arg4[%c0_53, %c5_54, %c0_55, %c0_56], %43 {strides = array<i32>} : memref<1x8x16x16xf32, #tpu.memory_space<vmem>>, vector<1x1x16x16xf32>,
    %c0_57 = arith.constant 0 : index
    %c6 = arith.constant 6 : index
    %c0_58 = arith.constant 0 : index
    %c0_59 = arith.constant 0 : index
    %44 = vector.load %arg1[%c0_57, %c6, %c0_58, %c0_59] : memref<1x8x32x32xf32, #tpu.memory_space<vmem>>, vector<1x1x32x32xf32>
    %45 = vector.shape_cast %44 : vector<1x1x32x32xf32> to vector<32x32xf32>
    %cst_60 = arith.constant dense<0.000000e+00> : vector<16x32xf32>
    %46 = tpu.matmul %0, %45, %cst_60 {dimension_numbers = #tpu.dot_dimension_numbers<[1], [0], [0], [1], [0, 0, 1, 1], [], []>} : vector<16x32xf32>, vector<32x32xf32>, vector<16x32xf32> -> vector<16x32xf32>
    %cst_61 = arith.constant dense<0.000000e+00> : vector<16x16xf32>
    %47 = tpu.matmul %46, %1, %cst_61 {dimension_numbers = #tpu.dot_dimension_numbers<[1], [0], [0], [1], [0, 0, 1, 1], [], []>} : vector<16x32xf32>, vector<32x16xf32>, vector<16x16xf32> -> vector<16x16xf32>
    %c0_62 = arith.constant 0 : index
    %c6_63 = arith.constant 6 : index
    %c0_64 = arith.constant 0 : index
    %c0_65 = arith.constant 0 : index
    %48 = vector.load %arg4[%c0_62, %c6_63, %c0_64, %c0_65] : memref<1x8x16x16xf32, #tpu.memory_space<vmem>>, vector<1x1x16x16xf32>
    %49 = vector.shape_cast %48 : vector<1x1x16x16xf32> to vector<16x16xf32>
    %50 = vector.shape_cast %47 : vector<16x16xf32> to vector<1x1x16x16xf32>
    tpu.vector_store %arg4[%c0_62, %c6_63, %c0_64, %c0_65], %50 {strides = array<i32>} : memref<1x8x16x16xf32, #tpu.memory_space<vmem>>, vector<1x1x16x16xf32>,
    %c0_66 = arith.constant 0 : index
    %c7 = arith.constant 7 : index
    %c0_67 = arith.constant 0 : index
    %c0_68 = arith.constant 0 : index
    %51 = vector.load %arg1[%c0_66, %c7, %c0_67, %c0_68] : memref<1x8x32x32xf32, #tpu.memory_space<vmem>>, vector<1x1x32x32xf32>
    %52 = vector.shape_cast %51 : vector<1x1x32x32xf32> to vector<32x32xf32>
    %cst_69 = arith.constant dense<0.000000e+00> : vector<16x32xf32>
    %53 = tpu.matmul %0, %52, %cst_69 {dimension_numbers = #tpu.dot_dimension_numbers<[1], [0], [0], [1], [0, 0, 1, 1], [], []>} : vector<16x32xf32>, vector<32x32xf32>, vector<16x32xf32> -> vector<16x32xf32>
    %cst_70 = arith.constant dense<0.000000e+00> : vector<16x16xf32>
    %54 = tpu.matmul %53, %1, %cst_70 {dimension_numbers = #tpu.dot_dimension_numbers<[1], [0], [0], [1], [0, 0, 1, 1], [], []>} : vector<16x32xf32>, vector<32x16xf32>, vector<16x16xf32> -> vector<16x16xf32>
    %c0_71 = arith.constant 0 : index
    %c7_72 = arith.constant 7 : index
    %c0_73 = arith.constant 0 : index
    %c0_74 = arith.constant 0 : index
    %55 = vector.load %arg4[%c0_71, %c7_72, %c0_73, %c0_74] : memref<1x8x16x16xf32, #tpu.memory_space<vmem>>, vector<1x1x16x16xf32>
    %56 = vector.shape_cast %55 : vector<1x1x16x16xf32> to vector<16x16xf32>
    %57 = vector.shape_cast %54 : vector<16x16xf32> to vector<1x1x16x16xf32>
    tpu.vector_store %arg4[%c0_71, %c7_72, %c0_73, %c0_74], %57 {strides = array<i32>} : memref<1x8x16x16xf32, #tpu.memory_space<vmem>>, vector<1x1x16x16xf32>,
    return
  }
  func.func @transform_0(%arg0: i32) -> (i32, i32, i32, i32) {
    %c0_i32 = arith.constant 0 : i32
    %c0_i32_0 = arith.constant 0 : i32
    %c0_i32_1 = arith.constant 0 : i32
    %c0_i32_2 = arith.constant 0 : i32
    return %arg0, %c0_i32, %c0_i32_0, %c0_i32_1 : i32, i32, i32, i32
  }
  func.func @transform_1(%arg0: i32) -> (i32, i32) {
    %c0_i32 = arith.constant 0 : i32
    %c0_i32_0 = arith.constant 0 : i32
    %c0_i32_1 = arith.constant 0 : i32
    return %c0_i32, %c0_i32_0 : i32, i32
  }
  func.func @transform_2(%arg0: i32) -> (i32, i32) {
    %c0_i32 = arith.constant 0 : i32
    %c0_i32_0 = arith.constant 0 : i32
    %c0_i32_1 = arith.constant 0 : i32
    return %c0_i32, %c0_i32_0 : i32, i32
  }
  func.func @transform_3(%arg0: i32) -> (i32, i32, i32, i32) {
    %c0_i32 = arith.constant 0 : i32
    %c0_i32_0 = arith.constant 0 : i32
    %c0_i32_1 = arith.constant 0 : i32
    %c0_i32_2 = arith.constant 0 : i32
    return %arg0, %c0_i32, %c0_i32_0, %c0_i32_1 : i32, i32, i32, i32
  }
}

module attributes {stable_mosaic.version = 11 : i64} {
  func.func @_bn_kernel(%arg0: i32, %arg1: memref<1x8x256xf32, #tpu.memory_space<vmem>>, %arg2: memref<8x1xf32, #tpu.memory_space<vmem>>, %arg3: memref<8x1xf32, #tpu.memory_space<vmem>>, %arg4: memref<1x8x256xf32, #tpu.memory_space<vmem>>) attributes {dimension_semantics = [#tpu.dimension_semantics<parallel>], iteration_bounds = array<i64: 2>, scalar_prefetch = 0 : i64, scratch_operands = 0 : i64, tpu.core_type = #tpu.core_type<tc>, window_params = [{transform_indices = @transform_0, window_bounds = array<i64: 1, 8, 256>}, {pipeline_mode = #tpu.pipeline_mode<synchronous>, transform_indices = @transform_1, window_bounds = array<i64: 8, 1>}, {pipeline_mode = #tpu.pipeline_mode<synchronous>, transform_indices = @transform_2, window_bounds = array<i64: 8, 1>}, {transform_indices = @transform_3, window_bounds = array<i64: 1, 8, 256>}]} {
    %c0 = arith.constant 0 : index
    %c0_0 = arith.constant 0 : index
    %c0_1 = arith.constant 0 : index
    %0 = vector.load %arg1[%c0, %c0_0, %c0_1] : memref<1x8x256xf32, #tpu.memory_space<vmem>>, vector<1x8x256xf32>
    %1 = vector.shape_cast %0 : vector<1x8x256xf32> to vector<8x256xf32>
    %c0_2 = arith.constant 0 : index
    %c0_3 = arith.constant 0 : index
    %2 = vector.load %arg2[%c0_2, %c0_3] : memref<8x1xf32, #tpu.memory_space<vmem>>, vector<8x1xf32>
    %3 = vector.broadcast %2 : vector<8x1xf32> to vector<8x256xf32>
    %4 = arith.mulf %1, %3 : vector<8x256xf32>
    %c0_4 = arith.constant 0 : index
    %c0_5 = arith.constant 0 : index
    %5 = vector.load %arg3[%c0_4, %c0_5] : memref<8x1xf32, #tpu.memory_space<vmem>>, vector<8x1xf32>
    %6 = vector.broadcast %5 : vector<8x1xf32> to vector<8x256xf32>
    %7 = arith.addf %4, %6 : vector<8x256xf32>
    %c0_6 = arith.constant 0 : index
    %c0_7 = arith.constant 0 : index
    %c0_8 = arith.constant 0 : index
    %8 = vector.load %arg4[%c0_6, %c0_7, %c0_8] : memref<1x8x256xf32, #tpu.memory_space<vmem>>, vector<1x8x256xf32>
    %9 = vector.shape_cast %8 : vector<1x8x256xf32> to vector<8x256xf32>
    %10 = vector.shape_cast %7 : vector<8x256xf32> to vector<1x8x256xf32>
    tpu.vector_store %arg4[%c0_6, %c0_7, %c0_8], %10 {strides = array<i32>} : memref<1x8x256xf32, #tpu.memory_space<vmem>>, vector<1x8x256xf32>,
    return
  }
  func.func @transform_0(%arg0: i32) -> (i32, i32, i32) {
    %c0_i32 = arith.constant 0 : i32
    %c0_i32_0 = arith.constant 0 : i32
    %c0_i32_1 = arith.constant 0 : i32
    return %arg0, %c0_i32, %c0_i32_0 : i32, i32, i32
  }
  func.func @transform_1(%arg0: i32) -> (i32, i32) {
    %c0_i32 = arith.constant 0 : i32
    %c0_i32_0 = arith.constant 0 : i32
    %c0_i32_1 = arith.constant 0 : i32
    return %c0_i32, %c0_i32_0 : i32, i32
  }
  func.func @transform_2(%arg0: i32) -> (i32, i32) {
    %c0_i32 = arith.constant 0 : i32
    %c0_i32_0 = arith.constant 0 : i32
    %c0_i32_1 = arith.constant 0 : i32
    return %c0_i32, %c0_i32_0 : i32, i32
  }
  func.func @transform_3(%arg0: i32) -> (i32, i32, i32) {
    %c0_i32 = arith.constant 0 : i32
    %c0_i32_0 = arith.constant 0 : i32
    %c0_i32_1 = arith.constant 0 : i32
    return %arg0, %c0_i32, %c0_i32_0 : i32, i32, i32
  }
}

module attributes {stable_mosaic.version = 11 : i64} {
  func.func @_fused_kernel(%arg0: i32, %arg1: memref<1x8x256xf32, #tpu.memory_space<vmem>>, %arg2: memref<9x1x256xf32, #tpu.memory_space<vmem>>, %arg3: memref<8x72xbf16, #tpu.memory_space<vmem>>, %arg4: memref<8x1xf32, #tpu.memory_space<vmem>>, %arg5: memref<8x8xbf16, #tpu.memory_space<vmem>>, %arg6: memref<8x8xbf16, #tpu.memory_space<vmem>>, %arg7: memref<8x1xf32, #tpu.memory_space<vmem>>, %arg8: memref<8x72xbf16, #tpu.memory_space<vmem>>, %arg9: memref<8x1xf32, #tpu.memory_space<vmem>>, %arg10: memref<8x8xbf16, #tpu.memory_space<vmem>>, %arg11: memref<8x8xbf16, #tpu.memory_space<vmem>>, %arg12: memref<8x8xbf16, #tpu.memory_space<vmem>>, %arg13: memref<8x1xf32, #tpu.memory_space<vmem>>, %arg14: memref<8x72xbf16, #tpu.memory_space<vmem>>, %arg15: memref<8x1xf32, #tpu.memory_space<vmem>>, %arg16: memref<1x8x256xf32, #tpu.memory_space<vmem>>, %arg17: memref<1x8x1xf32, #tpu.memory_space<vmem>>, %arg18: memref<1x8x1xf32, #tpu.memory_space<vmem>>, %arg19: memref<72x256xf32, #tpu.memory_space<vmem>>) attributes {dimension_semantics = [#tpu.dimension_semantics<parallel>], iteration_bounds = array<i64: 2>, scalar_prefetch = 0 : i64, scratch_operands = 1 : i64, tpu.core_type = #tpu.core_type<tc>, window_params = [{transform_indices = @transform_0, window_bounds = array<i64: 1, 8, 256>}, {pipeline_mode = #tpu.pipeline_mode<synchronous>, transform_indices = @transform_1, window_bounds = array<i64: 9, 1, 256>}, {pipeline_mode = #tpu.pipeline_mode<synchronous>, transform_indices = @transform_2, window_bounds = array<i64: 8, 72>}, {pipeline_mode = #tpu.pipeline_mode<synchronous>, transform_indices = @transform_3, window_bounds = array<i64: 8, 1>}, {pipeline_mode = #tpu.pipeline_mode<synchronous>, transform_indices = @transform_4, window_bounds = array<i64: 8, 8>}, {pipeline_mode = #tpu.pipeline_mode<synchronous>, transform_indices = @transform_5, window_bounds = array<i64: 8, 8>}, {pipeline_mode = #tpu.pipeline_mode<synchronous>, transform_indices = @transform_6, window_bounds = array<i64: 8, 1>}, {pipeline_mode = #tpu.pipeline_mode<synchronous>, transform_indices = @transform_7, window_bounds = array<i64: 8, 72>}, {pipeline_mode = #tpu.pipeline_mode<synchronous>, transform_indices = @transform_8, window_bounds = array<i64: 8, 1>}, {pipeline_mode = #tpu.pipeline_mode<synchronous>, transform_indices = @transform_9, window_bounds = array<i64: 8, 8>}, {pipeline_mode = #tpu.pipeline_mode<synchronous>, transform_indices = @transform_10, window_bounds = array<i64: 8, 8>}, {pipeline_mode = #tpu.pipeline_mode<synchronous>, transform_indices = @transform_11, window_bounds = array<i64: 8, 8>}, {pipeline_mode = #tpu.pipeline_mode<synchronous>, transform_indices = @transform_12, window_bounds = array<i64: 8, 1>}, {pipeline_mode = #tpu.pipeline_mode<synchronous>, transform_indices = @transform_13, window_bounds = array<i64: 8, 72>}, {pipeline_mode = #tpu.pipeline_mode<synchronous>, transform_indices = @transform_14, window_bounds = array<i64: 8, 1>}, {transform_indices = @transform_15, window_bounds = array<i64: 1, 8, 256>}, {transform_indices = @transform_16, window_bounds = array<i64: 1, 8, 1>}, {transform_indices = @transform_17, window_bounds = array<i64: 1, 8, 1>}]} {
    %c0 = arith.constant 0 : index
    %c0_0 = arith.constant 0 : index
    %c0_1 = arith.constant 0 : index
    %0 = vector.load %arg1[%c0, %c0_0, %c0_1] : memref<1x8x256xf32, #tpu.memory_space<vmem>>, vector<1x8x256xf32>
    %1 = vector.shape_cast %0 : vector<1x8x256xf32> to vector<8x256xf32>
    %2 = arith.truncf %1 : vector<8x256xf32> to vector<8x256xbf16>
    %c17_i32 = arith.constant 17 : i32
    %3 = tpu.dynamic_rotate %1 by %c17_i32 dim 1 : vector<8x256xf32>, i32 -> vector<8x256xf32>
    %c0_2 = arith.constant 0 : index
    %c0_3 = arith.constant 0 : index
    %c0_4 = arith.constant 0 : index
    %4 = vector.load %arg2[%c0_2, %c0_3, %c0_4] : memref<9x1x256xf32, #tpu.memory_space<vmem>>, vector<1x1x256xf32>
    %5 = vector.shape_cast %4 : vector<1x1x256xf32> to vector<1x256xf32>
    %6 = vector.broadcast %5 : vector<1x256xf32> to vector<8x256xf32>
    %7 = arith.mulf %3, %6 : vector<8x256xf32>
    %c0_5 = arith.constant 0 : index
    %c0_6 = arith.constant 0 : index
    %8 = vector.load %arg19[%c0_5, %c0_6] : memref<72x256xf32, #tpu.memory_space<vmem>>, vector<8x256xf32>
    tpu.vector_store %arg19[%c0_5, %c0_6], %7 {strides = array<i32>} : memref<72x256xf32, #tpu.memory_space<vmem>>, vector<8x256xf32>,
    %c16_i32 = arith.constant 16 : i32
    %9 = tpu.dynamic_rotate %1 by %c16_i32 dim 1 : vector<8x256xf32>, i32 -> vector<8x256xf32>
    %c1 = arith.constant 1 : index
    %c0_7 = arith.constant 0 : index
    %c0_8 = arith.constant 0 : index
    %10 = vector.load %arg2[%c1, %c0_7, %c0_8] : memref<9x1x256xf32, #tpu.memory_space<vmem>>, vector<1x1x256xf32>
    %11 = vector.shape_cast %10 : vector<1x1x256xf32> to vector<1x256xf32>
    %12 = vector.broadcast %11 : vector<1x256xf32> to vector<8x256xf32>
    %13 = arith.mulf %9, %12 : vector<8x256xf32>
    %c8 = arith.constant 8 : index
    %c0_9 = arith.constant 0 : index
    %14 = vector.load %arg19[%c8, %c0_9] : memref<72x256xf32, #tpu.memory_space<vmem>>, vector<8x256xf32>
    tpu.vector_store %arg19[%c8, %c0_9], %13 {strides = array<i32>} : memref<72x256xf32, #tpu.memory_space<vmem>>, vector<8x256xf32>,
    %c15_i32 = arith.constant 15 : i32
    %15 = tpu.dynamic_rotate %1 by %c15_i32 dim 1 : vector<8x256xf32>, i32 -> vector<8x256xf32>
    %c2 = arith.constant 2 : index
    %c0_10 = arith.constant 0 : index
    %c0_11 = arith.constant 0 : index
    %16 = vector.load %arg2[%c2, %c0_10, %c0_11] : memref<9x1x256xf32, #tpu.memory_space<vmem>>, vector<1x1x256xf32>
    %17 = vector.shape_cast %16 : vector<1x1x256xf32> to vector<1x256xf32>
    %18 = vector.broadcast %17 : vector<1x256xf32> to vector<8x256xf32>
    %19 = arith.mulf %15, %18 : vector<8x256xf32>
    %c16 = arith.constant 16 : index
    %c0_12 = arith.constant 0 : index
    %20 = vector.load %arg19[%c16, %c0_12] : memref<72x256xf32, #tpu.memory_space<vmem>>, vector<8x256xf32>
    tpu.vector_store %arg19[%c16, %c0_12], %19 {strides = array<i32>} : memref<72x256xf32, #tpu.memory_space<vmem>>, vector<8x256xf32>,
    %c1_i32 = arith.constant 1 : i32
    %21 = tpu.dynamic_rotate %1 by %c1_i32 dim 1 : vector<8x256xf32>, i32 -> vector<8x256xf32>
    %c3 = arith.constant 3 : index
    %c0_13 = arith.constant 0 : index
    %c0_14 = arith.constant 0 : index
    %22 = vector.load %arg2[%c3, %c0_13, %c0_14] : memref<9x1x256xf32, #tpu.memory_space<vmem>>, vector<1x1x256xf32>
    %23 = vector.shape_cast %22 : vector<1x1x256xf32> to vector<1x256xf32>
    %24 = vector.broadcast %23 : vector<1x256xf32> to vector<8x256xf32>
    %25 = arith.mulf %21, %24 : vector<8x256xf32>
    %c24 = arith.constant 24 : index
    %c0_15 = arith.constant 0 : index
    %26 = vector.load %arg19[%c24, %c0_15] : memref<72x256xf32, #tpu.memory_space<vmem>>, vector<8x256xf32>
    tpu.vector_store %arg19[%c24, %c0_15], %25 {strides = array<i32>} : memref<72x256xf32, #tpu.memory_space<vmem>>, vector<8x256xf32>,
    %c4 = arith.constant 4 : index
    %c0_16 = arith.constant 0 : index
    %c0_17 = arith.constant 0 : index
    %27 = vector.load %arg2[%c4, %c0_16, %c0_17] : memref<9x1x256xf32, #tpu.memory_space<vmem>>, vector<1x1x256xf32>
    %28 = vector.shape_cast %27 : vector<1x1x256xf32> to vector<1x256xf32>
    %29 = vector.broadcast %28 : vector<1x256xf32> to vector<8x256xf32>
    %30 = arith.mulf %1, %29 : vector<8x256xf32>
    %c32 = arith.constant 32 : index
    %c0_18 = arith.constant 0 : index
    %31 = vector.load %arg19[%c32, %c0_18] : memref<72x256xf32, #tpu.memory_space<vmem>>, vector<8x256xf32>
    tpu.vector_store %arg19[%c32, %c0_18], %30 {strides = array<i32>} : memref<72x256xf32, #tpu.memory_space<vmem>>, vector<8x256xf32>,
    %c255_i32 = arith.constant 255 : i32
    %32 = tpu.dynamic_rotate %1 by %c255_i32 dim 1 : vector<8x256xf32>, i32 -> vector<8x256xf32>
    %c5 = arith.constant 5 : index
    %c0_19 = arith.constant 0 : index
    %c0_20 = arith.constant 0 : index
    %33 = vector.load %arg2[%c5, %c0_19, %c0_20] : memref<9x1x256xf32, #tpu.memory_space<vmem>>, vector<1x1x256xf32>
    %34 = vector.shape_cast %33 : vector<1x1x256xf32> to vector<1x256xf32>
    %35 = vector.broadcast %34 : vector<1x256xf32> to vector<8x256xf32>
    %36 = arith.mulf %32, %35 : vector<8x256xf32>
    %c40 = arith.constant 40 : index
    %c0_21 = arith.constant 0 : index
    %37 = vector.load %arg19[%c40, %c0_21] : memref<72x256xf32, #tpu.memory_space<vmem>>, vector<8x256xf32>
    tpu.vector_store %arg19[%c40, %c0_21], %36 {strides = array<i32>} : memref<72x256xf32, #tpu.memory_space<vmem>>, vector<8x256xf32>,
    %c241_i32 = arith.constant 241 : i32
    %38 = tpu.dynamic_rotate %1 by %c241_i32 dim 1 : vector<8x256xf32>, i32 -> vector<8x256xf32>
    %c6 = arith.constant 6 : index
    %c0_22 = arith.constant 0 : index
    %c0_23 = arith.constant 0 : index
    %39 = vector.load %arg2[%c6, %c0_22, %c0_23] : memref<9x1x256xf32, #tpu.memory_space<vmem>>, vector<1x1x256xf32>
    %40 = vector.shape_cast %39 : vector<1x1x256xf32> to vector<1x256xf32>
    %41 = vector.broadcast %40 : vector<1x256xf32> to vector<8x256xf32>
    %42 = arith.mulf %38, %41 : vector<8x256xf32>
    %c48 = arith.constant 48 : index
    %c0_24 = arith.constant 0 : index
    %43 = vector.load %arg19[%c48, %c0_24] : memref<72x256xf32, #tpu.memory_space<vmem>>, vector<8x256xf32>
    tpu.vector_store %arg19[%c48, %c0_24], %42 {strides = array<i32>} : memref<72x256xf32, #tpu.memory_space<vmem>>, vector<8x256xf32>,
    %c240_i32 = arith.constant 240 : i32
    %44 = tpu.dynamic_rotate %1 by %c240_i32 dim 1 : vector<8x256xf32>, i32 -> vector<8x256xf32>
    %c7 = arith.constant 7 : index
    %c0_25 = arith.constant 0 : index
    %c0_26 = arith.constant 0 : index
    %45 = vector.load %arg2[%c7, %c0_25, %c0_26] : memref<9x1x256xf32, #tpu.memory_space<vmem>>, vector<1x1x256xf32>
    %46 = vector.shape_cast %45 : vector<1x1x256xf32> to vector<1x256xf32>
    %47 = vector.broadcast %46 : vector<1x256xf32> to vector<8x256xf32>
    %48 = arith.mulf %44, %47 : vector<8x256xf32>
    %c56 = arith.constant 56 : index
    %c0_27 = arith.constant 0 : index
    %49 = vector.load %arg19[%c56, %c0_27] : memref<72x256xf32, #tpu.memory_space<vmem>>, vector<8x256xf32>
    tpu.vector_store %arg19[%c56, %c0_27], %48 {strides = array<i32>} : memref<72x256xf32, #tpu.memory_space<vmem>>, vector<8x256xf32>,
    %c239_i32 = arith.constant 239 : i32
    %50 = tpu.dynamic_rotate %1 by %c239_i32 dim 1 : vector<8x256xf32>, i32 -> vector<8x256xf32>
    %c8_28 = arith.constant 8 : index
    %c0_29 = arith.constant 0 : index
    %c0_30 = arith.constant 0 : index
    %51 = vector.load %arg2[%c8_28, %c0_29, %c0_30] : memref<9x1x256xf32, #tpu.memory_space<vmem>>, vector<1x1x256xf32>
    %52 = vector.shape_cast %51 : vector<1x1x256xf32> to vector<1x256xf32>
    %53 = vector.broadcast %52 : vector<1x256xf32> to vector<8x256xf32>
    %54 = arith.mulf %50, %53 : vector<8x256xf32>
    %c64 = arith.constant 64 : index
    %c0_31 = arith.constant 0 : index
    %55 = vector.load %arg19[%c64, %c0_31] : memref<72x256xf32, #tpu.memory_space<vmem>>, vector<8x256xf32>
    tpu.vector_store %arg19[%c64, %c0_31], %54 {strides = array<i32>} : memref<72x256xf32, #tpu.memory_space<vmem>>, vector<8x256xf32>,
    %c0_32 = arith.constant 0 : index
    %c0_33 = arith.constant 0 : index
    %56 = vector.load %arg19[%c0_32, %c0_33] : memref<72x256xf32, #tpu.memory_space<vmem>>, vector<72x256xf32>
    %57 = arith.truncf %56 : vector<72x256xf32> to vector<72x256xbf16>
    %c0_34 = arith.constant 0 : index
    %c0_35 = arith.constant 0 : index
    %58 = vector.load %arg3[%c0_34, %c0_35] : memref<8x72xbf16, #tpu.memory_space<vmem>>, vector<8x72xbf16>
    %cst = arith.constant dense<0.000000e+00> : vector<8x256xf32>
    %59 = tpu.matmul %58, %57, %cst {dimension_numbers = #tpu.dot_dimension_numbers<[1], [0], [0], [1], [0, 0, 1, 1], [], []>} : vector<8x72xbf16>, vector<72x256xbf16>, vector<8x256xf32> -> vector<8x256xf32>
    %c0_36 = arith.constant 0 : index
    %c0_37 = arith.constant 0 : index
    %60 = vector.load %arg4[%c0_36, %c0_37] : memref<8x1xf32, #tpu.memory_space<vmem>>, vector<8x1xf32>
    %61 = vector.broadcast %60 : vector<8x1xf32> to vector<8x256xf32>
    %62 = arith.addf %59, %61 : vector<8x256xf32>
    %cst_38 = arith.constant 0.000000e+00 : f32
    %63 = vector.broadcast %cst_38 : f32 to vector<8x256xf32>
    %64 = arith.cmpf oge, %62, %63 : vector<8x256xf32>
    %cst_39 = arith.constant 0.00999999977 : f32
    %65 = vector.broadcast %cst_39 : f32 to vector<8x256xf32>
    %66 = arith.mulf %65, %62 : vector<8x256xf32>
    %67 = arith.select %64, %62, %66 : vector<8x256xi1>, vector<8x256xf32>
    %68 = arith.truncf %67 : vector<8x256xf32> to vector<8x256xbf16>
    %c0_40 = arith.constant 0 : index
    %c0_41 = arith.constant 0 : index
    %69 = vector.load %arg5[%c0_40, %c0_41] : memref<8x8xbf16, #tpu.memory_space<vmem>>, vector<8x8xbf16>
    %cst_42 = arith.constant dense<0.000000e+00> : vector<8x256xf32>
    %70 = tpu.matmul %69, %2, %cst_42 {dimension_numbers = #tpu.dot_dimension_numbers<[1], [0], [0], [1], [0, 0, 1, 1], [], []>} : vector<8x8xbf16>, vector<8x256xbf16>, vector<8x256xf32> -> vector<8x256xf32>
    %c0_43 = arith.constant 0 : index
    %c0_44 = arith.constant 0 : index
    %71 = vector.load %arg6[%c0_43, %c0_44] : memref<8x8xbf16, #tpu.memory_space<vmem>>, vector<8x8xbf16>
    %cst_45 = arith.constant dense<0.000000e+00> : vector<8x256xf32>
    %72 = tpu.matmul %71, %68, %cst_45 {dimension_numbers = #tpu.dot_dimension_numbers<[1], [0], [0], [1], [0, 0, 1, 1], [], []>} : vector<8x8xbf16>, vector<8x256xbf16>, vector<8x256xf32> -> vector<8x256xf32>
    %73 = arith.addf %70, %72 : vector<8x256xf32>
    %c0_46 = arith.constant 0 : index
    %c0_47 = arith.constant 0 : index
    %74 = vector.load %arg7[%c0_46, %c0_47] : memref<8x1xf32, #tpu.memory_space<vmem>>, vector<8x1xf32>
    %75 = vector.broadcast %74 : vector<8x1xf32> to vector<8x256xf32>
    %76 = arith.addf %73, %75 : vector<8x256xf32>
    %c17_i32_48 = arith.constant 17 : i32
    %77 = tpu.dynamic_rotate %76 by %c17_i32_48 dim 1 : vector<8x256xf32>, i32 -> vector<8x256xf32>
    %c0_49 = arith.constant 0 : index
    %c0_50 = arith.constant 0 : index
    %c0_51 = arith.constant 0 : index
    %78 = vector.load %arg2[%c0_49, %c0_50, %c0_51] : memref<9x1x256xf32, #tpu.memory_space<vmem>>, vector<1x1x256xf32>
    %79 = vector.shape_cast %78 : vector<1x1x256xf32> to vector<1x256xf32>
    %80 = vector.broadcast %79 : vector<1x256xf32> to vector<8x256xf32>
    %81 = arith.mulf %77, %80 : vector<8x256xf32>
    %c0_52 = arith.constant 0 : index
    %c0_53 = arith.constant 0 : index
    %82 = vector.load %arg19[%c0_52, %c0_53] : memref<72x256xf32, #tpu.memory_space<vmem>>, vector<8x256xf32>
    tpu.vector_store %arg19[%c0_52, %c0_53], %81 {strides = array<i32>} : memref<72x256xf32, #tpu.memory_space<vmem>>, vector<8x256xf32>,
    %c16_i32_54 = arith.constant 16 : i32
    %83 = tpu.dynamic_rotate %76 by %c16_i32_54 dim 1 : vector<8x256xf32>, i32 -> vector<8x256xf32>
    %c1_55 = arith.constant 1 : index
    %c0_56 = arith.constant 0 : index
    %c0_57 = arith.constant 0 : index
    %84 = vector.load %arg2[%c1_55, %c0_56, %c0_57] : memref<9x1x256xf32, #tpu.memory_space<vmem>>, vector<1x1x256xf32>
    %85 = vector.shape_cast %84 : vector<1x1x256xf32> to vector<1x256xf32>
    %86 = vector.broadcast %85 : vector<1x256xf32> to vector<8x256xf32>
    %87 = arith.mulf %83, %86 : vector<8x256xf32>
    %c8_58 = arith.constant 8 : index
    %c0_59 = arith.constant 0 : index
    %88 = vector.load %arg19[%c8_58, %c0_59] : memref<72x256xf32, #tpu.memory_space<vmem>>, vector<8x256xf32>
    tpu.vector_store %arg19[%c8_58, %c0_59], %87 {strides = array<i32>} : memref<72x256xf32, #tpu.memory_space<vmem>>, vector<8x256xf32>,
    %c15_i32_60 = arith.constant 15 : i32
    %89 = tpu.dynamic_rotate %76 by %c15_i32_60 dim 1 : vector<8x256xf32>, i32 -> vector<8x256xf32>
    %c2_61 = arith.constant 2 : index
    %c0_62 = arith.constant 0 : index
    %c0_63 = arith.constant 0 : index
    %90 = vector.load %arg2[%c2_61, %c0_62, %c0_63] : memref<9x1x256xf32, #tpu.memory_space<vmem>>, vector<1x1x256xf32>
    %91 = vector.shape_cast %90 : vector<1x1x256xf32> to vector<1x256xf32>
    %92 = vector.broadcast %91 : vector<1x256xf32> to vector<8x256xf32>
    %93 = arith.mulf %89, %92 : vector<8x256xf32>
    %c16_64 = arith.constant 16 : index
    %c0_65 = arith.constant 0 : index
    %94 = vector.load %arg19[%c16_64, %c0_65] : memref<72x256xf32, #tpu.memory_space<vmem>>, vector<8x256xf32>
    tpu.vector_store %arg19[%c16_64, %c0_65], %93 {strides = array<i32>} : memref<72x256xf32, #tpu.memory_space<vmem>>, vector<8x256xf32>,
    %c1_i32_66 = arith.constant 1 : i32
    %95 = tpu.dynamic_rotate %76 by %c1_i32_66 dim 1 : vector<8x256xf32>, i32 -> vector<8x256xf32>
    %c3_67 = arith.constant 3 : index
    %c0_68 = arith.constant 0 : index
    %c0_69 = arith.constant 0 : index
    %96 = vector.load %arg2[%c3_67, %c0_68, %c0_69] : memref<9x1x256xf32, #tpu.memory_space<vmem>>, vector<1x1x256xf32>
    %97 = vector.shape_cast %96 : vector<1x1x256xf32> to vector<1x256xf32>
    %98 = vector.broadcast %97 : vector<1x256xf32> to vector<8x256xf32>
    %99 = arith.mulf %95, %98 : vector<8x256xf32>
    %c24_70 = arith.constant 24 : index
    %c0_71 = arith.constant 0 : index
    %100 = vector.load %arg19[%c24_70, %c0_71] : memref<72x256xf32, #tpu.memory_space<vmem>>, vector<8x256xf32>
    tpu.vector_store %arg19[%c24_70, %c0_71], %99 {strides = array<i32>} : memref<72x256xf32, #tpu.memory_space<vmem>>, vector<8x256xf32>,
    %c4_72 = arith.constant 4 : index
    %c0_73 = arith.constant 0 : index
    %c0_74 = arith.constant 0 : index
    %101 = vector.load %arg2[%c4_72, %c0_73, %c0_74] : memref<9x1x256xf32, #tpu.memory_space<vmem>>, vector<1x1x256xf32>
    %102 = vector.shape_cast %101 : vector<1x1x256xf32> to vector<1x256xf32>
    %103 = vector.broadcast %102 : vector<1x256xf32> to vector<8x256xf32>
    %104 = arith.mulf %76, %103 : vector<8x256xf32>
    %c32_75 = arith.constant 32 : index
    %c0_76 = arith.constant 0 : index
    %105 = vector.load %arg19[%c32_75, %c0_76] : memref<72x256xf32, #tpu.memory_space<vmem>>, vector<8x256xf32>
    tpu.vector_store %arg19[%c32_75, %c0_76], %104 {strides = array<i32>} : memref<72x256xf32, #tpu.memory_space<vmem>>, vector<8x256xf32>,
    %c255_i32_77 = arith.constant 255 : i32
    %106 = tpu.dynamic_rotate %76 by %c255_i32_77 dim 1 : vector<8x256xf32>, i32 -> vector<8x256xf32>
    %c5_78 = arith.constant 5 : index
    %c0_79 = arith.constant 0 : index
    %c0_80 = arith.constant 0 : index
    %107 = vector.load %arg2[%c5_78, %c0_79, %c0_80] : memref<9x1x256xf32, #tpu.memory_space<vmem>>, vector<1x1x256xf32>
    %108 = vector.shape_cast %107 : vector<1x1x256xf32> to vector<1x256xf32>
    %109 = vector.broadcast %108 : vector<1x256xf32> to vector<8x256xf32>
    %110 = arith.mulf %106, %109 : vector<8x256xf32>
    %c40_81 = arith.constant 40 : index
    %c0_82 = arith.constant 0 : index
    %111 = vector.load %arg19[%c40_81, %c0_82] : memref<72x256xf32, #tpu.memory_space<vmem>>, vector<8x256xf32>
    tpu.vector_store %arg19[%c40_81, %c0_82], %110 {strides = array<i32>} : memref<72x256xf32, #tpu.memory_space<vmem>>, vector<8x256xf32>,
    %c241_i32_83 = arith.constant 241 : i32
    %112 = tpu.dynamic_rotate %76 by %c241_i32_83 dim 1 : vector<8x256xf32>, i32 -> vector<8x256xf32>
    %c6_84 = arith.constant 6 : index
    %c0_85 = arith.constant 0 : index
    %c0_86 = arith.constant 0 : index
    %113 = vector.load %arg2[%c6_84, %c0_85, %c0_86] : memref<9x1x256xf32, #tpu.memory_space<vmem>>, vector<1x1x256xf32>
    %114 = vector.shape_cast %113 : vector<1x1x256xf32> to vector<1x256xf32>
    %115 = vector.broadcast %114 : vector<1x256xf32> to vector<8x256xf32>
    %116 = arith.mulf %112, %115 : vector<8x256xf32>
    %c48_87 = arith.constant 48 : index
    %c0_88 = arith.constant 0 : index
    %117 = vector.load %arg19[%c48_87, %c0_88] : memref<72x256xf32, #tpu.memory_space<vmem>>, vector<8x256xf32>
    tpu.vector_store %arg19[%c48_87, %c0_88], %116 {strides = array<i32>} : memref<72x256xf32, #tpu.memory_space<vmem>>, vector<8x256xf32>,
    %c240_i32_89 = arith.constant 240 : i32
    %118 = tpu.dynamic_rotate %76 by %c240_i32_89 dim 1 : vector<8x256xf32>, i32 -> vector<8x256xf32>
    %c7_90 = arith.constant 7 : index
    %c0_91 = arith.constant 0 : index
    %c0_92 = arith.constant 0 : index
    %119 = vector.load %arg2[%c7_90, %c0_91, %c0_92] : memref<9x1x256xf32, #tpu.memory_space<vmem>>, vector<1x1x256xf32>
    %120 = vector.shape_cast %119 : vector<1x1x256xf32> to vector<1x256xf32>
    %121 = vector.broadcast %120 : vector<1x256xf32> to vector<8x256xf32>
    %122 = arith.mulf %118, %121 : vector<8x256xf32>
    %c56_93 = arith.constant 56 : index
    %c0_94 = arith.constant 0 : index
    %123 = vector.load %arg19[%c56_93, %c0_94] : memref<72x256xf32, #tpu.memory_space<vmem>>, vector<8x256xf32>
    tpu.vector_store %arg19[%c56_93, %c0_94], %122 {strides = array<i32>} : memref<72x256xf32, #tpu.memory_space<vmem>>, vector<8x256xf32>,
    %c239_i32_95 = arith.constant 239 : i32
    %124 = tpu.dynamic_rotate %76 by %c239_i32_95 dim 1 : vector<8x256xf32>, i32 -> vector<8x256xf32>
    %c8_96 = arith.constant 8 : index
    %c0_97 = arith.constant 0 : index
    %c0_98 = arith.constant 0 : index
    %125 = vector.load %arg2[%c8_96, %c0_97, %c0_98] : memref<9x1x256xf32, #tpu.memory_space<vmem>>, vector<1x1x256xf32>
    %126 = vector.shape_cast %125 : vector<1x1x256xf32> to vector<1x256xf32>
    %127 = vector.broadcast %126 : vector<1x256xf32> to vector<8x256xf32>
    %128 = arith.mulf %124, %127 : vector<8x256xf32>
    %c64_99 = arith.constant 64 : index
    %c0_100 = arith.constant 0 : index
    %129 = vector.load %arg19[%c64_99, %c0_100] : memref<72x256xf32, #tpu.memory_space<vmem>>, vector<8x256xf32>
    tpu.vector_store %arg19[%c64_99, %c0_100], %128 {strides = array<i32>} : memref<72x256xf32, #tpu.memory_space<vmem>>, vector<8x256xf32>,
    %c0_101 = arith.constant 0 : index
    %c0_102 = arith.constant 0 : index
    %130 = vector.load %arg19[%c0_101, %c0_102] : memref<72x256xf32, #tpu.memory_space<vmem>>, vector<72x256xf32>
    %131 = arith.truncf %130 : vector<72x256xf32> to vector<72x256xbf16>
    %c0_103 = arith.constant 0 : index
    %c0_104 = arith.constant 0 : index
    %132 = vector.load %arg8[%c0_103, %c0_104] : memref<8x72xbf16, #tpu.memory_space<vmem>>, vector<8x72xbf16>
    %cst_105 = arith.constant dense<0.000000e+00> : vector<8x256xf32>
    %133 = tpu.matmul %132, %131, %cst_105 {dimension_numbers = #tpu.dot_dimension_numbers<[1], [0], [0], [1], [0, 0, 1, 1], [], []>} : vector<8x72xbf16>, vector<72x256xbf16>, vector<8x256xf32> -> vector<8x256xf32>
    %c0_106 = arith.constant 0 : index
    %c0_107 = arith.constant 0 : index
    %134 = vector.load %arg9[%c0_106, %c0_107] : memref<8x1xf32, #tpu.memory_space<vmem>>, vector<8x1xf32>
    %135 = vector.broadcast %134 : vector<8x1xf32> to vector<8x256xf32>
    %136 = arith.addf %133, %135 : vector<8x256xf32>
    %cst_108 = arith.constant 0.000000e+00 : f32
    %137 = vector.broadcast %cst_108 : f32 to vector<8x256xf32>
    %138 = arith.cmpf oge, %136, %137 : vector<8x256xf32>
    %cst_109 = arith.constant 0.00999999977 : f32
    %139 = vector.broadcast %cst_109 : f32 to vector<8x256xf32>
    %140 = arith.mulf %139, %136 : vector<8x256xf32>
    %141 = arith.select %138, %136, %140 : vector<8x256xi1>, vector<8x256xf32>
    %142 = arith.truncf %141 : vector<8x256xf32> to vector<8x256xbf16>
    %c0_110 = arith.constant 0 : index
    %c0_111 = arith.constant 0 : index
    %143 = vector.load %arg10[%c0_110, %c0_111] : memref<8x8xbf16, #tpu.memory_space<vmem>>, vector<8x8xbf16>
    %cst_112 = arith.constant dense<0.000000e+00> : vector<8x256xf32>
    %144 = tpu.matmul %143, %2, %cst_112 {dimension_numbers = #tpu.dot_dimension_numbers<[1], [0], [0], [1], [0, 0, 1, 1], [], []>} : vector<8x8xbf16>, vector<8x256xbf16>, vector<8x256xf32> -> vector<8x256xf32>
    %c0_113 = arith.constant 0 : index
    %c0_114 = arith.constant 0 : index
    %145 = vector.load %arg11[%c0_113, %c0_114] : memref<8x8xbf16, #tpu.memory_space<vmem>>, vector<8x8xbf16>
    %cst_115 = arith.constant dense<0.000000e+00> : vector<8x256xf32>
    %146 = tpu.matmul %145, %68, %cst_115 {dimension_numbers = #tpu.dot_dimension_numbers<[1], [0], [0], [1], [0, 0, 1, 1], [], []>} : vector<8x8xbf16>, vector<8x256xbf16>, vector<8x256xf32> -> vector<8x256xf32>
    %147 = arith.addf %144, %146 : vector<8x256xf32>
    %c0_116 = arith.constant 0 : index
    %c0_117 = arith.constant 0 : index
    %148 = vector.load %arg12[%c0_116, %c0_117] : memref<8x8xbf16, #tpu.memory_space<vmem>>, vector<8x8xbf16>
    %cst_118 = arith.constant dense<0.000000e+00> : vector<8x256xf32>
    %149 = tpu.matmul %148, %142, %cst_118 {dimension_numbers = #tpu.dot_dimension_numbers<[1], [0], [0], [1], [0, 0, 1, 1], [], []>} : vector<8x8xbf16>, vector<8x256xbf16>, vector<8x256xf32> -> vector<8x256xf32>
    %150 = arith.addf %147, %149 : vector<8x256xf32>
    %c0_119 = arith.constant 0 : index
    %c0_120 = arith.constant 0 : index
    %151 = vector.load %arg13[%c0_119, %c0_120] : memref<8x1xf32, #tpu.memory_space<vmem>>, vector<8x1xf32>
    %152 = vector.broadcast %151 : vector<8x1xf32> to vector<8x256xf32>
    %153 = arith.addf %150, %152 : vector<8x256xf32>
    %c17_i32_121 = arith.constant 17 : i32
    %154 = tpu.dynamic_rotate %153 by %c17_i32_121 dim 1 : vector<8x256xf32>, i32 -> vector<8x256xf32>
    %c0_122 = arith.constant 0 : index
    %c0_123 = arith.constant 0 : index
    %c0_124 = arith.constant 0 : index
    %155 = vector.load %arg2[%c0_122, %c0_123, %c0_124] : memref<9x1x256xf32, #tpu.memory_space<vmem>>, vector<1x1x256xf32>
    %156 = vector.shape_cast %155 : vector<1x1x256xf32> to vector<1x256xf32>
    %157 = vector.broadcast %156 : vector<1x256xf32> to vector<8x256xf32>
    %158 = arith.mulf %154, %157 : vector<8x256xf32>
    %c0_125 = arith.constant 0 : index
    %c0_126 = arith.constant 0 : index
    %159 = vector.load %arg19[%c0_125, %c0_126] : memref<72x256xf32, #tpu.memory_space<vmem>>, vector<8x256xf32>
    tpu.vector_store %arg19[%c0_125, %c0_126], %158 {strides = array<i32>} : memref<72x256xf32, #tpu.memory_space<vmem>>, vector<8x256xf32>,
    %c16_i32_127 = arith.constant 16 : i32
    %160 = tpu.dynamic_rotate %153 by %c16_i32_127 dim 1 : vector<8x256xf32>, i32 -> vector<8x256xf32>
    %c1_128 = arith.constant 1 : index
    %c0_129 = arith.constant 0 : index
    %c0_130 = arith.constant 0 : index
    %161 = vector.load %arg2[%c1_128, %c0_129, %c0_130] : memref<9x1x256xf32, #tpu.memory_space<vmem>>, vector<1x1x256xf32>
    %162 = vector.shape_cast %161 : vector<1x1x256xf32> to vector<1x256xf32>
    %163 = vector.broadcast %162 : vector<1x256xf32> to vector<8x256xf32>
    %164 = arith.mulf %160, %163 : vector<8x256xf32>
    %c8_131 = arith.constant 8 : index
    %c0_132 = arith.constant 0 : index
    %165 = vector.load %arg19[%c8_131, %c0_132] : memref<72x256xf32, #tpu.memory_space<vmem>>, vector<8x256xf32>
    tpu.vector_store %arg19[%c8_131, %c0_132], %164 {strides = array<i32>} : memref<72x256xf32, #tpu.memory_space<vmem>>, vector<8x256xf32>,
    %c15_i32_133 = arith.constant 15 : i32
    %166 = tpu.dynamic_rotate %153 by %c15_i32_133 dim 1 : vector<8x256xf32>, i32 -> vector<8x256xf32>
    %c2_134 = arith.constant 2 : index
    %c0_135 = arith.constant 0 : index
    %c0_136 = arith.constant 0 : index
    %167 = vector.load %arg2[%c2_134, %c0_135, %c0_136] : memref<9x1x256xf32, #tpu.memory_space<vmem>>, vector<1x1x256xf32>
    %168 = vector.shape_cast %167 : vector<1x1x256xf32> to vector<1x256xf32>
    %169 = vector.broadcast %168 : vector<1x256xf32> to vector<8x256xf32>
    %170 = arith.mulf %166, %169 : vector<8x256xf32>
    %c16_137 = arith.constant 16 : index
    %c0_138 = arith.constant 0 : index
    %171 = vector.load %arg19[%c16_137, %c0_138] : memref<72x256xf32, #tpu.memory_space<vmem>>, vector<8x256xf32>
    tpu.vector_store %arg19[%c16_137, %c0_138], %170 {strides = array<i32>} : memref<72x256xf32, #tpu.memory_space<vmem>>, vector<8x256xf32>,
    %c1_i32_139 = arith.constant 1 : i32
    %172 = tpu.dynamic_rotate %153 by %c1_i32_139 dim 1 : vector<8x256xf32>, i32 -> vector<8x256xf32>
    %c3_140 = arith.constant 3 : index
    %c0_141 = arith.constant 0 : index
    %c0_142 = arith.constant 0 : index
    %173 = vector.load %arg2[%c3_140, %c0_141, %c0_142] : memref<9x1x256xf32, #tpu.memory_space<vmem>>, vector<1x1x256xf32>
    %174 = vector.shape_cast %173 : vector<1x1x256xf32> to vector<1x256xf32>
    %175 = vector.broadcast %174 : vector<1x256xf32> to vector<8x256xf32>
    %176 = arith.mulf %172, %175 : vector<8x256xf32>
    %c24_143 = arith.constant 24 : index
    %c0_144 = arith.constant 0 : index
    %177 = vector.load %arg19[%c24_143, %c0_144] : memref<72x256xf32, #tpu.memory_space<vmem>>, vector<8x256xf32>
    tpu.vector_store %arg19[%c24_143, %c0_144], %176 {strides = array<i32>} : memref<72x256xf32, #tpu.memory_space<vmem>>, vector<8x256xf32>,
    %c4_145 = arith.constant 4 : index
    %c0_146 = arith.constant 0 : index
    %c0_147 = arith.constant 0 : index
    %178 = vector.load %arg2[%c4_145, %c0_146, %c0_147] : memref<9x1x256xf32, #tpu.memory_space<vmem>>, vector<1x1x256xf32>
    %179 = vector.shape_cast %178 : vector<1x1x256xf32> to vector<1x256xf32>
    %180 = vector.broadcast %179 : vector<1x256xf32> to vector<8x256xf32>
    %181 = arith.mulf %153, %180 : vector<8x256xf32>
    %c32_148 = arith.constant 32 : index
    %c0_149 = arith.constant 0 : index
    %182 = vector.load %arg19[%c32_148, %c0_149] : memref<72x256xf32, #tpu.memory_space<vmem>>, vector<8x256xf32>
    tpu.vector_store %arg19[%c32_148, %c0_149], %181 {strides = array<i32>} : memref<72x256xf32, #tpu.memory_space<vmem>>, vector<8x256xf32>,
    %c255_i32_150 = arith.constant 255 : i32
    %183 = tpu.dynamic_rotate %153 by %c255_i32_150 dim 1 : vector<8x256xf32>, i32 -> vector<8x256xf32>
    %c5_151 = arith.constant 5 : index
    %c0_152 = arith.constant 0 : index
    %c0_153 = arith.constant 0 : index
    %184 = vector.load %arg2[%c5_151, %c0_152, %c0_153] : memref<9x1x256xf32, #tpu.memory_space<vmem>>, vector<1x1x256xf32>
    %185 = vector.shape_cast %184 : vector<1x1x256xf32> to vector<1x256xf32>
    %186 = vector.broadcast %185 : vector<1x256xf32> to vector<8x256xf32>
    %187 = arith.mulf %183, %186 : vector<8x256xf32>
    %c40_154 = arith.constant 40 : index
    %c0_155 = arith.constant 0 : index
    %188 = vector.load %arg19[%c40_154, %c0_155] : memref<72x256xf32, #tpu.memory_space<vmem>>, vector<8x256xf32>
    tpu.vector_store %arg19[%c40_154, %c0_155], %187 {strides = array<i32>} : memref<72x256xf32, #tpu.memory_space<vmem>>, vector<8x256xf32>,
    %c241_i32_156 = arith.constant 241 : i32
    %189 = tpu.dynamic_rotate %153 by %c241_i32_156 dim 1 : vector<8x256xf32>, i32 -> vector<8x256xf32>
    %c6_157 = arith.constant 6 : index
    %c0_158 = arith.constant 0 : index
    %c0_159 = arith.constant 0 : index
    %190 = vector.load %arg2[%c6_157, %c0_158, %c0_159] : memref<9x1x256xf32, #tpu.memory_space<vmem>>, vector<1x1x256xf32>
    %191 = vector.shape_cast %190 : vector<1x1x256xf32> to vector<1x256xf32>
    %192 = vector.broadcast %191 : vector<1x256xf32> to vector<8x256xf32>
    %193 = arith.mulf %189, %192 : vector<8x256xf32>
    %c48_160 = arith.constant 48 : index
    %c0_161 = arith.constant 0 : index
    %194 = vector.load %arg19[%c48_160, %c0_161] : memref<72x256xf32, #tpu.memory_space<vmem>>, vector<8x256xf32>
    tpu.vector_store %arg19[%c48_160, %c0_161], %193 {strides = array<i32>} : memref<72x256xf32, #tpu.memory_space<vmem>>, vector<8x256xf32>,
    %c240_i32_162 = arith.constant 240 : i32
    %195 = tpu.dynamic_rotate %153 by %c240_i32_162 dim 1 : vector<8x256xf32>, i32 -> vector<8x256xf32>
    %c7_163 = arith.constant 7 : index
    %c0_164 = arith.constant 0 : index
    %c0_165 = arith.constant 0 : index
    %196 = vector.load %arg2[%c7_163, %c0_164, %c0_165] : memref<9x1x256xf32, #tpu.memory_space<vmem>>, vector<1x1x256xf32>
    %197 = vector.shape_cast %196 : vector<1x1x256xf32> to vector<1x256xf32>
    %198 = vector.broadcast %197 : vector<1x256xf32> to vector<8x256xf32>
    %199 = arith.mulf %195, %198 : vector<8x256xf32>
    %c56_166 = arith.constant 56 : index
    %c0_167 = arith.constant 0 : index
    %200 = vector.load %arg19[%c56_166, %c0_167] : memref<72x256xf32, #tpu.memory_space<vmem>>, vector<8x256xf32>
    tpu.vector_store %arg19[%c56_166, %c0_167], %199 {strides = array<i32>} : memref<72x256xf32, #tpu.memory_space<vmem>>, vector<8x256xf32>,
    %c239_i32_168 = arith.constant 239 : i32
    %201 = tpu.dynamic_rotate %153 by %c239_i32_168 dim 1 : vector<8x256xf32>, i32 -> vector<8x256xf32>
    %c8_169 = arith.constant 8 : index
    %c0_170 = arith.constant 0 : index
    %c0_171 = arith.constant 0 : index
    %202 = vector.load %arg2[%c8_169, %c0_170, %c0_171] : memref<9x1x256xf32, #tpu.memory_space<vmem>>, vector<1x1x256xf32>
    %203 = vector.shape_cast %202 : vector<1x1x256xf32> to vector<1x256xf32>
    %204 = vector.broadcast %203 : vector<1x256xf32> to vector<8x256xf32>
    %205 = arith.mulf %201, %204 : vector<8x256xf32>
    %c64_172 = arith.constant 64 : index
    %c0_173 = arith.constant 0 : index
    %206 = vector.load %arg19[%c64_172, %c0_173] : memref<72x256xf32, #tpu.memory_space<vmem>>, vector<8x256xf32>
    tpu.vector_store %arg19[%c64_172, %c0_173], %205 {strides = array<i32>} : memref<72x256xf32, #tpu.memory_space<vmem>>, vector<8x256xf32>,
    %c0_174 = arith.constant 0 : index
    %c0_175 = arith.constant 0 : index
    %207 = vector.load %arg19[%c0_174, %c0_175] : memref<72x256xf32, #tpu.memory_space<vmem>>, vector<72x256xf32>
    %208 = arith.truncf %207 : vector<72x256xf32> to vector<72x256xbf16>
    %c0_176 = arith.constant 0 : index
    %c0_177 = arith.constant 0 : index
    %209 = vector.load %arg14[%c0_176, %c0_177] : memref<8x72xbf16, #tpu.memory_space<vmem>>, vector<8x72xbf16>
    %cst_178 = arith.constant dense<0.000000e+00> : vector<8x256xf32>
    %210 = tpu.matmul %209, %208, %cst_178 {dimension_numbers = #tpu.dot_dimension_numbers<[1], [0], [0], [1], [0, 0, 1, 1], [], []>} : vector<8x72xbf16>, vector<72x256xbf16>, vector<8x256xf32> -> vector<8x256xf32>
    %c0_179 = arith.constant 0 : index
    %c0_180 = arith.constant 0 : index
    %211 = vector.load %arg15[%c0_179, %c0_180] : memref<8x1xf32, #tpu.memory_space<vmem>>, vector<8x1xf32>
    %212 = vector.broadcast %211 : vector<8x1xf32> to vector<8x256xf32>
    %213 = arith.addf %210, %212 : vector<8x256xf32>
    %cst_181 = arith.constant 0.000000e+00 : f32
    %214 = vector.broadcast %cst_181 : f32 to vector<8x256xf32>
    %215 = arith.cmpf oge, %213, %214 : vector<8x256xf32>
    %cst_182 = arith.constant 0.00999999977 : f32
    %216 = vector.broadcast %cst_182 : f32 to vector<8x256xf32>
    %217 = arith.mulf %216, %213 : vector<8x256xf32>
    %218 = arith.select %215, %213, %217 : vector<8x256xi1>, vector<8x256xf32>
    %c0_183 = arith.constant 0 : index
    %c0_184 = arith.constant 0 : index
    %c0_185 = arith.constant 0 : index
    %219 = vector.load %arg16[%c0_183, %c0_184, %c0_185] : memref<1x8x256xf32, #tpu.memory_space<vmem>>, vector<1x8x256xf32>
    %220 = vector.shape_cast %219 : vector<1x8x256xf32> to vector<8x256xf32>
    %221 = vector.shape_cast %218 : vector<8x256xf32> to vector<1x8x256xf32>
    tpu.vector_store %arg16[%c0_183, %c0_184, %c0_185], %221 {strides = array<i32>} : memref<1x8x256xf32, #tpu.memory_space<vmem>>, vector<1x8x256xf32>,
    %cst_186 = arith.constant dense<0.000000e+00> : vector<8xf32>
    %222 = vector.multi_reduction <add>, %218, %cst_186 [1] : vector<8x256xf32> to vector<8xf32>
    %223 = vector.shape_cast %222 : vector<8xf32> to vector<8x1xf32>
    %c0_187 = arith.constant 0 : index
    %c0_188 = arith.constant 0 : index
    %c0_189 = arith.constant 0 : index
    %224 = vector.load %arg17[%c0_187, %c0_188, %c0_189] : memref<1x8x1xf32, #tpu.memory_space<vmem>>, vector<1x8x1xf32>
    %225 = vector.shape_cast %224 : vector<1x8x1xf32> to vector<8x1xf32>
    %226 = vector.shape_cast %223 : vector<8x1xf32> to vector<1x8x1xf32>
    tpu.vector_store %arg17[%c0_187, %c0_188, %c0_189], %226 {strides = array<i32>} : memref<1x8x1xf32, #tpu.memory_space<vmem>>, vector<1x8x1xf32>,
    %227 = arith.mulf %218, %218 : vector<8x256xf32>
    %cst_190 = arith.constant dense<0.000000e+00> : vector<8xf32>
    %228 = vector.multi_reduction <add>, %227, %cst_190 [1] : vector<8x256xf32> to vector<8xf32>
    %229 = vector.shape_cast %228 : vector<8xf32> to vector<8x1xf32>
    %c0_191 = arith.constant 0 : index
    %c0_192 = arith.constant 0 : index
    %c0_193 = arith.constant 0 : index
    %230 = vector.load %arg18[%c0_191, %c0_192, %c0_193] : memref<1x8x1xf32, #tpu.memory_space<vmem>>, vector<1x8x1xf32>
    %231 = vector.shape_cast %230 : vector<1x8x1xf32> to vector<8x1xf32>
    %232 = vector.shape_cast %229 : vector<8x1xf32> to vector<1x8x1xf32>
    tpu.vector_store %arg18[%c0_191, %c0_192, %c0_193], %232 {strides = array<i32>} : memref<1x8x1xf32, #tpu.memory_space<vmem>>, vector<1x8x1xf32>,
    return
  }
  func.func @transform_0(%arg0: i32) -> (i32, i32, i32) {
    %c0_i32 = arith.constant 0 : i32
    %c0_i32_0 = arith.constant 0 : i32
    %c0_i32_1 = arith.constant 0 : i32
    return %arg0, %c0_i32, %c0_i32_0 : i32, i32, i32
  }
  func.func @transform_1(%arg0: i32) -> (i32, i32, i32) {
    %c0_i32 = arith.constant 0 : i32
    %c0_i32_0 = arith.constant 0 : i32
    %c0_i32_1 = arith.constant 0 : i32
    %c0_i32_2 = arith.constant 0 : i32
    return %c0_i32, %c0_i32_0, %c0_i32_1 : i32, i32, i32
  }
  func.func @transform_2(%arg0: i32) -> (i32, i32) {
    %c0_i32 = arith.constant 0 : i32
    %c0_i32_0 = arith.constant 0 : i32
    %c0_i32_1 = arith.constant 0 : i32
    return %c0_i32, %c0_i32_0 : i32, i32
  }
  func.func @transform_3(%arg0: i32) -> (i32, i32) {
    %c0_i32 = arith.constant 0 : i32
    %c0_i32_0 = arith.constant 0 : i32
    %c0_i32_1 = arith.constant 0 : i32
    return %c0_i32, %c0_i32_0 : i32, i32
  }
  func.func @transform_4(%arg0: i32) -> (i32, i32) {
    %c0_i32 = arith.constant 0 : i32
    %c0_i32_0 = arith.constant 0 : i32
    %c0_i32_1 = arith.constant 0 : i32
    return %c0_i32, %c0_i32_0 : i32, i32
  }
  func.func @transform_5(%arg0: i32) -> (i32, i32) {
    %c0_i32 = arith.constant 0 : i32
    %c0_i32_0 = arith.constant 0 : i32
    %c0_i32_1 = arith.constant 0 : i32
    return %c0_i32, %c0_i32_0 : i32, i32
  }
  func.func @transform_6(%arg0: i32) -> (i32, i32) {
    %c0_i32 = arith.constant 0 : i32
    %c0_i32_0 = arith.constant 0 : i32
    %c0_i32_1 = arith.constant 0 : i32
    return %c0_i32, %c0_i32_0 : i32, i32
  }
  func.func @transform_7(%arg0: i32) -> (i32, i32) {
    %c0_i32 = arith.constant 0 : i32
    %c0_i32_0 = arith.constant 0 : i32
    %c0_i32_1 = arith.constant 0 : i32
    return %c0_i32, %c0_i32_0 : i32, i32
  }
  func.func @transform_8(%arg0: i32) -> (i32, i32) {
    %c0_i32 = arith.constant 0 : i32
    %c0_i32_0 = arith.constant 0 : i32
    %c0_i32_1 = arith.constant 0 : i32
    return %c0_i32, %c0_i32_0 : i32, i32
  }
  func.func @transform_9(%arg0: i32) -> (i32, i32) {
    %c0_i32 = arith.constant 0 : i32
    %c0_i32_0 = arith.constant 0 : i32
    %c0_i32_1 = arith.constant 0 : i32
    return %c0_i32, %c0_i32_0 : i32, i32
  }
  func.func @transform_10(%arg0: i32) -> (i32, i32) {
    %c0_i32 = arith.constant 0 : i32
    %c0_i32_0 = arith.constant 0 : i32
    %c0_i32_1 = arith.constant 0 : i32
    return %c0_i32, %c0_i32_0 : i32, i32
  }
  func.func @transform_11(%arg0: i32) -> (i32, i32) {
    %c0_i32 = arith.constant 0 : i32
    %c0_i32_0 = arith.constant 0 : i32
    %c0_i32_1 = arith.constant 0 : i32
    return %c0_i32, %c0_i32_0 : i32, i32
  }
  func.func @transform_12(%arg0: i32) -> (i32, i32) {
    %c0_i32 = arith.constant 0 : i32
    %c0_i32_0 = arith.constant 0 : i32
    %c0_i32_1 = arith.constant 0 : i32
    return %c0_i32, %c0_i32_0 : i32, i32
  }
  func.func @transform_13(%arg0: i32) -> (i32, i32) {
    %c0_i32 = arith.constant 0 : i32
    %c0_i32_0 = arith.constant 0 : i32
    %c0_i32_1 = arith.constant 0 : i32
    return %c0_i32, %c0_i32_0 : i32, i32
  }
  func.func @transform_14(%arg0: i32) -> (i32, i32) {
    %c0_i32 = arith.constant 0 : i32
    %c0_i32_0 = arith.constant 0 : i32
    %c0_i32_1 = arith.constant 0 : i32
    return %c0_i32, %c0_i32_0 : i32, i32
  }
  func.func @transform_15(%arg0: i32) -> (i32, i32, i32) {
    %c0_i32 = arith.constant 0 : i32
    %c0_i32_0 = arith.constant 0 : i32
    %c0_i32_1 = arith.constant 0 : i32
    return %arg0, %c0_i32, %c0_i32_0 : i32, i32, i32
  }
  func.func @transform_16(%arg0: i32) -> (i32, i32, i32) {
    %c0_i32 = arith.constant 0 : i32
    %c0_i32_0 = arith.constant 0 : i32
    %c0_i32_1 = arith.constant 0 : i32
    return %arg0, %c0_i32, %c0_i32_0 : i32, i32, i32
  }
  func.func @transform_17(%arg0: i32) -> (i32, i32, i32) {
    %c0_i32 = arith.constant 0 : i32
    %c0_i32_0 = arith.constant 0 : i32
    %c0_i32_1 = arith.constant 0 : i32
    return %arg0, %c0_i32, %c0_i32_0 : i32, i32, i32
  }
}

</mosaic_0001>

<llo_original>
// kernel: densenet2d_down_block.5
$region0: #{densenet2d_down_block.5}
  #allocation0 [shape = 'u32[]', space=smem, size = 0x4, offset = 0x4, fixed_abs, tag = 'smem constant byte address 0x4 - core index']
  #allocation1 [shape = 'u32[144,128]{1,0:T(1,128)}', space=vmem, size = 0x12000, scoped, tag = 'internal scratch']
  %s0 = inlined_call_operand.hbm [shape: f32[2,8,256], index: 0, kind: input, shape index: {}, may-alias: {0,3}]
  %s1 = inlined_call_operand.hbm [shape: f32[8,1], index: 1, kind: input, shape index: {}]
  %s2 = inlined_call_operand.hbm [shape: f32[8,1], index: 2, kind: input, shape index: {}]
  %s3 = inlined_call_operand.hbm [shape: f32[2,8,256], index: 3, kind: output, shape index: {}, may-alias: {0,3}]
  %s4 = sld [smem:[#allocation0]]
  $region57: #{densenet2d_down_block.5} parent=0
    _
  %s6 = ssub.s32 1, %s4
  %s7 = scalar_select 0, %s6, %s4
  $region1: #{densenet2d_down_block.5} parent=0
    #allocation2 [shape = 'u8[16384]{0}', space=vmem, size = 0x4000, scoped, tag = 'input window, operand 0']
    #allocation3 [shape = 's32[2]{0}', space=sflag, size = 0x8, scoped, tag = 'scoped memory for densenet2d_down_block.5']
    #allocation4 [shape = 's32[2]{0}', space=sflag, size = 0x8, scoped, tag = 'scoped memory for densenet2d_down_block.5']
    #allocation5 [shape = 'u8[4096]{0}', space=vmem, size = 0x1000, scoped, tag = 'input window, operand 1, single buffered']
    #allocation6 [shape = 's32[1]{0}', space=sflag, size = 0x4, scoped, tag = 'scoped memory for densenet2d_down_block.5']
    #allocation7 [shape = 'u8[4096]{0}', space=vmem, size = 0x1000, scoped, tag = 'input window, operand 2, single buffered']
    #allocation8 [shape = 'u8[16384]{0}', space=vmem, size = 0x4000, scoped, tag = 'output window, operand 0']
    %8 = vsyncpa [#allocation3], 0
    %s9 = scalar_lea.sflag [#allocation3], 1
    %10 = vsyncpa %s9, 0
    %11 = vsyncpa [#allocation6], 0
    %12 = vsyncpa [#allocation4], 0
    %s13 = scalar_lea.sflag [#allocation4], 1
    %14 = vsyncpa %s13, 0
    loop: start=0, step=1, limit=4
    $region2: #{densenet2d_down_block.5} parent=1 // loop_pre_header
      _
    $region3: #{densenet2d_down_block.5} parent=1 // loop_header
      %s16 = sphi 0, %s20
      %p17 = scmp.ge.s32.totalorder %s16, 4
      %s26 = sphi 0, %s28
      %s29 = sphi 0, %s26
      %s30 = sphi 0, %s29
      %s46 = sphi 0, %s30
      %s50 = sphi 0, %s50
      %s52 = sphi 0, %s50
      %s53 = sphi 0, %s52
      %s67 = sphi 0, %s53
      %s71 = sphi 0, %s71
      %s73 = sphi 0, %s71
      %s74 = sphi 0, %s73
      %s88 = sphi 0, %s74
      %s94 = sphi 0, %s96
      %s97 = sphi 0, %s94
      %s98 = sphi 0, %s97
      %s114 = sphi 0, %s98
    $region4: #{densenet2d_down_block.5} parent=1 // loop_header_branch
      %19 = sbr.rel (%p17) target = $region8
    $region5: #{densenet2d_down_block.5} parent=1 // loop_body
      %s21 = ssub.s32 %s16, 1
      %s22 = ssub.s32 %s16, 2
      %s23 = sadd.s32 %s16, 1
      %s24 = ssub.s32 %s16, %s23
      %p25 = scmp.eq.s32.totalorder %s24, 0
      %s27 = sadd.s32 %s26, 1
      %s28 = scalar_select %p25, %s26, %s27
      %p31 = pneg %p25
      %p32 = scmp.eq.s32.totalorder %s16, 1
      %p33 = por %p31, %p32
      %p34 = scmp.ne.s32.totalorder %s26, %s29
      %p35 = scmp.eq.s32.totalorder %s16, 0
      %p36 = por %p34, %p35
      %p37 = scmp.ne.s32.totalorder %s26, %s29
      %p38 = scmp.eq.s32.totalorder %s21, 1
      %p39 = por %p37, %p38
      %p40 = scmp.ne.s32.totalorder %s29, %s30
      %p41 = scmp.eq.s32.totalorder %s21, 0
      %p42 = por %p40, %p41
      %p43 = scmp.ne.s32.totalorder %s29, %s30
      %p44 = scmp.eq.s32.totalorder %s22, 1
      %p45 = por %p43, %p44
      %p47 = scmp.ne.s32.totalorder %s30, %s46
      %p48 = scmp.eq.s32.totalorder %s22, 0
      %p49 = por %p47, %p48
      %s51 = sadd.s32 %s50, 1
      %p54 = scmp.eq.s32.totalorder %s16, 1
      %p55 = scmp.ne.s32.totalorder %s50, %s52
      %p56 = scmp.eq.s32.totalorder %s16, 0
      %p57 = por %p55, %p56
      %p58 = scmp.ne.s32.totalorder %s50, %s52
      %p59 = scmp.eq.s32.totalorder %s21, 1
      %p60 = por %p58, %p59
      %p61 = scmp.ne.s32.totalorder %s52, %s53
      %p62 = scmp.eq.s32.totalorder %s21, 0
      %p63 = por %p61, %p62
      %p64 = scmp.ne.s32.totalorder %s52, %s53
      %p65 = scmp.eq.s32.totalorder %s22, 1
      %p66 = por %p64, %p65
      %p68 = scmp.ne.s32.totalorder %s53, %s67
      %p69 = scmp.eq.s32.totalorder %s22, 0
      %p70 = por %p68, %p69
      %s72 = sadd.s32 %s71, 1
      %p75 = scmp.eq.s32.totalorder %s16, 1
      %p76 = scmp.ne.s32.totalorder %s71, %s73
      %p77 = scmp.eq.s32.totalorder %s16, 0
      %p78 = por %p76, %p77
      %p79 = scmp.ne.s32.totalorder %s71, %s73
      %p80 = scmp.eq.s32.totalorder %s21, 1
      %p81 = por %p79, %p80
      %p82 = scmp.ne.s32.totalorder %s73, %s74
      %p83 = scmp.eq.s32.totalorder %s21, 0
      %p84 = por %p82, %p83
      %p85 = scmp.ne.s32.totalorder %s73, %s74
      %p86 = scmp.eq.s32.totalorder %s22, 1
      %p87 = por %p85, %p86
      %p89 = scmp.ne.s32.totalorder %s74, %s88
      %p90 = scmp.eq.s32.totalorder %s22, 0
      %p91 = por %p89, %p90
      %s92 = ssub.s32 %s16, %s23
      %p93 = scmp.eq.s32.totalorder %s92, 0
      %s95 = sadd.s32 %s94, 1
      %s96 = scalar_select %p93, %s94, %s95
      %p99 = pneg %p93
      %p100 = scmp.eq.s32.totalorder %s16, 1
      %p101 = por %p99, %p100
      %p102 = scmp.ne.s32.totalorder %s94, %s97
      %p103 = scmp.eq.s32.totalorder %s16, 0
      %p104 = por %p102, %p103
      %p105 = scmp.ne.s32.totalorder %s94, %s97
      %p106 = scmp.eq.s32.totalorder %s21, 1
      %p107 = por %p105, %p106
      %p108 = scmp.ne.s32.totalorder %s97, %s98
      %p109 = scmp.eq.s32.totalorder %s21, 0
      %p110 = por %p108, %p109
      %p111 = scmp.ne.s32.totalorder %s97, %s98
      %p112 = scmp.eq.s32.totalorder %s22, 1
      %p113 = por %p111, %p112
      %p115 = scmp.ne.s32.totalorder %s98, %s114
      %p116 = scmp.eq.s32.totalorder %s22, 0
      %p117 = por %p115, %p116
      %p118 = scmp.le.s32.totalorder 1, %s16
      %p119 = scmp.lt.s32.totalorder %s16, 3
      %p120 = pnand %p118, %p119
      %p121 = pneg %p120
      // Predicated region
      $region9: #{densenet2d_down_block.5} parent=5 // pred_check
        _
      $region10: #{densenet2d_down_block.5} parent=5 // pred_check_branch
        %123 = sbr.rel (%p120) target = $region12
      $region11: #{densenet2d_down_block.5} parent=5 // pred_region
        %s124 = ssub.s32 %s16, 1
        // Predicated region
        $region13: #{densenet2d_down_block.5} parent=11 // pred_check
          %p125 = pneg %p63
        $region14: #{densenet2d_down_block.5} parent=11 // pred_check_branch
          %127 = sbr.rel (%p125) target = $region16
        $region15: #{densenet2d_down_block.5} parent=11 // pred_region
          %s129 = ssub.s32 128, 128
          %130 = vsyncadd [#allocation6], %s129
          %s132 = sshll.u32 [#allocation5], 4
          %s133 = int_to_ptr.vmem [resolvable:$true] %s132
          %135 = dma.hbm_to_vmem [thread:$0]  %s1, 128, %s133, [#allocation6]
        $region16: #{densenet2d_down_block.5} parent=11 // pred_fallthru
          _
        // Predicated region
        $region17: #{densenet2d_down_block.5} parent=11 // pred_check
          %p136 = pneg %p84
        $region18: #{densenet2d_down_block.5} parent=11 // pred_check_branch
          %138 = sbr.rel (%p136) target = $region20
        $region19: #{densenet2d_down_block.5} parent=11 // pred_region
          %s140 = ssub.s32 128, 128
          %141 = vsyncadd [#allocation6], %s140
          %s143 = sshll.u32 [#allocation7], 4
          %s144 = int_to_ptr.vmem [resolvable:$true] %s143
          %146 = dma.hbm_to_vmem [thread:$0]  %s2, 128, %s144, [#allocation6]
        $region20: #{densenet2d_down_block.5} parent=11 // pred_fallthru
          _
      $region12: #{densenet2d_down_block.5} parent=5 // pred_fallthru
        _
      %p147 = scmp.lt.s32.totalorder %s16, 2
      // Predicated region
      $region21: #{densenet2d_down_block.5} parent=5 // pred_check
        %p148 = pneg %p147
      $region22: #{densenet2d_down_block.5} parent=5 // pred_check_branch
        %150 = sbr.rel (%p148) target = $region24
      $region23: #{densenet2d_down_block.5} parent=5 // pred_region
        // Predicated region
        $region25: #{densenet2d_down_block.5} parent=23 // pred_check
          %p151 = pneg %p36
        $region26: #{densenet2d_down_block.5} parent=23 // pred_check_branch
          %153 = sbr.rel (%p151) target = $region28
        $region27: #{densenet2d_down_block.5} parent=23 // pred_region
          %s154 = sand.u32 %s26, 1
          %s155 = scalar_lea.sflag [#allocation3], %s154
          %s156 = sand.u32 %s26, 1
          %s157 = smul.addr %s156, 16
          %s158 = scalar_lea.vmem [#allocation2], %s157
          %s160 = ssub.s32 256, 256
          %161 = vsyncadd %s155, %s160
          %s162 = smul.addr %s16, 2
          %s163 = smul.addr %s162, 128
          %s164 = scalar_lea.hbm %s0, %s163
          %s166 = sshll.u32 %s158, 4
          %s167 = int_to_ptr.vmem [resolvable:$true] %s166
          %169 = dma.hbm_to_vmem [thread:$0]  %s164, 256, %s167, %s155
        $region28: #{densenet2d_down_block.5} parent=23 // pred_fallthru
          _
      $region24: #{densenet2d_down_block.5} parent=5 // pred_fallthru
        _
      %p170 = scmp.le.s32.totalorder 1, %s16
      %p171 = scmp.lt.s32.totalorder %s16, 3
      %p172 = pnand %p170, %p171
      %p173 = pneg %p172
      // Predicated region
      $region29: #{densenet2d_down_block.5} parent=5 // pred_check
        _
      $region30: #{densenet2d_down_block.5} parent=5 // pred_check_branch
        %175 = sbr.rel (%p172) target = $region32
      $region31: #{densenet2d_down_block.5} parent=5 // pred_region
        %s176 = ssub.s32 %s16, 1
        %s177 = sand.u32 %s29, 1
        %s178 = scalar_lea.sflag [#allocation3], %s177
        %s179 = sand.u32 %s29, 1
        %s180 = smul.addr %s179, 16
        %s181 = scalar_lea.vmem [#allocation2], %s180
        // Predicated region
        $region33: #{densenet2d_down_block.5} parent=31 // pred_check
          %p182 = pneg %p42
        $region34: #{densenet2d_down_block.5} parent=31 // pred_check_branch
          %184 = sbr.rel (%p182) target = $region36
        $region35: #{densenet2d_down_block.5} parent=31 // pred_region
          %185 = dma.done %s178, 256
        $region36: #{densenet2d_down_block.5} parent=31 // pred_fallthru
          _
        // Predicated region
        $region37: #{densenet2d_down_block.5} parent=31 // pred_check
          %p186 = pneg %p63
        $region38: #{densenet2d_down_block.5} parent=31 // pred_check_branch
          %188 = sbr.rel (%p186) target = $region40
        $region39: #{densenet2d_down_block.5} parent=31 // pred_region
          %189 = dma.done [#allocation6], 128
        $region40: #{densenet2d_down_block.5} parent=31 // pred_fallthru
          _
        // Predicated region
        $region41: #{densenet2d_down_block.5} parent=31 // pred_check
          %p190 = pneg %p84
        $region42: #{densenet2d_down_block.5} parent=31 // pred_check_branch
          %192 = sbr.rel (%p190) target = $region44
        $region43: #{densenet2d_down_block.5} parent=31 // pred_region
          %193 = dma.done [#allocation6], 128
        $region44: #{densenet2d_down_block.5} parent=31 // pred_fallthru
          _
        %s194 = sand.u32 %s29, 1
        %s195 = scalar_lea.sflag [#allocation3], %s194
        %s196 = sand.u32 %s29, 1
        %s197 = smul.addr %s196, 16
        %s198 = scalar_lea.vmem [#allocation2], %s197
        %p199 = pneg %p42
        %p200 = pneg %p39
        %p201 = pneg %p63
        %p202 = pneg %p60
        %p203 = pneg %p84
        %p204 = pneg %p81
        %p205 = pneg %p110
        %p206 = pneg %p107
        %s207 = sand.u32 %s97, 1
        %s208 = scalar_lea.sflag [#allocation4], %s207
        %s209 = sand.u32 %s97, 1
        %s210 = smul.addr %s209, 16
        %s211 = scalar_lea.vmem [#allocation8], %s210
        %v212 = vld [vmem:[%s181] sm:$0xff]
        %v213 = vld [vmem:[%s181 + $0x8] sm:$0xff]
        %v214 = vld [vmem:[#allocation5] sm:$0xff]
        %216 = vset.pattern.permute.xlu0 0
        %217 = vperm.xlu0 %216, %v214
        %v218 = vpop.permute.xlu0 %217
        %v220 = vmul.f32 %v212, %v218
        %v221 = vmul.f32 %v213, %v218
        %v222 = vld [vmem:[#allocation7] sm:$0xff]
        %224 = vset.pattern.permute.xlu0 0
        %225 = vperm.xlu0 %224, %v222
        %v226 = vpop.permute.xlu0 %225
        %v228 = vadd.f32 %v220, %v226
        %v229 = vadd.f32 %v221, %v226
        %230 = vst [vmem:[%s211] sm:$0xff] %v228
        %231 = vst [vmem:[%s211 + $0x8] sm:$0xff] %v229
        %s232 = sand.u32 %s97, 1
        %s233 = scalar_lea.sflag [#allocation4], %s232
        %s234 = sand.u32 %s97, 1
        %s235 = smul.addr %s234, 16
        %s236 = scalar_lea.vmem [#allocation8], %s235
        // Predicated region
        $region45: #{densenet2d_down_block.5} parent=31 // pred_check
          %p237 = pneg %p107
        $region46: #{densenet2d_down_block.5} parent=31 // pred_check_branch
          %239 = sbr.rel (%p237) target = $region48
        $region47: #{densenet2d_down_block.5} parent=31 // pred_region
          %s241 = ssub.s32 256, 256
          %242 = vsyncadd %s233, %s241
          %s243 = smul.addr %s21, 2
          %s244 = smul.addr %s243, 128
          %s245 = scalar_lea.hbm %s3, %s244
          %s247 = sshll.u32 %s236, 4
          %s248 = int_to_ptr.vmem [resolvable:$true] %s247
          %250 = dma.vmem_to_hbm [thread:$0]  %s248, 256, %s245, %s233
        $region48: #{densenet2d_down_block.5} parent=31 // pred_fallthru
          _
      $region32: #{densenet2d_down_block.5} parent=5 // pred_fallthru
        _
      %p251 = scmp.le.s32.totalorder 2, %s16
      // Predicated region
      $region49: #{densenet2d_down_block.5} parent=5 // pred_check
        %p252 = pneg %p251
      $region50: #{densenet2d_down_block.5} parent=5 // pred_check_branch
        %254 = sbr.rel (%p252) target = $region52
      $region51: #{densenet2d_down_block.5} parent=5 // pred_region
        %s255 = ssub.s32 %s16, 2
        // Predicated region
        $region53: #{densenet2d_down_block.5} parent=51 // pred_check
          %p256 = pneg %p113
        $region54: #{densenet2d_down_block.5} parent=51 // pred_check_branch
          %258 = sbr.rel (%p256) target = $region56
        $region55: #{densenet2d_down_block.5} parent=51 // pred_region
          %s259 = sand.u32 %s98, 1
          %s260 = scalar_lea.sflag [#allocation4], %s259
          %s261 = sand.u32 %s98, 1
          %s262 = smul.addr %s261, 16
          %s263 = scalar_lea.vmem [#allocation8], %s262
          %264 = dma.done %s260, 256
        $region56: #{densenet2d_down_block.5} parent=51 // pred_fallthru
          _
      $region52: #{densenet2d_down_block.5} parent=5 // pred_fallthru
        _
    $region6: #{densenet2d_down_block.5} parent=1 // loop_footer
      %s20 = sadd.s32 1, %s16
    $region7: #{densenet2d_down_block.5} parent=1 // loop_footer_branch
      %15 = sbr.rel target = $region3
    $region8: #{densenet2d_down_block.5} parent=1 // loop_exit
      _
    %265 = vsyncpa [#allocation3], 1
    %s266 = scalar_lea.sflag [#allocation3], 1
    %267 = vsyncpa %s266, 1
    %268 = vsyncpa [#allocation6], 1
    %269 = vsyncpa [#allocation4], 1
    %s270 = scalar_lea.sflag [#allocation4], 1
    %271 = vsyncpa %s270, 1

// kernel: densenet2d_down_block.3
$region0: #{densenet2d_down_block.3}
  #allocation0 [shape = 'u32[]', space=smem, size = 0x4, offset = 0x4, fixed_abs, tag = 'smem constant byte address 0x4 - core index']
  #allocation1 [shape = 'u32[144,128]{1,0:T(1,128)}', space=vmem, size = 0x12000, scoped, tag = 'internal scratch']
  %s0 = inlined_call_operand.hbm [shape: f32[2,8,32,32], index: 0, kind: input, shape index: {}]
  %s1 = inlined_call_operand.hbm [shape: f32[16,32], index: 1, kind: input, shape index: {}]
  %s2 = inlined_call_operand.hbm [shape: f32[32,16], index: 2, kind: input, shape index: {}]
  %s3 = inlined_call_operand.hbm [shape: f32[2,8,16,16], index: 3, kind: output, shape index: {}]
  %s4 = sld [smem:[#allocation0]]
  $region57: #{densenet2d_down_block.3} parent=0
    _
  %s6 = ssub.s32 1, %s4
  %s7 = scalar_select 0, %s6, %s4
  $region1: #{densenet2d_down_block.3} parent=0
    #allocation2 [shape = 'u8[262144]{0}', space=vmem, size = 0x40000, scoped, tag = 'input window, operand 0']
    #allocation3 [shape = 's32[2]{0}', space=sflag, size = 0x8, scoped, tag = 'scoped memory for densenet2d_down_block.3']
    #allocation4 [shape = 's32[2]{0}', space=sflag, size = 0x8, scoped, tag = 'scoped memory for densenet2d_down_block.3']
    #allocation5 [shape = 'u8[8192]{0}', space=vmem, size = 0x2000, scoped, tag = 'input window, operand 1, single buffered']
    #allocation6 [shape = 's32[1]{0}', space=sflag, size = 0x4, scoped, tag = 'scoped memory for densenet2d_down_block.3']
    #allocation7 [shape = 'u8[16384]{0}', space=vmem, size = 0x4000, scoped, tag = 'input window, operand 2, single buffered']
    #allocation8 [shape = 'u8[131072]{0}', space=vmem, size = 0x20000, scoped, tag = 'output window, operand 0']
    %8 = vsyncpa [#allocation3], 0
    %s9 = scalar_lea.sflag [#allocation3], 1
    %10 = vsyncpa %s9, 0
    %11 = vsyncpa [#allocation6], 0
    %12 = vsyncpa [#allocation4], 0
    %s13 = scalar_lea.sflag [#allocation4], 1
    %14 = vsyncpa %s13, 0
    loop: start=0, step=1, limit=4
    $region2: #{densenet2d_down_block.3} parent=1 // loop_pre_header
      _
    $region3: #{densenet2d_down_block.3} parent=1 // loop_header
      %s16 = sphi 0, %s20
      %p17 = scmp.ge.s32.totalorder %s16, 4
      %s26 = sphi 0, %s28
      %s29 = sphi 0, %s26
      %s30 = sphi 0, %s29
      %s46 = sphi 0, %s30
      %s50 = sphi 0, %s50
      %s52 = sphi 0, %s50
      %s53 = sphi 0, %s52
      %s67 = sphi 0, %s53
      %s71 = sphi 0, %s71
      %s73 = sphi 0, %s71
      %s74 = sphi 0, %s73
      %s88 = sphi 0, %s74
      %s94 = sphi 0, %s96
      %s97 = sphi 0, %s94
      %s98 = sphi 0, %s97
      %s114 = sphi 0, %s98
    $region4: #{densenet2d_down_block.3} parent=1 // loop_header_branch
      %19 = sbr.rel (%p17) target = $region8
    $region5: #{densenet2d_down_block.3} parent=1 // loop_body
      %s21 = ssub.s32 %s16, 1
      %s22 = ssub.s32 %s16, 2
      %s23 = sadd.s32 %s16, 1
      %s24 = ssub.s32 %s16, %s23
      %p25 = scmp.eq.s32.totalorder %s24, 0
      %s27 = sadd.s32 %s26, 1
      %s28 = scalar_select %p25, %s26, %s27
      %p31 = pneg %p25
      %p32 = scmp.eq.s32.totalorder %s16, 1
      %p33 = por %p31, %p32
      %p34 = scmp.ne.s32.totalorder %s26, %s29
      %p35 = scmp.eq.s32.totalorder %s16, 0
      %p36 = por %p34, %p35
      %p37 = scmp.ne.s32.totalorder %s26, %s29
      %p38 = scmp.eq.s32.totalorder %s21, 1
      %p39 = por %p37, %p38
      %p40 = scmp.ne.s32.totalorder %s29, %s30
      %p41 = scmp.eq.s32.totalorder %s21, 0
      %p42 = por %p40, %p41
      %p43 = scmp.ne.s32.totalorder %s29, %s30
      %p44 = scmp.eq.s32.totalorder %s22, 1
      %p45 = por %p43, %p44
      %p47 = scmp.ne.s32.totalorder %s30, %s46
      %p48 = scmp.eq.s32.totalorder %s22, 0
      %p49 = por %p47, %p48
      %s51 = sadd.s32 %s50, 1
      %p54 = scmp.eq.s32.totalorder %s16, 1
      %p55 = scmp.ne.s32.totalorder %s50, %s52
      %p56 = scmp.eq.s32.totalorder %s16, 0
      %p57 = por %p55, %p56
      %p58 = scmp.ne.s32.totalorder %s50, %s52
      %p59 = scmp.eq.s32.totalorder %s21, 1
      %p60 = por %p58, %p59
      %p61 = scmp.ne.s32.totalorder %s52, %s53
      %p62 = scmp.eq.s32.totalorder %s21, 0
      %p63 = por %p61, %p62
      %p64 = scmp.ne.s32.totalorder %s52, %s53
      %p65 = scmp.eq.s32.totalorder %s22, 1
      %p66 = por %p64, %p65
      %p68 = scmp.ne.s32.totalorder %s53, %s67
      %p69 = scmp.eq.s32.totalorder %s22, 0
      %p70 = por %p68, %p69
      %s72 = sadd.s32 %s71, 1
      %p75 = scmp.eq.s32.totalorder %s16, 1
      %p76 = scmp.ne.s32.totalorder %s71, %s73
      %p77 = scmp.eq.s32.totalorder %s16, 0
      %p78 = por %p76, %p77
      %p79 = scmp.ne.s32.totalorder %s71, %s73
      %p80 = scmp.eq.s32.totalorder %s21, 1
      %p81 = por %p79, %p80
      %p82 = scmp.ne.s32.totalorder %s73, %s74
      %p83 = scmp.eq.s32.totalorder %s21, 0
      %p84 = por %p82, %p83
      %p85 = scmp.ne.s32.totalorder %s73, %s74
      %p86 = scmp.eq.s32.totalorder %s22, 1
      %p87 = por %p85, %p86
      %p89 = scmp.ne.s32.totalorder %s74, %s88
      %p90 = scmp.eq.s32.totalorder %s22, 0
      %p91 = por %p89, %p90
      %s92 = ssub.s32 %s16, %s23
      %p93 = scmp.eq.s32.totalorder %s92, 0
      %s95 = sadd.s32 %s94, 1
      %s96 = scalar_select %p93, %s94, %s95
      %p99 = pneg %p93
      %p100 = scmp.eq.s32.totalorder %s16, 1
      %p101 = por %p99, %p100
      %p102 = scmp.ne.s32.totalorder %s94, %s97
      %p103 = scmp.eq.s32.totalorder %s16, 0
      %p104 = por %p102, %p103
      %p105 = scmp.ne.s32.totalorder %s94, %s97
      %p106 = scmp.eq.s32.totalorder %s21, 1
      %p107 = por %p105, %p106
      %p108 = scmp.ne.s32.totalorder %s97, %s98
      %p109 = scmp.eq.s32.totalorder %s21, 0
      %p110 = por %p108, %p109
      %p111 = scmp.ne.s32.totalorder %s97, %s98
      %p112 = scmp.eq.s32.totalorder %s22, 1
      %p113 = por %p111, %p112
      %p115 = scmp.ne.s32.totalorder %s98, %s114
      %p116 = scmp.eq.s32.totalorder %s22, 0
      %p117 = por %p115, %p116
      %p118 = scmp.le.s32.totalorder 1, %s16
      %p119 = scmp.lt.s32.totalorder %s16, 3
      %p120 = pnand %p118, %p119
      %p121 = pneg %p120
      // Predicated region
      $region9: #{densenet2d_down_block.3} parent=5 // pred_check
        _
      $region10: #{densenet2d_down_block.3} parent=5 // pred_check_branch
        %123 = sbr.rel (%p120) target = $region12
      $region11: #{densenet2d_down_block.3} parent=5 // pred_region
        %s124 = ssub.s32 %s16, 1
        // Predicated region
        $region13: #{densenet2d_down_block.3} parent=11 // pred_check
          %p125 = pneg %p63
        $region14: #{densenet2d_down_block.3} parent=11 // pred_check_branch
          %127 = sbr.rel (%p125) target = $region16
        $region15: #{densenet2d_down_block.3} parent=11 // pred_region
          %s129 = ssub.s32 256, 256
          %130 = vsyncadd [#allocation6], %s129
          %s131 = sshll.u32 [#allocation5], 4
          %s132 = int_to_ptr.vmem [resolvable:$true] %s131
          %137 = dma.hbm_to_vmem [thread:$0]  %s1, 256, %s132, [#allocation6], 128, 128, 8
        $region16: #{densenet2d_down_block.3} parent=11 // pred_fallthru
          _
        // Predicated region
        $region17: #{densenet2d_down_block.3} parent=11 // pred_check
          %p138 = pneg %p84
        $region18: #{densenet2d_down_block.3} parent=11 // pred_check_branch
          %140 = sbr.rel (%p138) target = $region20
        $region19: #{densenet2d_down_block.3} parent=11 // pred_region
          %s142 = ssub.s32 512, 512
          %143 = vsyncadd [#allocation6], %s142
          %s144 = sshll.u32 [#allocation7], 4
          %s145 = int_to_ptr.vmem [resolvable:$true] %s144
          %150 = dma.hbm_to_vmem [thread:$0]  %s2, 512, %s145, [#allocation6], 128, 128, 8
        $region20: #{densenet2d_down_block.3} parent=11 // pred_fallthru
          _
      $region12: #{densenet2d_down_block.3} parent=5 // pred_fallthru
        _
      %p151 = scmp.lt.s32.totalorder %s16, 2
      // Predicated region
      $region21: #{densenet2d_down_block.3} parent=5 // pred_check
        %p152 = pneg %p151
      $region22: #{densenet2d_down_block.3} parent=5 // pred_check_branch
        %154 = sbr.rel (%p152) target = $region24
      $region23: #{densenet2d_down_block.3} parent=5 // pred_region
        // Predicated region
        $region25: #{densenet2d_down_block.3} parent=23 // pred_check
          %p155 = pneg %p36
        $region26: #{densenet2d_down_block.3} parent=23 // pred_check_branch
          %157 = sbr.rel (%p155) target = $region28
        $region27: #{densenet2d_down_block.3} parent=23 // pred_region
          %s158 = sand.u32 %s26, 1
          %s159 = scalar_lea.sflag [#allocation3], %s158
          %s160 = sand.u32 %s26, 1
          %s161 = smul.addr %s160, 256
          %s162 = scalar_lea.vmem [#allocation2], %s161
          %s164 = ssub.s32 4096, 4096
          %165 = vsyncadd %s159, %s164
          %s166 = smul.addr %s16, 32
          %s167 = smul.addr %s166, 128
          %s168 = scalar_lea.hbm %s0, %s167
          %s169 = sshll.u32 %s162, 4
          %s170 = int_to_ptr.vmem [resolvable:$true] %s169
          %175 = dma.hbm_to_vmem [thread:$0]  %s168, 4096, %s170, %s159, 128, 128, 8
        $region28: #{densenet2d_down_block.3} parent=23 // pred_fallthru
          _
      $region24: #{densenet2d_down_block.3} parent=5 // pred_fallthru
        _
      %p176 = scmp.le.s32.totalorder 1, %s16
      %p177 = scmp.lt.s32.totalorder %s16, 3
      %p178 = pnand %p176, %p177
      %p179 = pneg %p178
      // Predicated region
      $region29: #{densenet2d_down_block.3} parent=5 // pred_check
        _
      $region30: #{densenet2d_down_block.3} parent=5 // pred_check_branch
        %181 = sbr.rel (%p178) target = $region32
      $region31: #{densenet2d_down_block.3} parent=5 // pred_region
        %s182 = ssub.s32 %s16, 1
        %s183 = sand.u32 %s29, 1
        %s184 = scalar_lea.sflag [#allocation3], %s183
        %s185 = sand.u32 %s29, 1
        %s186 = smul.addr %s185, 256
        %s187 = scalar_lea.vmem [#allocation2], %s186
        // Predicated region
        $region33: #{densenet2d_down_block.3} parent=31 // pred_check
          %p188 = pneg %p42
        $region34: #{densenet2d_down_block.3} parent=31 // pred_check_branch
          %190 = sbr.rel (%p188) target = $region36
        $region35: #{densenet2d_down_block.3} parent=31 // pred_region
          %191 = dma.done %s184, 4096
        $region36: #{densenet2d_down_block.3} parent=31 // pred_fallthru
          _
        // Predicated region
        $region37: #{densenet2d_down_block.3} parent=31 // pred_check
          %p192 = pneg %p63
        $region38: #{densenet2d_down_block.3} parent=31 // pred_check_branch
          %194 = sbr.rel (%p192) target = $region40
        $region39: #{densenet2d_down_block.3} parent=31 // pred_region
          %195 = dma.done [#allocation6], 256
        $region40: #{densenet2d_down_block.3} parent=31 // pred_fallthru
          _
        // Predicated region
        $region41: #{densenet2d_down_block.3} parent=31 // pred_check
          %p196 = pneg %p84
        $region42: #{densenet2d_down_block.3} parent=31 // pred_check_branch
          %198 = sbr.rel (%p196) target = $region44
        $region43: #{densenet2d_down_block.3} parent=31 // pred_region
          %199 = dma.done [#allocation6], 512
        $region44: #{densenet2d_down_block.3} parent=31 // pred_fallthru
          _
        %s200 = sand.u32 %s29, 1
        %s201 = scalar_lea.sflag [#allocation3], %s200
        %s202 = sand.u32 %s29, 1
        %s203 = smul.addr %s202, 256
        %s204 = scalar_lea.vmem [#allocation2], %s203
        %p205 = pneg %p42
        %p206 = pneg %p39
        %p207 = pneg %p63
        %p208 = pneg %p60
        %p209 = pneg %p84
        %p210 = pneg %p81
        %p211 = pneg %p110
        %p212 = pneg %p107
        %s213 = sand.u32 %s97, 1
        %s214 = scalar_lea.sflag [#allocation4], %s213
        %s215 = sand.u32 %s97, 1
        %s216 = smul.addr %s215, 128
        %s217 = scalar_lea.vmem [#allocation8], %s216
        %v218 = vld [vmem:[#allocation5] sm:$0xff]
        %v219 = vld [vmem:[#allocation5 + $0x8] sm:$0xff]
        %v220 = vld [vmem:[#allocation7] sm:$0xff]
        %v221 = vld [vmem:[#allocation7 + $0x8] sm:$0xff]
        %v222 = vld [vmem:[#allocation7 + $0x10] sm:$0xff]
        %v223 = vld [vmem:[#allocation7 + $0x18] sm:$0xff]
        %v224 = vld [vmem:[%s187] sm:$0xff]
        %v225 = vld [vmem:[%s187 + $0x8] sm:$0xff]
        %v226 = vld [vmem:[%s187 + $0x10] sm:$0xff]
        %v227 = vld [vmem:[%s187 + $0x18] sm:$0xff]
        %vm228 = vcmask 261120
        %v230 = vsel %vm228, %v218, 0
        %v233 = vsel %vm228, %v219, 0
        %235 = vmatprep.subr.mxu0 0.0
        %236 = vmatpush1.msra.mxu0 %v224
        %237 = vmatprep.subr.mxu0 0.0
        %238 = vmatpush1.msra.mxu0 %v225
        %239 = vmatprep.subr.mxu0 0.0
        %240 = vmatpush1.msra.mxu0 %v226
        %241 = vmatprep.subr.mxu0 0.0
        %242 = vmatpush1.msra.mxu0 %v227
        %243 = vmatprep.subr.mxu0 0.0
        %244 = vmatpush1.msra.mxu0 0.0
        %245 = vmatprep.subr.mxu0 0.0
        %246 = vmatpush1.msra.mxu0 0.0
        %247 = vmatprep.subr.mxu0 0.0
        %248 = vmatpush1.msra.mxu0 0.0
        %249 = vmatprep.subr.mxu0 0.0
        %250 = vmatpush1.msra.mxu0 0.0
        %251 = vmatprep.subr.mxu0 0.0
        %252 = vmatpush1.msra.mxu0 0.0
        %253 = vmatprep.subr.mxu0 0.0
        %254 = vmatpush1.msra.mxu0 0.0
        %255 = vmatprep.subr.mxu0 0.0
        %256 = vmatpush1.msra.mxu0 0.0
        %257 = vmatprep.subr.mxu0 0.0
        %258 = vmatpush1.msra.mxu0 0.0
        %259 = vmatprep.subr.mxu0 0.0
        %260 = vmatpush1.msra.mxu0 0.0
        %261 = vmatprep.subr.mxu0 0.0
        %262 = vmatpush1.msra.mxu0 0.0
        %263 = vmatprep.subr.mxu0 0.0
        %264 = vmatpush1.msra.mxu0 0.0
        %265 = vmatprep.subr.mxu0 0.0
        %266 = vmatpush1.msra.mxu0 0.0
        %267 = vmatprep.subr.mxu0 0.0
        %268 = vmatpush1.msra.mxu0 0.0
        %269 = vmatprep.subr.mxu0 0.0
        %270 = vmatpush1.msra.mxu0 0.0
        %271 = vmatprep.subr.mxu0 0.0
        %272 = vmatpush1.msra.mxu0 0.0
        %273 = vmatprep.subr.mxu0 0.0
        %274 = vmatpush1.msra.mxu0 0.0
        %275 = vmatprep.subr.mxu0 0.0
        %276 = vmatpush1.msra.mxu0 0.0
        %277 = vmatprep.subr.mxu0 0.0
        %278 = vmatpush1.msra.mxu0 0.0
        %279 = vmatprep.subr.mxu0 0.0
        %280 = vmatpush1.msra.mxu0 0.0
        %281 = vmatprep.subr.mxu0 0.0
        %282 = vmatpush1.msra.mxu0 0.0
        %283 = vmatprep.subr.mxu0 0.0
        %284 = vmatpush1.msra.mxu0 0.0
        %285 = vmatprep.subr.mxu0 0.0
        %286 = vmatpush1.msra.mxu0 0.0
        %287 = vmatprep.subr.mxu0 0.0
        %288 = vmatpush1.msra.mxu0 0.0
        %289 = vmatprep.subr.mxu0 0.0
        %290 = vmatpush1.msra.mxu0 0.0
        %291 = vmatprep.subr.mxu0 0.0
        %292 = vmatpush1.msra.mxu0 0.0
        %293 = vmatprep.subr.mxu0 0.0
        %294 = vmatpush1.msra.mxu0 0.0
        %295 = vmatprep.subr.mxu0 0.0
        %296 = vmatpush1.msra.mxu0 0.0
        %297 = vmatprep.subr.mxu0 0.0
        %298 = vmatpush1.msra.mxu0 0.0
        %299 = vmatprep.mubr.f32.mxu0 0.0
        %300 = vmatmul.mubr.f32.gmra.mrb[0].mxu0 %v230
        %v301 = vpop.f32.mrb[0].mxu0
        %v302 = vadd.f32 0.0, %v301
        %v303 = vpop.f32.mrb[0].mxu0
        %304 = vmatprep.mubr.f32.mxu0 0.0
        %305 = vmatmul.mubr.f32.gmra.mrb[0].mxu0 %v233
        %v306 = vpop.f32.mrb[0].mxu0
        %v307 = vadd.f32 0.0, %v306
        %v308 = vpop.f32.mrb[0].mxu0
        %309 = vdwg.mxu0
        %v311 = vsel %vm228, %v302, 0
        %v314 = vsel %vm228, %v307, 0
        %316 = vmatprep.subr.mxu0 0.0
        %317 = vmatpush1.msra.mxu0 %v220
        %318 = vmatprep.subr.mxu0 0.0
        %319 = vmatpush1.msra.mxu0 %v221
        %320 = vmatprep.subr.mxu0 0.0
        %321 = vmatpush1.msra.mxu0 %v222
        %322 = vmatprep.subr.mxu0 0.0
        %323 = vmatpush1.msra.mxu0 %v223
        %324 = vmatprep.subr.mxu0 0.0
        %325 = vmatpush1.msra.mxu0 0.0
        %326 = vmatprep.subr.mxu0 0.0
        %327 = vmatpush1.msra.mxu0 0.0
        %328 = vmatprep.subr.mxu0 0.0
        %329 = vmatpush1.msra.mxu0 0.0
        %330 = vmatprep.subr.mxu0 0.0
        %331 = vmatpush1.msra.mxu0 0.0
        %332 = vmatprep.subr.mxu0 0.0
        %333 = vmatpush1.msra.mxu0 0.0
        %334 = vmatprep.subr.mxu0 0.0
        %335 = vmatpush1.msra.mxu0 0.0
        %336 = vmatprep.subr.mxu0 0.0
        %337 = vmatpush1.msra.mxu0 0.0
        %338 = vmatprep.subr.mxu0 0.0
        %339 = vmatpush1.msra.mxu0 0.0
        %340 = vmatprep.subr.mxu0 0.0
        %341 = vmatpush1.msra.mxu0 0.0
        %342 = vmatprep.subr.mxu0 0.0
        %343 = vmatpush1.msra.mxu0 0.0
        %344 = vmatprep.subr.mxu0 0.0
        %345 = vmatpush1.msra.mxu0 0.0
        %346 = vmatprep.subr.mxu0 0.0
        %347 = vmatpush1.msra.mxu0 0.0
        %348 = vmatprep.subr.mxu0 0.0
        %349 = vmatpush1.msra.mxu0 0.0
        %350 = vmatprep.subr.mxu0 0.0
        %351 = vmatpush1.msra.mxu0 0.0
        %352 = vmatprep.subr.mxu0 0.0
        %353 = vmatpush1.msra.mxu0 0.0
        %354 = vmatprep.subr.mxu0 0.0
        %355 = vmatpush1.msra.mxu0 0.0
        %356 = vmatprep.subr.mxu0 0.0
        %357 = vmatpush1.msra.mxu0 0.0
        %358 = vmatprep.subr.mxu0 0.0
        %359 = vmatpush1.msra.mxu0 0.0
        %360 = vmatprep.subr.mxu0 0.0
        %361 = vmatpush1.msra.mxu0 0.0
        %362 = vmatprep.subr.mxu0 0.0
        %363 = vmatpush1.msra.mxu0 0.0
        %364 = vmatprep.subr.mxu0 0.0
        %365 = vmatpush1.msra.mxu0 0.0
        %366 = vmatprep.subr.mxu0 0.0
        %367 = vmatpush1.msra.mxu0 0.0
        %368 = vmatprep.subr.mxu0 0.0
        %369 = vmatpush1.msra.mxu0 0.0
        %370 = vmatprep.subr.mxu0 0.0
        %371 = vmatpush1.msra.mxu0 0.0
        %372 = vmatprep.subr.mxu0 0.0
        %373 = vmatpush1.msra.mxu0 0.0
        %374 = vmatprep.subr.mxu0 0.0
        %375 = vmatpush1.msra.mxu0 0.0
        %376 = vmatprep.subr.mxu0 0.0
        %377 = vmatpush1.msra.mxu0 0.0
        %378 = vmatprep.subr.mxu0 0.0
        %379 = vmatpush1.msra.mxu0 0.0
        %380 = vmatprep.mubr.f32.mxu0 0.0
        %381 = vmatmul.mubr.f32.gmra.mrb[0].mxu0 %v311
        %v382 = vpop.f32.mrb[0].mxu0
        %v383 = vadd.f32 0.0, %v382
        %v384 = vpop.f32.mrb[0].mxu0
        %385 = vmatprep.mubr.f32.mxu0 0.0
        %386 = vmatmul.mubr.f32.gmra.mrb[0].mxu0 %v314
        %v387 = vpop.f32.mrb[0].mxu0
        %v388 = vadd.f32 0.0, %v387
        %v389 = vpop.f32.mrb[0].mxu0
        %390 = vdwg.mxu0
        %vm391 = vcmask 130048
        %392 = vst.msk [vmem:[%s217] sm:$0xff] %vm391, %v383
        %393 = vst.msk [vmem:[%s217 + $0x8] sm:$0xff] %vm391, %v388
        %s394 = scalar_lea.vmem %s187, 32 [#allocation2]
        %v395 = vld [vmem:[%s394] sm:$0xff]
        %v396 = vld [vmem:[%s394 + $0x8] sm:$0xff]
        %v397 = vld [vmem:[%s394 + $0x10] sm:$0xff]
        %v398 = vld [vmem:[%s394 + $0x18] sm:$0xff]
        %399 = vmatprep.subr.mxu0 0.0
        %400 = vmatpush1.msra.mxu0 %v395
        %401 = vmatprep.subr.mxu0 0.0
        %402 = vmatpush1.msra.mxu0 %v396
        %403 = vmatprep.subr.mxu0 0.0
        %404 = vmatpush1.msra.mxu0 %v397
        %405 = vmatprep.subr.mxu0 0.0
        %406 = vmatpush1.msra.mxu0 %v398
        %407 = vmatprep.subr.mxu0 0.0
        %408 = vmatpush1.msra.mxu0 0.0
        %409 = vmatprep.subr.mxu0 0.0
        %410 = vmatpush1.msra.mxu0 0.0
        %411 = vmatprep.subr.mxu0 0.0
        %412 = vmatpush1.msra.mxu0 0.0
        %413 = vmatprep.subr.mxu0 0.0
        %414 = vmatpush1.msra.mxu0 0.0
        %415 = vmatprep.subr.mxu0 0.0
        %416 = vmatpush1.msra.mxu0 0.0
        %417 = vmatprep.subr.mxu0 0.0
        %418 = vmatpush1.msra.mxu0 0.0
        %419 = vmatprep.subr.mxu0 0.0
        %420 = vmatpush1.msra.mxu0 0.0
        %421 = vmatprep.subr.mxu0 0.0
        %422 = vmatpush1.msra.mxu0 0.0
        %423 = vmatprep.subr.mxu0 0.0
        %424 = vmatpush1.msra.mxu0 0.0
        %425 = vmatprep.subr.mxu0 0.0
        %426 = vmatpush1.msra.mxu0 0.0
        %427 = vmatprep.subr.mxu0 0.0
        %428 = vmatpush1.msra.mxu0 0.0
        %429 = vmatprep.subr.mxu0 0.0
        %430 = vmatpush1.msra.mxu0 0.0
        %431 = vmatprep.subr.mxu0 0.0
        %432 = vmatpush1.msra.mxu0 0.0
        %433 = vmatprep.subr.mxu0 0.0
        %434 = vmatpush1.msra.mxu0 0.0
        %435 = vmatprep.subr.mxu0 0.0
        %436 = vmatpush1.msra.mxu0 0.0
        %437 = vmatprep.subr.mxu0 0.0
        %438 = vmatpush1.msra.mxu0 0.0
        %439 = vmatprep.subr.mxu0 0.0
        %440 = vmatpush1.msra.mxu0 0.0
        %441 = vmatprep.subr.mxu0 0.0
        %442 = vmatpush1.msra.mxu0 0.0
        %443 = vmatprep.subr.mxu0 0.0
        %444 = vmatpush1.msra.mxu0 0.0
        %445 = vmatprep.subr.mxu0 0.0
        %446 = vmatpush1.msra.mxu0 0.0
        %447 = vmatprep.subr.mxu0 0.0
        %448 = vmatpush1.msra.mxu0 0.0
        %449 = vmatprep.subr.mxu0 0.0
        %450 = vmatpush1.msra.mxu0 0.0
        %451 = vmatprep.subr.mxu0 0.0
        %452 = vmatpush1.msra.mxu0 0.0
        %453 = vmatprep.subr.mxu0 0.0
        %454 = vmatpush1.msra.mxu0 0.0
        %455 = vmatprep.subr.mxu0 0.0
        %456 = vmatpush1.msra.mxu0 0.0
        %457 = vmatprep.subr.mxu0 0.0
        %458 = vmatpush1.msra.mxu0 0.0
        %459 = vmatprep.subr.mxu0 0.0
        %460 = vmatpush1.msra.mxu0 0.0
        %461 = vmatprep.subr.mxu0 0.0
        %462 = vmatpush1.msra.mxu0 0.0
        %463 = vmatprep.mubr.f32.mxu0 0.0
        %464 = vmatmul.mubr.f32.gmra.mrb[0].mxu0 %v230
        %v465 = vpop.f32.mrb[0].mxu0
        %v466 = vadd.f32 0.0, %v465
        %v467 = vpop.f32.mrb[0].mxu0
        %468 = vmatprep.mubr.f32.mxu0 0.0
        %469 = vmatmul.mubr.f32.gmra.mrb[0].mxu0 %v233
        %v470 = vpop.f32.mrb[0].mxu0
        %v471 = vadd.f32 0.0, %v470
        %v472 = vpop.f32.mrb[0].mxu0
        %473 = vdwg.mxu0
        %v475 = vsel %vm228, %v466, 0
        %v478 = vsel %vm228, %v471, 0
        %480 = vmatprep.subr.mxu0 0.0
        %481 = vmatpush1.msra.mxu0 %v220
        %482 = vmatprep.subr.mxu0 0.0
        %483 = vmatpush1.msra.mxu0 %v221
        %484 = vmatprep.subr.mxu0 0.0
        %485 = vmatpush1.msra.mxu0 %v222
        %486 = vmatprep.subr.mxu0 0.0
        %487 = vmatpush1.msra.mxu0 %v223
        %488 = vmatprep.subr.mxu0 0.0
        %489 = vmatpush1.msra.mxu0 0.0
        %490 = vmatprep.subr.mxu0 0.0
        %491 = vmatpush1.msra.mxu0 0.0
        %492 = vmatprep.subr.mxu0 0.0
        %493 = vmatpush1.msra.mxu0 0.0
        %494 = vmatprep.subr.mxu0 0.0
        %495 = vmatpush1.msra.mxu0 0.0
        %496 = vmatprep.subr.mxu0 0.0
        %497 = vmatpush1.msra.mxu0 0.0
        %498 = vmatprep.subr.mxu0 0.0
        %499 = vmatpush1.msra.mxu0 0.0
        %500 = vmatprep.subr.mxu0 0.0
        %501 = vmatpush1.msra.mxu0 0.0
        %502 = vmatprep.subr.mxu0 0.0
        %503 = vmatpush1.msra.mxu0 0.0
        %504 = vmatprep.subr.mxu0 0.0
        %505 = vmatpush1.msra.mxu0 0.0
        %506 = vmatprep.subr.mxu0 0.0
        %507 = vmatpush1.msra.mxu0 0.0
        %508 = vmatprep.subr.mxu0 0.0
        %509 = vmatpush1.msra.mxu0 0.0
        %510 = vmatprep.subr.mxu0 0.0
        %511 = vmatpush1.msra.mxu0 0.0
        %512 = vmatprep.subr.mxu0 0.0
        %513 = vmatpush1.msra.mxu0 0.0
        %514 = vmatprep.subr.mxu0 0.0
        %515 = vmatpush1.msra.mxu0 0.0
        %516 = vmatprep.subr.mxu0 0.0
        %517 = vmatpush1.msra.mxu0 0.0
        %518 = vmatprep.subr.mxu0 0.0
        %519 = vmatpush1.msra.mxu0 0.0
        %520 = vmatprep.subr.mxu0 0.0
        %521 = vmatpush1.msra.mxu0 0.0
        %522 = vmatprep.subr.mxu0 0.0
        %523 = vmatpush1.msra.mxu0 0.0
        %524 = vmatprep.subr.mxu0 0.0
        %525 = vmatpush1.msra.mxu0 0.0
        %526 = vmatprep.subr.mxu0 0.0
        %527 = vmatpush1.msra.mxu0 0.0
        %528 = vmatprep.subr.mxu0 0.0
        %529 = vmatpush1.msra.mxu0 0.0
        %530 = vmatprep.subr.mxu0 0.0
        %531 = vmatpush1.msra.mxu0 0.0
        %532 = vmatprep.subr.mxu0 0.0
        %533 = vmatpush1.msra.mxu0 0.0
        %534 = vmatprep.subr.mxu0 0.0
        %535 = vmatpush1.msra.mxu0 0.0
        %536 = vmatprep.subr.mxu0 0.0
        %537 = vmatpush1.msra.mxu0 0.0
        %538 = vmatprep.subr.mxu0 0.0
        %539 = vmatpush1.msra.mxu0 0.0
        %540 = vmatprep.subr.mxu0 0.0
        %541 = vmatpush1.msra.mxu0 0.0
        %542 = vmatprep.subr.mxu0 0.0
        %543 = vmatpush1.msra.mxu0 0.0
        %544 = vmatprep.mubr.f32.mxu0 0.0
        %545 = vmatmul.mubr.f32.gmra.mrb[0].mxu0 %v475
        %v546 = vpop.f32.mrb[0].mxu0
        %v547 = vadd.f32 0.0, %v546
        %v548 = vpop.f32.mrb[0].mxu0
        %549 = vmatprep.mubr.f32.mxu0 0.0
        %550 = vmatmul.mubr.f32.gmra.mrb[0].mxu0 %v478
        %v551 = vpop.f32.mrb[0].mxu0
        %v552 = vadd.f32 0.0, %v551
        %v553 = vpop.f32.mrb[0].mxu0
        %554 = vdwg.mxu0
        %s555 = scalar_lea.vmem %s217, 16 [#allocation8]
        %556 = vst.msk [vmem:[%s555] sm:$0xff] %vm391, %v547
        %557 = vst.msk [vmem:[%s555 + $0x8] sm:$0xff] %vm391, %v552
        %s558 = scalar_lea.vmem %s187, 64 [#allocation2]
        %v559 = vld [vmem:[%s558] sm:$0xff]
        %v560 = vld [vmem:[%s558 + $0x8] sm:$0xff]
        %v561 = vld [vmem:[%s558 + $0x10] sm:$0xff]
        %v562 = vld [vmem:[%s558 + $0x18] sm:$0xff]
        %563 = vmatprep.subr.mxu0 0.0
        %564 = vmatpush1.msra.mxu0 %v559
        %565 = vmatprep.subr.mxu0 0.0
        %566 = vmatpush1.msra.mxu0 %v560
        %567 = vmatprep.subr.mxu0 0.0
        %568 = vmatpush1.msra.mxu0 %v561
        %569 = vmatprep.subr.mxu0 0.0
        %570 = vmatpush1.msra.mxu0 %v562
        %571 = vmatprep.subr.mxu0 0.0
        %572 = vmatpush1.msra.mxu0 0.0
        %573 = vmatprep.subr.mxu0 0.0
        %574 = vmatpush1.msra.mxu0 0.0
        %575 = vmatprep.subr.mxu0 0.0
        %576 = vmatpush1.msra.mxu0 0.0
        %577 = vmatprep.subr.mxu0 0.0
        %578 = vmatpush1.msra.mxu0 0.0
        %579 = vmatprep.subr.mxu0 0.0
        %580 = vmatpush1.msra.mxu0 0.0
        %581 = vmatprep.subr.mxu0 0.0
        %582 = vmatpush1.msra.mxu0 0.0
        %583 = vmatprep.subr.mxu0 0.0
        %584 = vmatpush1.msra.mxu0 0.0
        %585 = vmatprep.subr.mxu0 0.0
        %586 = vmatpush1.msra.mxu0 0.0
        %587 = vmatprep.subr.mxu0 0.0
        %588 = vmatpush1.msra.mxu0 0.0
        %589 = vmatprep.subr.mxu0 0.0
        %590 = vmatpush1.msra.mxu0 0.0
        %591 = vmatprep.subr.mxu0 0.0
        %592 = vmatpush1.msra.mxu0 0.0
        %593 = vmatprep.subr.mxu0 0.0
        %594 = vmatpush1.msra.mxu0 0.0
        %595 = vmatprep.subr.mxu0 0.0
        %596 = vmatpush1.msra.mxu0 0.0
        %597 = vmatprep.subr.mxu0 0.0
        %598 = vmatpush1.msra.mxu0 0.0
        %599 = vmatprep.subr.mxu0 0.0
        %600 = vmatpush1.msra.mxu0 0.0
        %601 = vmatprep.subr.mxu0 0.0
        %602 = vmatpush1.msra.mxu0 0.0
        %603 = vmatprep.subr.mxu0 0.0
        %604 = vmatpush1.msra.mxu0 0.0
        %605 = vmatprep.subr.mxu0 0.0
        %606 = vmatpush1.msra.mxu0 0.0
        %607 = vmatprep.subr.mxu0 0.0
        %608 = vmatpush1.msra.mxu0 0.0
        %609 = vmatprep.subr.mxu0 0.0
        %610 = vmatpush1.msra.mxu0 0.0
        %611 = vmatprep.subr.mxu0 0.0
        %612 = vmatpush1.msra.mxu0 0.0
        %613 = vmatprep.subr.mxu0 0.0
        %614 = vmatpush1.msra.mxu0 0.0
        %615 = vmatprep.subr.mxu0 0.0
        %616 = vmatpush1.msra.mxu0 0.0
        %617 = vmatprep.subr.mxu0 0.0
        %618 = vmatpush1.msra.mxu0 0.0
        %619 = vmatprep.subr.mxu0 0.0
        %620 = vmatpush1.msra.mxu0 0.0
        %621 = vmatprep.subr.mxu0 0.0
        %622 = vmatpush1.msra.mxu0 0.0
        %623 = vmatprep.subr.mxu0 0.0
        %624 = vmatpush1.msra.mxu0 0.0
        %625 = vmatprep.subr.mxu0 0.0
        %626 = vmatpush1.msra.mxu0 0.0
        %627 = vmatprep.mubr.f32.mxu0 0.0
        %628 = vmatmul.mubr.f32.gmra.mrb[0].mxu0 %v230
        %v629 = vpop.f32.mrb[0].mxu0
        %v630 = vadd.f32 0.0, %v629
        %v631 = vpop.f32.mrb[0].mxu0
        %632 = vmatprep.mubr.f32.mxu0 0.0
        %633 = vmatmul.mubr.f32.gmra.mrb[0].mxu0 %v233
        %v634 = vpop.f32.mrb[0].mxu0
        %v635 = vadd.f32 0.0, %v634
        %v636 = vpop.f32.mrb[0].mxu0
        %637 = vdwg.mxu0
        %v639 = vsel %vm228, %v630, 0
        %v642 = vsel %vm228, %v635, 0
        %644 = vmatprep.subr.mxu0 0.0
        %645 = vmatpush1.msra.mxu0 %v220
        %646 = vmatprep.subr.mxu0 0.0
        %647 = vmatpush1.msra.mxu0 %v221
        %648 = vmatprep.subr.mxu0 0.0
        %649 = vmatpush1.msra.mxu0 %v222
        %650 = vmatprep.subr.mxu0 0.0
        %651 = vmatpush1.msra.mxu0 %v223
        %652 = vmatprep.subr.mxu0 0.0
        %653 = vmatpush1.msra.mxu0 0.0
        %654 = vmatprep.subr.mxu0 0.0
        %655 = vmatpush1.msra.mxu0 0.0
        %656 = vmatprep.subr.mxu0 0.0
        %657 = vmatpush1.msra.mxu0 0.0
        %658 = vmatprep.subr.mxu0 0.0
        %659 = vmatpush1.msra.mxu0 0.0
        %660 = vmatprep.subr.mxu0 0.0
        %661 = vmatpush1.msra.mxu0 0.0
        %662 = vmatprep.subr.mxu0 0.0
        %663 = vmatpush1.msra.mxu0 0.0
        %664 = vmatprep.subr.mxu0 0.0
        %665 = vmatpush1.msra.mxu0 0.0
        %666 = vmatprep.subr.mxu0 0.0
        %667 = vmatpush1.msra.mxu0 0.0
        %668 = vmatprep.subr.mxu0 0.0
        %669 = vmatpush1.msra.mxu0 0.0
        %670 = vmatprep.subr.mxu0 0.0
        %671 = vmatpush1.msra.mxu0 0.0
        %672 = vmatprep.subr.mxu0 0.0
        %673 = vmatpush1.msra.mxu0 0.0
        %674 = vmatprep.subr.mxu0 0.0
        %675 = vmatpush1.msra.mxu0 0.0
        %676 = vmatprep.subr.mxu0 0.0
        %677 = vmatpush1.msra.mxu0 0.0
        %678 = vmatprep.subr.mxu0 0.0
        %679 = vmatpush1.msra.mxu0 0.0
        %680 = vmatprep.subr.mxu0 0.0
        %681 = vmatpush1.msra.mxu0 0.0
        %682 = vmatprep.subr.mxu0 0.0
        %683 = vmatpush1.msra.mxu0 0.0
        %684 = vmatprep.subr.mxu0 0.0
        %685 = vmatpush1.msra.mxu0 0.0
        %686 = vmatprep.subr.mxu0 0.0
        %687 = vmatpush1.msra.mxu0 0.0
        %688 = vmatprep.subr.mxu0 0.0
        %689 = vmatpush1.msra.mxu0 0.0
        %690 = vmatprep.subr.mxu0 0.0
        %691 = vmatpush1.msra.mxu0 0.0
        %692 = vmatprep.subr.mxu0 0.0
        %693 = vmatpush1.msra.mxu0 0.0
        %694 = vmatprep.subr.mxu0 0.0
        %695 = vmatpush1.msra.mxu0 0.0
        %696 = vmatprep.subr.mxu0 0.0
        %697 = vmatpush1.msra.mxu0 0.0
        %698 = vmatprep.subr.mxu0 0.0
        %699 = vmatpush1.msra.mxu0 0.0
        %700 = vmatprep.subr.mxu0 0.0
        %701 = vmatpush1.msra.mxu0 0.0
        %702 = vmatprep.subr.mxu0 0.0
        %703 = vmatpush1.msra.mxu0 0.0
        %704 = vmatprep.subr.mxu0 0.0
        %705 = vmatpush1.msra.mxu0 0.0
        %706 = vmatprep.subr.mxu0 0.0
        %707 = vmatpush1.msra.mxu0 0.0
        %708 = vmatprep.mubr.f32.mxu0 0.0
        %709 = vmatmul.mubr.f32.gmra.mrb[0].mxu0 %v639
        %v710 = vpop.f32.mrb[0].mxu0
        %v711 = vadd.f32 0.0, %v710
        %v712 = vpop.f32.mrb[0].mxu0
        %713 = vmatprep.mubr.f32.mxu0 0.0
        %714 = vmatmul.mubr.f32.gmra.mrb[0].mxu0 %v642
        %v715 = vpop.f32.mrb[0].mxu0
        %v716 = vadd.f32 0.0, %v715
        %v717 = vpop.f32.mrb[0].mxu0
        %718 = vdwg.mxu0
        %s719 = scalar_lea.vmem %s217, 32 [#allocation8]
        %720 = vst.msk [vmem:[%s719] sm:$0xff] %vm391, %v711
        %721 = vst.msk [vmem:[%s719 + $0x8] sm:$0xff] %vm391, %v716
        %s722 = scalar_lea.vmem %s187, 96 [#allocation2]
        %v723 = vld [vmem:[%s722] sm:$0xff]
        %v724 = vld [vmem:[%s722 + $0x8] sm:$0xff]
        %v725 = vld [vmem:[%s722 + $0x10] sm:$0xff]
        %v726 = vld [vmem:[%s722 + $0x18] sm:$0xff]
        %727 = vmatprep.subr.mxu0 0.0
        %728 = vmatpush1.msra.mxu0 %v723
        %729 = vmatprep.subr.mxu0 0.0
        %730 = vmatpush1.msra.mxu0 %v724
        %731 = vmatprep.subr.mxu0 0.0
        %732 = vmatpush1.msra.mxu0 %v725
        %733 = vmatprep.subr.mxu0 0.0
        %734 = vmatpush1.msra.mxu0 %v726
        %735 = vmatprep.subr.mxu0 0.0
        %736 = vmatpush1.msra.mxu0 0.0
        %737 = vmatprep.subr.mxu0 0.0
        %738 = vmatpush1.msra.mxu0 0.0
        %739 = vmatprep.subr.mxu0 0.0
        %740 = vmatpush1.msra.mxu0 0.0
        %741 = vmatprep.subr.mxu0 0.0
        %742 = vmatpush1.msra.mxu0 0.0
        %743 = vmatprep.subr.mxu0 0.0
        %744 = vmatpush1.msra.mxu0 0.0
        %745 = vmatprep.subr.mxu0 0.0
        %746 = vmatpush1.msra.mxu0 0.0
        %747 = vmatprep.subr.mxu0 0.0
        %748 = vmatpush1.msra.mxu0 0.0
        %749 = vmatprep.subr.mxu0 0.0
        %750 = vmatpush1.msra.mxu0 0.0
        %751 = vmatprep.subr.mxu0 0.0
        %752 = vmatpush1.msra.mxu0 0.0
        %753 = vmatprep.subr.mxu0 0.0
        %754 = vmatpush1.msra.mxu0 0.0
        %755 = vmatprep.subr.mxu0 0.0
        %756 = vmatpush1.msra.mxu0 0.0
        %757 = vmatprep.subr.mxu0 0.0
        %758 = vmatpush1.msra.mxu0 0.0
        %759 = vmatprep.subr.mxu0 0.0
        %760 = vmatpush1.msra.mxu0 0.0
        %761 = vmatprep.subr.mxu0 0.0
        %762 = vmatpush1.msra.mxu0 0.0
        %763 = vmatprep.subr.mxu0 0.0
        %764 = vmatpush1.msra.mxu0 0.0
        %765 = vmatprep.subr.mxu0 0.0
        %766 = vmatpush1.msra.mxu0 0.0
        %767 = vmatprep.subr.mxu0 0.0
        %768 = vmatpush1.msra.mxu0 0.0
        %769 = vmatprep.subr.mxu0 0.0
        %770 = vmatpush1.msra.mxu0 0.0
        %771 = vmatprep.subr.mxu0 0.0
        %772 = vmatpush1.msra.mxu0 0.0
        %773 = vmatprep.subr.mxu0 0.0
        %774 = vmatpush1.msra.mxu0 0.0
        %775 = vmatprep.subr.mxu0 0.0
        %776 = vmatpush1.msra.mxu0 0.0
        %777 = vmatprep.subr.mxu0 0.0
        %778 = vmatpush1.msra.mxu0 0.0
        %779 = vmatprep.subr.mxu0 0.0
        %780 = vmatpush1.msra.mxu0 0.0
        %781 = vmatprep.subr.mxu0 0.0
        %782 = vmatpush1.msra.mxu0 0.0
        %783 = vmatprep.subr.mxu0 0.0
        %784 = vmatpush1.msra.mxu0 0.0
        %785 = vmatprep.subr.mxu0 0.0
        %786 = vmatpush1.msra.mxu0 0.0
        %787 = vmatprep.subr.mxu0 0.0
        %788 = vmatpush1.msra.mxu0 0.0
        %789 = vmatprep.subr.mxu0 0.0
        %790 = vmatpush1.msra.mxu0 0.0
        %791 = vmatprep.mubr.f32.mxu0 0.0
        %792 = vmatmul.mubr.f32.gmra.mrb[0].mxu0 %v230
        %v793 = vpop.f32.mrb[0].mxu0
        %v794 = vadd.f32 0.0, %v793
        %v795 = vpop.f32.mrb[0].mxu0
        %796 = vmatprep.mubr.f32.mxu0 0.0
        %797 = vmatmul.mubr.f32.gmra.mrb[0].mxu0 %v233
        %v798 = vpop.f32.mrb[0].mxu0
        %v799 = vadd.f32 0.0, %v798
        %v800 = vpop.f32.mrb[0].mxu0
        %801 = vdwg.mxu0
        %v803 = vsel %vm228, %v794, 0
        %v806 = vsel %vm228, %v799, 0
        %808 = vmatprep.subr.mxu0 0.0
        %809 = vmatpush1.msra.mxu0 %v220
        %810 = vmatprep.subr.mxu0 0.0
        %811 = vmatpush1.msra.mxu0 %v221
        %812 = vmatprep.subr.mxu0 0.0
        %813 = vmatpush1.msra.mxu0 %v222
        %814 = vmatprep.subr.mxu0 0.0
        %815 = vmatpush1.msra.mxu0 %v223
        %816 = vmatprep.subr.mxu0 0.0
        %817 = vmatpush1.msra.mxu0 0.0
        %818 = vmatprep.subr.mxu0 0.0
        %819 = vmatpush1.msra.mxu0 0.0
        %820 = vmatprep.subr.mxu0 0.0
        %821 = vmatpush1.msra.mxu0 0.0
        %822 = vmatprep.subr.mxu0 0.0
        %823 = vmatpush1.msra.mxu0 0.0
        %824 = vmatprep.subr.mxu0 0.0
        %825 = vmatpush1.msra.mxu0 0.0
        %826 = vmatprep.subr.mxu0 0.0
        %827 = vmatpush1.msra.mxu0 0.0
        %828 = vmatprep.subr.mxu0 0.0
        %829 = vmatpush1.msra.mxu0 0.0
        %830 = vmatprep.subr.mxu0 0.0
        %831 = vmatpush1.msra.mxu0 0.0
        %832 = vmatprep.subr.mxu0 0.0
        %833 = vmatpush1.msra.mxu0 0.0
        %834 = vmatprep.subr.mxu0 0.0
        %835 = vmatpush1.msra.mxu0 0.0
        %836 = vmatprep.subr.mxu0 0.0
        %837 = vmatpush1.msra.mxu0 0.0
        %838 = vmatprep.subr.mxu0 0.0
        %839 = vmatpush1.msra.mxu0 0.0
        %840 = vmatprep.subr.mxu0 0.0
        %841 = vmatpush1.msra.mxu0 0.0
        %842 = vmatprep.subr.mxu0 0.0
        %843 = vmatpush1.msra.mxu0 0.0
        %844 = vmatprep.subr.mxu0 0.0
        %845 = vmatpush1.msra.mxu0 0.0
        %846 = vmatprep.subr.mxu0 0.0
        %847 = vmatpush1.msra.mxu0 0.0
        %848 = vmatprep.subr.mxu0 0.0
        %849 = vmatpush1.msra.mxu0 0.0
        %850 = vmatprep.subr.mxu0 0.0
        %851 = vmatpush1.msra.mxu0 0.0
        %852 = vmatprep.subr.mxu0 0.0
        %853 = vmatpush1.msra.mxu0 0.0
        %854 = vmatprep.subr.mxu0 0.0
        %855 = vmatpush1.msra.mxu0 0.0
        %856 = vmatprep.subr.mxu0 0.0
        %857 = vmatpush1.msra.mxu0 0.0
        %858 = vmatprep.subr.mxu0 0.0
        %859 = vmatpush1.msra.mxu0 0.0
        %860 = vmatprep.subr.mxu0 0.0
        %861 = vmatpush1.msra.mxu0 0.0
        %862 = vmatprep.subr.mxu0 0.0
        %863 = vmatpush1.msra.mxu0 0.0
        %864 = vmatprep.subr.mxu0 0.0
        %865 = vmatpush1.msra.mxu0 0.0
        %866 = vmatprep.subr.mxu0 0.0
        %867 = vmatpush1.msra.mxu0 0.0
        %868 = vmatprep.subr.mxu0 0.0
        %869 = vmatpush1.msra.mxu0 0.0
        %870 = vmatprep.subr.mxu0 0.0
        %871 = vmatpush1.msra.mxu0 0.0
        %872 = vmatprep.mubr.f32.mxu0 0.0
        %873 = vmatmul.mubr.f32.gmra.mrb[0].mxu0 %v803
        %v874 = vpop.f32.mrb[0].mxu0
        %v875 = vadd.f32 0.0, %v874
        %v876 = vpop.f32.mrb[0].mxu0
        %877 = vmatprep.mubr.f32.mxu0 0.0
        %878 = vmatmul.mubr.f32.gmra.mrb[0].mxu0 %v806
        %v879 = vpop.f32.mrb[0].mxu0
        %v880 = vadd.f32 0.0, %v879
        %v881 = vpop.f32.mrb[0].mxu0
        %882 = vdwg.mxu0
        %s883 = scalar_lea.vmem %s217, 48 [#allocation8]
        %884 = vst.msk [vmem:[%s883] sm:$0xff] %vm391, %v875
        %885 = vst.msk [vmem:[%s883 + $0x8] sm:$0xff] %vm391, %v880
        %s886 = scalar_lea.vmem %s187, 128 [#allocation2]
        %v887 = vld [vmem:[%s886] sm:$0xff]
        %v888 = vld [vmem:[%s886 + $0x8] sm:$0xff]
        %v889 = vld [vmem:[%s886 + $0x10] sm:$0xff]
        %v890 = vld [vmem:[%s886 + $0x18] sm:$0xff]
        %891 = vmatprep.subr.mxu0 0.0
        %892 = vmatpush1.msra.mxu0 %v887
        %893 = vmatprep.subr.mxu0 0.0
        %894 = vmatpush1.msra.mxu0 %v888
        %895 = vmatprep.subr.mxu0 0.0
        %896 = vmatpush1.msra.mxu0 %v889
        %897 = vmatprep.subr.mxu0 0.0
        %898 = vmatpush1.msra.mxu0 %v890
        %899 = vmatprep.subr.mxu0 0.0
        %900 = vmatpush1.msra.mxu0 0.0
        %901 = vmatprep.subr.mxu0 0.0
        %902 = vmatpush1.msra.mxu0 0.0
        %903 = vmatprep.subr.mxu0 0.0
        %904 = vmatpush1.msra.mxu0 0.0
        %905 = vmatprep.subr.mxu0 0.0
        %906 = vmatpush1.msra.mxu0 0.0
        %907 = vmatprep.subr.mxu0 0.0
        %908 = vmatpush1.msra.mxu0 0.0
        %909 = vmatprep.subr.mxu0 0.0
        %910 = vmatpush1.msra.mxu0 0.0
        %911 = vmatprep.subr.mxu0 0.0
        %912 = vmatpush1.msra.mxu0 0.0
        %913 = vmatprep.subr.mxu0 0.0
        %914 = vmatpush1.msra.mxu0 0.0
        %915 = vmatprep.subr.mxu0 0.0
        %916 = vmatpush1.msra.mxu0 0.0
        %917 = vmatprep.subr.mxu0 0.0
        %918 = vmatpush1.msra.mxu0 0.0
        %919 = vmatprep.subr.mxu0 0.0
        %920 = vmatpush1.msra.mxu0 0.0
        %921 = vmatprep.subr.mxu0 0.0
        %922 = vmatpush1.msra.mxu0 0.0
        %923 = vmatprep.subr.mxu0 0.0
        %924 = vmatpush1.msra.mxu0 0.0
        %925 = vmatprep.subr.mxu0 0.0
        %926 = vmatpush1.msra.mxu0 0.0
        %927 = vmatprep.subr.mxu0 0.0
        %928 = vmatpush1.msra.mxu0 0.0
        %929 = vmatprep.subr.mxu0 0.0
        %930 = vmatpush1.msra.mxu0 0.0
        %931 = vmatprep.subr.mxu0 0.0
        %932 = vmatpush1.msra.mxu0 0.0
        %933 = vmatprep.subr.mxu0 0.0
        %934 = vmatpush1.msra.mxu0 0.0
        %935 = vmatprep.subr.mxu0 0.0
        %936 = vmatpush1.msra.mxu0 0.0
        %937 = vmatprep.subr.mxu0 0.0
        %938 = vmatpush1.msra.mxu0 0.0
        %939 = vmatprep.subr.mxu0 0.0
        %940 = vmatpush1.msra.mxu0 0.0
        %941 = vmatprep.subr.mxu0 0.0
        %942 = vmatpush1.msra.mxu0 0.0
        %943 = vmatprep.subr.mxu0 0.0
        %944 = vmatpush1.msra.mxu0 0.0
        %945 = vmatprep.subr.mxu0 0.0
        %946 = vmatpush1.msra.mxu0 0.0
        %947 = vmatprep.subr.mxu0 0.0
        %948 = vmatpush1.msra.mxu0 0.0
        %949 = vmatprep.subr.mxu0 0.0
        %950 = vmatpush1.msra.mxu0 0.0
        %951 = vmatprep.subr.mxu0 0.0
        %952 = vmatpush1.msra.mxu0 0.0
        %953 = vmatprep.subr.mxu0 0.0
        %954 = vmatpush1.msra.mxu0 0.0
        %955 = vmatprep.mubr.f32.mxu0 0.0
        %956 = vmatmul.mubr.f32.gmra.mrb[0].mxu0 %v230
        %v957 = vpop.f32.mrb[0].mxu0
        %v958 = vadd.f32 0.0, %v957
        %v959 = vpop.f32.mrb[0].mxu0
        %960 = vmatprep.mubr.f32.mxu0 0.0
        %961 = vmatmul.mubr.f32.gmra.mrb[0].mxu0 %v233
        %v962 = vpop.f32.mrb[0].mxu0
        %v963 = vadd.f32 0.0, %v962
        %v964 = vpop.f32.mrb[0].mxu0
        %965 = vdwg.mxu0
        %v967 = vsel %vm228, %v958, 0
        %v970 = vsel %vm228, %v963, 0
        %972 = vmatprep.subr.mxu0 0.0
        %973 = vmatpush1.msra.mxu0 %v220
        %974 = vmatprep.subr.mxu0 0.0
        %975 = vmatpush1.msra.mxu0 %v221
        %976 = vmatprep.subr.mxu0 0.0
        %977 = vmatpush1.msra.mxu0 %v222
        %978 = vmatprep.subr.mxu0 0.0
        %979 = vmatpush1.msra.mxu0 %v223
        %980 = vmatprep.subr.mxu0 0.0
        %981 = vmatpush1.msra.mxu0 0.0
        %982 = vmatprep.subr.mxu0 0.0
        %983 = vmatpush1.msra.mxu0 0.0
        %984 = vmatprep.subr.mxu0 0.0
        %985 = vmatpush1.msra.mxu0 0.0
        %986 = vmatprep.subr.mxu0 0.0
        %987 = vmatpush1.msra.mxu0 0.0
        %988 = vmatprep.subr.mxu0 0.0
        %989 = vmatpush1.msra.mxu0 0.0
        %990 = vmatprep.subr.mxu0 0.0
        %991 = vmatpush1.msra.mxu0 0.0
        %992 = vmatprep.subr.mxu0 0.0
        %993 = vmatpush1.msra.mxu0 0.0
        %994 = vmatprep.subr.mxu0 0.0
        %995 = vmatpush1.msra.mxu0 0.0
        %996 = vmatprep.subr.mxu0 0.0
        %997 = vmatpush1.msra.mxu0 0.0
        %998 = vmatprep.subr.mxu0 0.0
        %999 = vmatpush1.msra.mxu0 0.0
        %1000 = vmatprep.subr.mxu0 0.0
        %1001 = vmatpush1.msra.mxu0 0.0
        %1002 = vmatprep.subr.mxu0 0.0
        %1003 = vmatpush1.msra.mxu0 0.0
        %1004 = vmatprep.subr.mxu0 0.0
        %1005 = vmatpush1.msra.mxu0 0.0
        %1006 = vmatprep.subr.mxu0 0.0
        %1007 = vmatpush1.msra.mxu0 0.0
        %1008 = vmatprep.subr.mxu0 0.0
        %1009 = vmatpush1.msra.mxu0 0.0
        %1010 = vmatprep.subr.mxu0 0.0
        %1011 = vmatpush1.msra.mxu0 0.0
        %1012 = vmatprep.subr.mxu0 0.0
        %1013 = vmatpush1.msra.mxu0 0.0
        %1014 = vmatprep.subr.mxu0 0.0
        %1015 = vmatpush1.msra.mxu0 0.0
        %1016 = vmatprep.subr.mxu0 0.0
        %1017 = vmatpush1.msra.mxu0 0.0
        %1018 = vmatprep.subr.mxu0 0.0
        %1019 = vmatpush1.msra.mxu0 0.0
        %1020 = vmatprep.subr.mxu0 0.0
        %1021 = vmatpush1.msra.mxu0 0.0
        %1022 = vmatprep.subr.mxu0 0.0
        %1023 = vmatpush1.msra.mxu0 0.0
        %1024 = vmatprep.subr.mxu0 0.0
        %1025 = vmatpush1.msra.mxu0 0.0
        %1026 = vmatprep.subr.mxu0 0.0
        %1027 = vmatpush1.msra.mxu0 0.0
        %1028 = vmatprep.subr.mxu0 0.0
        %1029 = vmatpush1.msra.mxu0 0.0
        %1030 = vmatprep.subr.mxu0 0.0
        %1031 = vmatpush1.msra.mxu0 0.0
        %1032 = vmatprep.subr.mxu0 0.0
        %1033 = vmatpush1.msra.mxu0 0.0
        %1034 = vmatprep.subr.mxu0 0.0
        %1035 = vmatpush1.msra.mxu0 0.0
        %1036 = vmatprep.mubr.f32.mxu0 0.0
        %1037 = vmatmul.mubr.f32.gmra.mrb[0].mxu0 %v967
        %v1038 = vpop.f32.mrb[0].mxu0
        %v1039 = vadd.f32 0.0, %v1038
        %v1040 = vpop.f32.mrb[0].mxu0
        %1041 = vmatprep.mubr.f32.mxu0 0.0
        %1042 = vmatmul.mubr.f32.gmra.mrb[0].mxu0 %v970
        %v1043 = vpop.f32.mrb[0].mxu0
        %v1044 = vadd.f32 0.0, %v1043
        %v1045 = vpop.f32.mrb[0].mxu0
        %1046 = vdwg.mxu0
        %s1047 = scalar_lea.vmem %s217, 64 [#allocation8]
        %1048 = vst.msk [vmem:[%s1047] sm:$0xff] %vm391, %v1039
        %1049 = vst.msk [vmem:[%s1047 + $0x8] sm:$0xff] %vm391, %v1044
        %s1050 = scalar_lea.vmem %s187, 160 [#allocation2]
        %v1051 = vld [vmem:[%s1050] sm:$0xff]
        %v1052 = vld [vmem:[%s1050 + $0x8] sm:$0xff]
        %v1053 = vld [vmem:[%s1050 + $0x10] sm:$0xff]
        %v1054 = vld [vmem:[%s1050 + $0x18] sm:$0xff]
        %1055 = vmatprep.subr.mxu0 0.0
        %1056 = vmatpush1.msra.mxu0 %v1051
        %1057 = vmatprep.subr.mxu0 0.0
        %1058 = vmatpush1.msra.mxu0 %v1052
        %1059 = vmatprep.subr.mxu0 0.0
        %1060 = vmatpush1.msra.mxu0 %v1053
        %1061 = vmatprep.subr.mxu0 0.0
        %1062 = vmatpush1.msra.mxu0 %v1054
        %1063 = vmatprep.subr.mxu0 0.0
        %1064 = vmatpush1.msra.mxu0 0.0
        %1065 = vmatprep.subr.mxu0 0.0
        %1066 = vmatpush1.msra.mxu0 0.0
        %1067 = vmatprep.subr.mxu0 0.0
        %1068 = vmatpush1.msra.mxu0 0.0
        %1069 = vmatprep.subr.mxu0 0.0
        %1070 = vmatpush1.msra.mxu0 0.0
        %1071 = vmatprep.subr.mxu0 0.0
        %1072 = vmatpush1.msra.mxu0 0.0
        %1073 = vmatprep.subr.mxu0 0.0
        %1074 = vmatpush1.msra.mxu0 0.0
        %1075 = vmatprep.subr.mxu0 0.0
        %1076 = vmatpush1.msra.mxu0 0.0
        %1077 = vmatprep.subr.mxu0 0.0
        %1078 = vmatpush1.msra.mxu0 0.0
        %1079 = vmatprep.subr.mxu0 0.0
        %1080 = vmatpush1.msra.mxu0 0.0
        %1081 = vmatprep.subr.mxu0 0.0
        %1082 = vmatpush1.msra.mxu0 0.0
        %1083 = vmatprep.subr.mxu0 0.0
        %1084 = vmatpush1.msra.mxu0 0.0
        %1085 = vmatprep.subr.mxu0 0.0
        %1086 = vmatpush1.msra.mxu0 0.0
        %1087 = vmatprep.subr.mxu0 0.0
        %1088 = vmatpush1.msra.mxu0 0.0
        %1089 = vmatprep.subr.mxu0 0.0
        %1090 = vmatpush1.msra.mxu0 0.0
        %1091 = vmatprep.subr.mxu0 0.0
        %1092 = vmatpush1.msra.mxu0 0.0
        %1093 = vmatprep.subr.mxu0 0.0
        %1094 = vmatpush1.msra.mxu0 0.0
        %1095 = vmatprep.subr.mxu0 0.0
        %1096 = vmatpush1.msra.mxu0 0.0
        %1097 = vmatprep.subr.mxu0 0.0
        %1098 = vmatpush1.msra.mxu0 0.0
        %1099 = vmatprep.subr.mxu0 0.0
        %1100 = vmatpush1.msra.mxu0 0.0
        %1101 = vmatprep.subr.mxu0 0.0
        %1102 = vmatpush1.msra.mxu0 0.0
        %1103 = vmatprep.subr.mxu0 0.0
        %1104 = vmatpush1.msra.mxu0 0.0
        %1105 = vmatprep.subr.mxu0 0.0
        %1106 = vmatpush1.msra.mxu0 0.0
        %1107 = vmatprep.subr.mxu0 0.0
        %1108 = vmatpush1.msra.mxu0 0.0
        %1109 = vmatprep.subr.mxu0 0.0
        %1110 = vmatpush1.msra.mxu0 0.0
        %1111 = vmatprep.subr.mxu0 0.0
        %1112 = vmatpush1.msra.mxu0 0.0
        %1113 = vmatprep.subr.mxu0 0.0
        %1114 = vmatpush1.msra.mxu0 0.0
        %1115 = vmatprep.subr.mxu0 0.0
        %1116 = vmatpush1.msra.mxu0 0.0
        %1117 = vmatprep.subr.mxu0 0.0
        %1118 = vmatpush1.msra.mxu0 0.0
        %1119 = vmatprep.mubr.f32.mxu0 0.0
        %1120 = vmatmul.mubr.f32.gmra.mrb[0].mxu0 %v230
        %v1121 = vpop.f32.mrb[0].mxu0
        %v1122 = vadd.f32 0.0, %v1121
        %v1123 = vpop.f32.mrb[0].mxu0
        %1124 = vmatprep.mubr.f32.mxu0 0.0
        %1125 = vmatmul.mubr.f32.gmra.mrb[0].mxu0 %v233
        %v1126 = vpop.f32.mrb[0].mxu0
        %v1127 = vadd.f32 0.0, %v1126
        %v1128 = vpop.f32.mrb[0].mxu0
        %1129 = vdwg.mxu0
        %v1131 = vsel %vm228, %v1122, 0
        %v1134 = vsel %vm228, %v1127, 0
        %1136 = vmatprep.subr.mxu0 0.0
        %1137 = vmatpush1.msra.mxu0 %v220
        %1138 = vmatprep.subr.mxu0 0.0
        %1139 = vmatpush1.msra.mxu0 %v221
        %1140 = vmatprep.subr.mxu0 0.0
        %1141 = vmatpush1.msra.mxu0 %v222
        %1142 = vmatprep.subr.mxu0 0.0
        %1143 = vmatpush1.msra.mxu0 %v223
        %1144 = vmatprep.subr.mxu0 0.0
        %1145 = vmatpush1.msra.mxu0 0.0
        %1146 = vmatprep.subr.mxu0 0.0
        %1147 = vmatpush1.msra.mxu0 0.0
        %1148 = vmatprep.subr.mxu0 0.0
        %1149 = vmatpush1.msra.mxu0 0.0
        %1150 = vmatprep.subr.mxu0 0.0
        %1151 = vmatpush1.msra.mxu0 0.0
        %1152 = vmatprep.subr.mxu0 0.0
        %1153 = vmatpush1.msra.mxu0 0.0
        %1154 = vmatprep.subr.mxu0 0.0
        %1155 = vmatpush1.msra.mxu0 0.0
        %1156 = vmatprep.subr.mxu0 0.0
        %1157 = vmatpush1.msra.mxu0 0.0
        %1158 = vmatprep.subr.mxu0 0.0
        %1159 = vmatpush1.msra.mxu0 0.0
        %1160 = vmatprep.subr.mxu0 0.0
        %1161 = vmatpush1.msra.mxu0 0.0
        %1162 = vmatprep.subr.mxu0 0.0
        %1163 = vmatpush1.msra.mxu0 0.0
        %1164 = vmatprep.subr.mxu0 0.0
        %1165 = vmatpush1.msra.mxu0 0.0
        %1166 = vmatprep.subr.mxu0 0.0
        %1167 = vmatpush1.msra.mxu0 0.0
        %1168 = vmatprep.subr.mxu0 0.0
        %1169 = vmatpush1.msra.mxu0 0.0
        %1170 = vmatprep.subr.mxu0 0.0
        %1171 = vmatpush1.msra.mxu0 0.0
        %1172 = vmatprep.subr.mxu0 0.0
        %1173 = vmatpush1.msra.mxu0 0.0
        %1174 = vmatprep.subr.mxu0 0.0
        %1175 = vmatpush1.msra.mxu0 0.0
        %1176 = vmatprep.subr.mxu0 0.0
        %1177 = vmatpush1.msra.mxu0 0.0
        %1178 = vmatprep.subr.mxu0 0.0
        %1179 = vmatpush1.msra.mxu0 0.0
        %1180 = vmatprep.subr.mxu0 0.0
        %1181 = vmatpush1.msra.mxu0 0.0
        %1182 = vmatprep.subr.mxu0 0.0
        %1183 = vmatpush1.msra.mxu0 0.0
        %1184 = vmatprep.subr.mxu0 0.0
        %1185 = vmatpush1.msra.mxu0 0.0
        %1186 = vmatprep.subr.mxu0 0.0
        %1187 = vmatpush1.msra.mxu0 0.0
        %1188 = vmatprep.subr.mxu0 0.0
        %1189 = vmatpush1.msra.mxu0 0.0
        %1190 = vmatprep.subr.mxu0 0.0
        %1191 = vmatpush1.msra.mxu0 0.0
        %1192 = vmatprep.subr.mxu0 0.0
        %1193 = vmatpush1.msra.mxu0 0.0
        %1194 = vmatprep.subr.mxu0 0.0
        %1195 = vmatpush1.msra.mxu0 0.0
        %1196 = vmatprep.subr.mxu0 0.0
        %1197 = vmatpush1.msra.mxu0 0.0
        %1198 = vmatprep.subr.mxu0 0.0
        %1199 = vmatpush1.msra.mxu0 0.0
        %1200 = vmatprep.mubr.f32.mxu0 0.0
        %1201 = vmatmul.mubr.f32.gmra.mrb[0].mxu0 %v1131
        %v1202 = vpop.f32.mrb[0].mxu0
        %v1203 = vadd.f32 0.0, %v1202
        %v1204 = vpop.f32.mrb[0].mxu0
        %1205 = vmatprep.mubr.f32.mxu0 0.0
        %1206 = vmatmul.mubr.f32.gmra.mrb[0].mxu0 %v1134
        %v1207 = vpop.f32.mrb[0].mxu0
        %v1208 = vadd.f32 0.0, %v1207
        %v1209 = vpop.f32.mrb[0].mxu0
        %1210 = vdwg.mxu0
        %s1211 = scalar_lea.vmem %s217, 80 [#allocation8]
        %1212 = vst.msk [vmem:[%s1211] sm:$0xff] %vm391, %v1203
        %1213 = vst.msk [vmem:[%s1211 + $0x8] sm:$0xff] %vm391, %v1208
        %s1214 = scalar_lea.vmem %s187, 192 [#allocation2]
        %v1215 = vld [vmem:[%s1214] sm:$0xff]
        %v1216 = vld [vmem:[%s1214 + $0x8] sm:$0xff]
        %v1217 = vld [vmem:[%s1214 + $0x10] sm:$0xff]
        %v1218 = vld [vmem:[%s1214 + $0x18] sm:$0xff]
        %1219 = vmatprep.subr.mxu0 0.0
        %1220 = vmatpush1.msra.mxu0 %v1215
        %1221 = vmatprep.subr.mxu0 0.0
        %1222 = vmatpush1.msra.mxu0 %v1216
        %1223 = vmatprep.subr.mxu0 0.0
        %1224 = vmatpush1.msra.mxu0 %v1217
        %1225 = vmatprep.subr.mxu0 0.0
        %1226 = vmatpush1.msra.mxu0 %v1218
        %1227 = vmatprep.subr.mxu0 0.0
        %1228 = vmatpush1.msra.mxu0 0.0
        %1229 = vmatprep.subr.mxu0 0.0
        %1230 = vmatpush1.msra.mxu0 0.0
        %1231 = vmatprep.subr.mxu0 0.0
        %1232 = vmatpush1.msra.mxu0 0.0
        %1233 = vmatprep.subr.mxu0 0.0
        %1234 = vmatpush1.msra.mxu0 0.0
        %1235 = vmatprep.subr.mxu0 0.0
        %1236 = vmatpush1.msra.mxu0 0.0
        %1237 = vmatprep.subr.mxu0 0.0
        %1238 = vmatpush1.msra.mxu0 0.0
        %1239 = vmatprep.subr.mxu0 0.0
        %1240 = vmatpush1.msra.mxu0 0.0
        %1241 = vmatprep.subr.mxu0 0.0
        %1242 = vmatpush1.msra.mxu0 0.0
        %1243 = vmatprep.subr.mxu0 0.0
        %1244 = vmatpush1.msra.mxu0 0.0
        %1245 = vmatprep.subr.mxu0 0.0
        %1246 = vmatpush1.msra.mxu0 0.0
        %1247 = vmatprep.subr.mxu0 0.0
        %1248 = vmatpush1.msra.mxu0 0.0
        %1249 = vmatprep.subr.mxu0 0.0
        %1250 = vmatpush1.msra.mxu0 0.0
        %1251 = vmatprep.subr.mxu0 0.0
        %1252 = vmatpush1.msra.mxu0 0.0
        %1253 = vmatprep.subr.mxu0 0.0
        %1254 = vmatpush1.msra.mxu0 0.0
        %1255 = vmatprep.subr.mxu0 0.0
        %1256 = vmatpush1.msra.mxu0 0.0
        %1257 = vmatprep.subr.mxu0 0.0
        %1258 = vmatpush1.msra.mxu0 0.0
        %1259 = vmatprep.subr.mxu0 0.0
        %1260 = vmatpush1.msra.mxu0 0.0
        %1261 = vmatprep.subr.mxu0 0.0
        %1262 = vmatpush1.msra.mxu0 0.0
        %1263 = vmatprep.subr.mxu0 0.0
        %1264 = vmatpush1.msra.mxu0 0.0
        %1265 = vmatprep.subr.mxu0 0.0
        %1266 = vmatpush1.msra.mxu0 0.0
        %1267 = vmatprep.subr.mxu0 0.0
        %1268 = vmatpush1.msra.mxu0 0.0
        %1269 = vmatprep.subr.mxu0 0.0
        %1270 = vmatpush1.msra.mxu0 0.0
        %1271 = vmatprep.subr.mxu0 0.0
        %1272 = vmatpush1.msra.mxu0 0.0
        %1273 = vmatprep.subr.mxu0 0.0
        %1274 = vmatpush1.msra.mxu0 0.0
        %1275 = vmatprep.subr.mxu0 0.0
        %1276 = vmatpush1.msra.mxu0 0.0
        %1277 = vmatprep.subr.mxu0 0.0
        %1278 = vmatpush1.msra.mxu0 0.0
        %1279 = vmatprep.subr.mxu0 0.0
        %1280 = vmatpush1.msra.mxu0 0.0
        %1281 = vmatprep.subr.mxu0 0.0
        %1282 = vmatpush1.msra.mxu0 0.0
        %1283 = vmatprep.mubr.f32.mxu0 0.0
        %1284 = vmatmul.mubr.f32.gmra.mrb[0].mxu0 %v230
        %v1285 = vpop.f32.mrb[0].mxu0
        %v1286 = vadd.f32 0.0, %v1285
        %v1287 = vpop.f32.mrb[0].mxu0
        %1288 = vmatprep.mubr.f32.mxu0 0.0
        %1289 = vmatmul.mubr.f32.gmra.mrb[0].mxu0 %v233
        %v1290 = vpop.f32.mrb[0].mxu0
        %v1291 = vadd.f32 0.0, %v1290
        %v1292 = vpop.f32.mrb[0].mxu0
        %1293 = vdwg.mxu0
        %v1295 = vsel %vm228, %v1286, 0
        %v1298 = vsel %vm228, %v1291, 0
        %1300 = vmatprep.subr.mxu0 0.0
        %1301 = vmatpush1.msra.mxu0 %v220
        %1302 = vmatprep.subr.mxu0 0.0
        %1303 = vmatpush1.msra.mxu0 %v221
        %1304 = vmatprep.subr.mxu0 0.0
        %1305 = vmatpush1.msra.mxu0 %v222
        %1306 = vmatprep.subr.mxu0 0.0
        %1307 = vmatpush1.msra.mxu0 %v223
        %1308 = vmatprep.subr.mxu0 0.0
        %1309 = vmatpush1.msra.mxu0 0.0
        %1310 = vmatprep.subr.mxu0 0.0
        %1311 = vmatpush1.msra.mxu0 0.0
        %1312 = vmatprep.subr.mxu0 0.0
        %1313 = vmatpush1.msra.mxu0 0.0
        %1314 = vmatprep.subr.mxu0 0.0
        %1315 = vmatpush1.msra.mxu0 0.0
        %1316 = vmatprep.subr.mxu0 0.0
        %1317 = vmatpush1.msra.mxu0 0.0
        %1318 = vmatprep.subr.mxu0 0.0
        %1319 = vmatpush1.msra.mxu0 0.0
        %1320 = vmatprep.subr.mxu0 0.0
        %1321 = vmatpush1.msra.mxu0 0.0
        %1322 = vmatprep.subr.mxu0 0.0
        %1323 = vmatpush1.msra.mxu0 0.0
        %1324 = vmatprep.subr.mxu0 0.0
        %1325 = vmatpush1.msra.mxu0 0.0
        %1326 = vmatprep.subr.mxu0 0.0
        %1327 = vmatpush1.msra.mxu0 0.0
        %1328 = vmatprep.subr.mxu0 0.0
        %1329 = vmatpush1.msra.mxu0 0.0
        %1330 = vmatprep.subr.mxu0 0.0
        %1331 = vmatpush1.msra.mxu0 0.0
        %1332 = vmatprep.subr.mxu0 0.0
        %1333 = vmatpush1.msra.mxu0 0.0
        %1334 = vmatprep.subr.mxu0 0.0
        %1335 = vmatpush1.msra.mxu0 0.0
        %1336 = vmatprep.subr.mxu0 0.0
        %1337 = vmatpush1.msra.mxu0 0.0
        %1338 = vmatprep.subr.mxu0 0.0
        %1339 = vmatpush1.msra.mxu0 0.0
        %1340 = vmatprep.subr.mxu0 0.0
        %1341 = vmatpush1.msra.mxu0 0.0
        %1342 = vmatprep.subr.mxu0 0.0
        %1343 = vmatpush1.msra.mxu0 0.0
        %1344 = vmatprep.subr.mxu0 0.0
        %1345 = vmatpush1.msra.mxu0 0.0
        %1346 = vmatprep.subr.mxu0 0.0
        %1347 = vmatpush1.msra.mxu0 0.0
        %1348 = vmatprep.subr.mxu0 0.0
        %1349 = vmatpush1.msra.mxu0 0.0
        %1350 = vmatprep.subr.mxu0 0.0
        %1351 = vmatpush1.msra.mxu0 0.0
        %1352 = vmatprep.subr.mxu0 0.0
        %1353 = vmatpush1.msra.mxu0 0.0
        %1354 = vmatprep.subr.mxu0 0.0
        %1355 = vmatpush1.msra.mxu0 0.0
        %1356 = vmatprep.subr.mxu0 0.0
        %1357 = vmatpush1.msra.mxu0 0.0
        %1358 = vmatprep.subr.mxu0 0.0
        %1359 = vmatpush1.msra.mxu0 0.0
        %1360 = vmatprep.subr.mxu0 0.0
        %1361 = vmatpush1.msra.mxu0 0.0
        %1362 = vmatprep.subr.mxu0 0.0
        %1363 = vmatpush1.msra.mxu0 0.0
        %1364 = vmatprep.mubr.f32.mxu0 0.0
        %1365 = vmatmul.mubr.f32.gmra.mrb[0].mxu0 %v1295
        %v1366 = vpop.f32.mrb[0].mxu0
        %v1367 = vadd.f32 0.0, %v1366
        %v1368 = vpop.f32.mrb[0].mxu0
        %1369 = vmatprep.mubr.f32.mxu0 0.0
        %1370 = vmatmul.mubr.f32.gmra.mrb[0].mxu0 %v1298
        %v1371 = vpop.f32.mrb[0].mxu0
        %v1372 = vadd.f32 0.0, %v1371
        %v1373 = vpop.f32.mrb[0].mxu0
        %1374 = vdwg.mxu0
        %s1375 = scalar_lea.vmem %s217, 96 [#allocation8]
        %1376 = vst.msk [vmem:[%s1375] sm:$0xff] %vm391, %v1367
        %1377 = vst.msk [vmem:[%s1375 + $0x8] sm:$0xff] %vm391, %v1372
        %s1378 = scalar_lea.vmem %s187, 224 [#allocation2]
        %v1379 = vld [vmem:[%s1378] sm:$0xff]
        %v1380 = vld [vmem:[%s1378 + $0x8] sm:$0xff]
        %v1381 = vld [vmem:[%s1378 + $0x10] sm:$0xff]
        %v1382 = vld [vmem:[%s1378 + $0x18] sm:$0xff]
        %1383 = vmatprep.subr.mxu0 0.0
        %1384 = vmatpush1.msra.mxu0 %v1379
        %1385 = vmatprep.subr.mxu0 0.0
        %1386 = vmatpush1.msra.mxu0 %v1380
        %1387 = vmatprep.subr.mxu0 0.0
        %1388 = vmatpush1.msra.mxu0 %v1381
        %1389 = vmatprep.subr.mxu0 0.0
        %1390 = vmatpush1.msra.mxu0 %v1382
        %1391 = vmatprep.subr.mxu0 0.0
        %1392 = vmatpush1.msra.mxu0 0.0
        %1393 = vmatprep.subr.mxu0 0.0
        %1394 = vmatpush1.msra.mxu0 0.0
        %1395 = vmatprep.subr.mxu0 0.0
        %1396 = vmatpush1.msra.mxu0 0.0
        %1397 = vmatprep.subr.mxu0 0.0
        %1398 = vmatpush1.msra.mxu0 0.0
        %1399 = vmatprep.subr.mxu0 0.0
        %1400 = vmatpush1.msra.mxu0 0.0
        %1401 = vmatprep.subr.mxu0 0.0
        %1402 = vmatpush1.msra.mxu0 0.0
        %1403 = vmatprep.subr.mxu0 0.0
        %1404 = vmatpush1.msra.mxu0 0.0
        %1405 = vmatprep.subr.mxu0 0.0
        %1406 = vmatpush1.msra.mxu0 0.0
        %1407 = vmatprep.subr.mxu0 0.0
        %1408 = vmatpush1.msra.mxu0 0.0
        %1409 = vmatprep.subr.mxu0 0.0
        %1410 = vmatpush1.msra.mxu0 0.0
        %1411 = vmatprep.subr.mxu0 0.0
        %1412 = vmatpush1.msra.mxu0 0.0
        %1413 = vmatprep.subr.mxu0 0.0
        %1414 = vmatpush1.msra.mxu0 0.0
        %1415 = vmatprep.subr.mxu0 0.0
        %1416 = vmatpush1.msra.mxu0 0.0
        %1417 = vmatprep.subr.mxu0 0.0
        %1418 = vmatpush1.msra.mxu0 0.0
        %1419 = vmatprep.subr.mxu0 0.0
        %1420 = vmatpush1.msra.mxu0 0.0
        %1421 = vmatprep.subr.mxu0 0.0
        %1422 = vmatpush1.msra.mxu0 0.0
        %1423 = vmatprep.subr.mxu0 0.0
        %1424 = vmatpush1.msra.mxu0 0.0
        %1425 = vmatprep.subr.mxu0 0.0
        %1426 = vmatpush1.msra.mxu0 0.0
        %1427 = vmatprep.subr.mxu0 0.0
        %1428 = vmatpush1.msra.mxu0 0.0
        %1429 = vmatprep.subr.mxu0 0.0
        %1430 = vmatpush1.msra.mxu0 0.0
        %1431 = vmatprep.subr.mxu0 0.0
        %1432 = vmatpush1.msra.mxu0 0.0
        %1433 = vmatprep.subr.mxu0 0.0
        %1434 = vmatpush1.msra.mxu0 0.0
        %1435 = vmatprep.subr.mxu0 0.0
        %1436 = vmatpush1.msra.mxu0 0.0
        %1437 = vmatprep.subr.mxu0 0.0
        %1438 = vmatpush1.msra.mxu0 0.0
        %1439 = vmatprep.subr.mxu0 0.0
        %1440 = vmatpush1.msra.mxu0 0.0
        %1441 = vmatprep.subr.mxu0 0.0
        %1442 = vmatpush1.msra.mxu0 0.0
        %1443 = vmatprep.subr.mxu0 0.0
        %1444 = vmatpush1.msra.mxu0 0.0
        %1445 = vmatprep.subr.mxu0 0.0
        %1446 = vmatpush1.msra.mxu0 0.0
        %1447 = vmatprep.mubr.f32.mxu0 0.0
        %1448 = vmatmul.mubr.f32.gmra.mrb[0].mxu0 %v230
        %v1449 = vpop.f32.mrb[0].mxu0
        %v1450 = vadd.f32 0.0, %v1449
        %v1451 = vpop.f32.mrb[0].mxu0
        %1452 = vmatprep.mubr.f32.mxu0 0.0
        %1453 = vmatmul.mubr.f32.gmra.mrb[0].mxu0 %v233
        %v1454 = vpop.f32.mrb[0].mxu0
        %v1455 = vadd.f32 0.0, %v1454
        %v1456 = vpop.f32.mrb[0].mxu0
        %1457 = vdwg.mxu0
        %v1459 = vsel %vm228, %v1450, 0
        %v1462 = vsel %vm228, %v1455, 0
        %1464 = vmatprep.subr.mxu0 0.0
        %1465 = vmatpush1.msra.mxu0 %v220
        %1466 = vmatprep.subr.mxu0 0.0
        %1467 = vmatpush1.msra.mxu0 %v221
        %1468 = vmatprep.subr.mxu0 0.0
        %1469 = vmatpush1.msra.mxu0 %v222
        %1470 = vmatprep.subr.mxu0 0.0
        %1471 = vmatpush1.msra.mxu0 %v223
        %1472 = vmatprep.subr.mxu0 0.0
        %1473 = vmatpush1.msra.mxu0 0.0
        %1474 = vmatprep.subr.mxu0 0.0
        %1475 = vmatpush1.msra.mxu0 0.0
        %1476 = vmatprep.subr.mxu0 0.0
        %1477 = vmatpush1.msra.mxu0 0.0
        %1478 = vmatprep.subr.mxu0 0.0
        %1479 = vmatpush1.msra.mxu0 0.0
        %1480 = vmatprep.subr.mxu0 0.0
        %1481 = vmatpush1.msra.mxu0 0.0
        %1482 = vmatprep.subr.mxu0 0.0
        %1483 = vmatpush1.msra.mxu0 0.0
        %1484 = vmatprep.subr.mxu0 0.0
        %1485 = vmatpush1.msra.mxu0 0.0
        %1486 = vmatprep.subr.mxu0 0.0
        %1487 = vmatpush1.msra.mxu0 0.0
        %1488 = vmatprep.subr.mxu0 0.0
        %1489 = vmatpush1.msra.mxu0 0.0
        %1490 = vmatprep.subr.mxu0 0.0
        %1491 = vmatpush1.msra.mxu0 0.0
        %1492 = vmatprep.subr.mxu0 0.0
        %1493 = vmatpush1.msra.mxu0 0.0
        %1494 = vmatprep.subr.mxu0 0.0
        %1495 = vmatpush1.msra.mxu0 0.0
        %1496 = vmatprep.subr.mxu0 0.0
        %1497 = vmatpush1.msra.mxu0 0.0
        %1498 = vmatprep.subr.mxu0 0.0
        %1499 = vmatpush1.msra.mxu0 0.0
        %1500 = vmatprep.subr.mxu0 0.0
        %1501 = vmatpush1.msra.mxu0 0.0
        %1502 = vmatprep.subr.mxu0 0.0
        %1503 = vmatpush1.msra.mxu0 0.0
        %1504 = vmatprep.subr.mxu0 0.0
        %1505 = vmatpush1.msra.mxu0 0.0
        %1506 = vmatprep.subr.mxu0 0.0
        %1507 = vmatpush1.msra.mxu0 0.0
        %1508 = vmatprep.subr.mxu0 0.0
        %1509 = vmatpush1.msra.mxu0 0.0
        %1510 = vmatprep.subr.mxu0 0.0
        %1511 = vmatpush1.msra.mxu0 0.0
        %1512 = vmatprep.subr.mxu0 0.0
        %1513 = vmatpush1.msra.mxu0 0.0
        %1514 = vmatprep.subr.mxu0 0.0
        %1515 = vmatpush1.msra.mxu0 0.0
        %1516 = vmatprep.subr.mxu0 0.0
        %1517 = vmatpush1.msra.mxu0 0.0
        %1518 = vmatprep.subr.mxu0 0.0
        %1519 = vmatpush1.msra.mxu0 0.0
        %1520 = vmatprep.subr.mxu0 0.0
        %1521 = vmatpush1.msra.mxu0 0.0
        %1522 = vmatprep.subr.mxu0 0.0
        %1523 = vmatpush1.msra.mxu0 0.0
        %1524 = vmatprep.subr.mxu0 0.0
        %1525 = vmatpush1.msra.mxu0 0.0
        %1526 = vmatprep.subr.mxu0 0.0
        %1527 = vmatpush1.msra.mxu0 0.0
        %1528 = vmatprep.mubr.f32.mxu0 0.0
        %1529 = vmatmul.mubr.f32.gmra.mrb[0].mxu0 %v1459
        %v1530 = vpop.f32.mrb[0].mxu0
        %v1531 = vadd.f32 0.0, %v1530
        %v1532 = vpop.f32.mrb[0].mxu0
        %1533 = vmatprep.mubr.f32.mxu0 0.0
        %1534 = vmatmul.mubr.f32.gmra.mrb[0].mxu0 %v1462
        %v1535 = vpop.f32.mrb[0].mxu0
        %v1536 = vadd.f32 0.0, %v1535
        %v1537 = vpop.f32.mrb[0].mxu0
        %1538 = vdwg.mxu0
        %s1539 = scalar_lea.vmem %s217, 112 [#allocation8]
        %1540 = vst.msk [vmem:[%s1539] sm:$0xff] %vm391, %v1531
        %1541 = vst.msk [vmem:[%s1539 + $0x8] sm:$0xff] %vm391, %v1536
        %s1542 = sand.u32 %s97, 1
        %s1543 = scalar_lea.sflag [#allocation4], %s1542
        %s1544 = sand.u32 %s97, 1
        %s1545 = smul.addr %s1544, 128
        %s1546 = scalar_lea.vmem [#allocation8], %s1545
        // Predicated region
        $region45: #{densenet2d_down_block.3} parent=31 // pred_check
          %p1547 = pneg %p107
        $region46: #{densenet2d_down_block.3} parent=31 // pred_check_branch
          %1549 = sbr.rel (%p1547) target = $region48
        $region47: #{densenet2d_down_block.3} parent=31 // pred_region
          %s1551 = ssub.s32 2048, 2048
          %1552 = vsyncadd %s1543, %s1551
          %s1553 = smul.addr %s21, 16
          %s1554 = smul.addr %s1553, 128
          %s1555 = scalar_lea.hbm %s3, %s1554
          %s1556 = sshll.u32 %s1546, 4
          %s1557 = int_to_ptr.vmem [resolvable:$true] %s1556
          %1562 = dma.vmem_to_hbm [thread:$0]  %s1557, 2048, %s1555, %s1543, 128, 128, 8
        $region48: #{densenet2d_down_block.3} parent=31 // pred_fallthru
          _
      $region32: #{densenet2d_down_block.3} parent=5 // pred_fallthru
        _
      %p1563 = scmp.le.s32.totalorder 2, %s16
      // Predicated region
      $region49: #{densenet2d_down_block.3} parent=5 // pred_check
        %p1564 = pneg %p1563
      $region50: #{densenet2d_down_block.3} parent=5 // pred_check_branch
        %1566 = sbr.rel (%p1564) target = $region52
      $region51: #{densenet2d_down_block.3} parent=5 // pred_region
        %s1567 = ssub.s32 %s16, 2
        // Predicated region
        $region53: #{densenet2d_down_block.3} parent=51 // pred_check
          %p1568 = pneg %p113
        $region54: #{densenet2d_down_block.3} parent=51 // pred_check_branch
          %1570 = sbr.rel (%p1568) target = $region56
        $region55: #{densenet2d_down_block.3} parent=51 // pred_region
          %s1571 = sand.u32 %s98, 1
          %s1572 = scalar_lea.sflag [#allocation4], %s1571
          %s1573 = sand.u32 %s98, 1
          %s1574 = smul.addr %s1573, 128
          %s1575 = scalar_lea.vmem [#allocation8], %s1574
          %1576 = dma.done %s1572, 2048
        $region56: #{densenet2d_down_block.3} parent=51 // pred_fallthru
          _
      $region52: #{densenet2d_down_block.3} parent=5 // pred_fallthru
        _
    $region6: #{densenet2d_down_block.3} parent=1 // loop_footer
      %s20 = sadd.s32 1, %s16
    $region7: #{densenet2d_down_block.3} parent=1 // loop_footer_branch
      %15 = sbr.rel target = $region3
    $region8: #{densenet2d_down_block.3} parent=1 // loop_exit
      _
    %1577 = vsyncpa [#allocation3], 1
    %s1578 = scalar_lea.sflag [#allocation3], 1
    %1579 = vsyncpa %s1578, 1
    %1580 = vsyncpa [#allocation6], 1
    %1581 = vsyncpa [#allocation4], 1
    %s1582 = scalar_lea.sflag [#allocation4], 1
    %1583 = vsyncpa %s1582, 1

// kernel: densenet2d_down_block.4
$region0: #{densenet2d_down_block.4}
  #allocation0 [shape = 'u32[]', space=smem, size = 0x4, offset = 0x4, fixed_abs, tag = 'smem constant byte address 0x4 - core index']
  #allocation1 [shape = 'u32[144,128]{1,0:T(1,128)}', space=vmem, size = 0x12000, scoped, tag = 'internal scratch']
  #allocation2 [shape = 'f32[72,256]{1,0:T(8,128)}', space=vmem, size = 0x12000, scoped, tag = 'scratch operand']
  %s0 = inlined_call_operand.hbm [shape: f32[2,8,256], index: 0, kind: input, shape index: {}]
  %s1 = inlined_call_operand.hbm [shape: f32[9,1,256], index: 1, kind: input, shape index: {}]
  %s2 = inlined_call_operand.hbm [shape: bf16[8,72], index: 2, kind: input, shape index: {}]
  %s3 = inlined_call_operand.hbm [shape: f32[8,1], index: 3, kind: input, shape index: {}]
  %s4 = inlined_call_operand.hbm [shape: bf16[8,8], index: 4, kind: input, shape index: {}]
  %s5 = inlined_call_operand.hbm [shape: bf16[8,8], index: 5, kind: input, shape index: {}]
  %s6 = inlined_call_operand.hbm [shape: f32[8,1], index: 6, kind: input, shape index: {}]
  %s7 = inlined_call_operand.hbm [shape: bf16[8,72], index: 7, kind: input, shape index: {}]
  %s8 = inlined_call_operand.hbm [shape: f32[8,1], index: 8, kind: input, shape index: {}]
  %s9 = inlined_call_operand.hbm [shape: bf16[8,8], index: 9, kind: input, shape index: {}]
  %s10 = inlined_call_operand.hbm [shape: bf16[8,8], index: 10, kind: input, shape index: {}]
  %s11 = inlined_call_operand.hbm [shape: bf16[8,8], index: 11, kind: input, shape index: {}]
  %s12 = inlined_call_operand.hbm [shape: f32[8,1], index: 12, kind: input, shape index: {}]
  %s13 = inlined_call_operand.hbm [shape: bf16[8,72], index: 13, kind: input, shape index: {}]
  %s14 = inlined_call_operand.hbm [shape: f32[8,1], index: 14, kind: input, shape index: {}]
  %s15 = inlined_call_operand.hbm [shape: f32[2,8,256], index: 15, kind: output, shape index: {0}]
  %s16 = inlined_call_operand.hbm [shape: f32[2,8,1], index: 16, kind: output, shape index: {1}]
  %s17 = inlined_call_operand.hbm [shape: f32[2,8,1], index: 17, kind: output, shape index: {2}]
  %18 = xla_tuple %s15, %s16, %s17
  %s19 = sld [smem:[#allocation0]]
  $region169: #{densenet2d_down_block.4} parent=0
    _
  %s21 = ssub.s32 1, %s19
  %s22 = scalar_select 0, %s21, %s19
  $region1: #{densenet2d_down_block.4} parent=0
    #allocation3 [shape = 'u8[16384]{0}', space=vmem, size = 0x4000, scoped, tag = 'input window, operand 0']
    #allocation4 [shape = 's32[2]{0}', space=sflag, size = 0x8, scoped, tag = 'scoped memory for densenet2d_down_block.4']
    #allocation5 [shape = 's32[2]{0}', space=sflag, size = 0x8, scoped, tag = 'scoped memory for densenet2d_down_block.4']
    #allocation6 [shape = 'u8[9216]{0}', space=vmem, size = 0x2400, scoped, tag = 'input window, operand 1, single buffered']
    #allocation7 [shape = 's32[1]{0}', space=sflag, size = 0x4, scoped, tag = 'scoped memory for densenet2d_down_block.4']
    #allocation8 [shape = 'u8[2048]{0}', space=vmem, size = 0x800, scoped, tag = 'input window, operand 2, single buffered']
    #allocation9 [shape = 'u8[4096]{0}', space=vmem, size = 0x1000, scoped, tag = 'input window, operand 3, single buffered']
    #allocation10 [shape = 's32[1]{0}', space=sflag, size = 0x4, scoped, tag = 'scoped memory for densenet2d_down_block.4']
    #allocation11 [shape = 'u8[2048]{0}', space=vmem, size = 0x800, scoped, tag = 'input window, operand 4, single buffered']
    #allocation12 [shape = 'u8[2048]{0}', space=vmem, size = 0x800, scoped, tag = 'input window, operand 5, single buffered']
    #allocation13 [shape = 's32[1]{0}', space=sflag, size = 0x4, scoped, tag = 'scoped memory for densenet2d_down_block.4']
    #allocation14 [shape = 'u8[4096]{0}', space=vmem, size = 0x1000, scoped, tag = 'input window, operand 6, single buffered']
    #allocation15 [shape = 'u8[2048]{0}', space=vmem, size = 0x800, scoped, tag = 'input window, operand 7, single buffered']
    #allocation16 [shape = 's32[1]{0}', space=sflag, size = 0x4, scoped, tag = 'scoped memory for densenet2d_down_block.4']
    #allocation17 [shape = 'u8[4096]{0}', space=vmem, size = 0x1000, scoped, tag = 'input window, operand 8, single buffered']
    #allocation18 [shape = 'u8[2048]{0}', space=vmem, size = 0x800, scoped, tag = 'input window, operand 9, single buffered']
    #allocation19 [shape = 's32[1]{0}', space=sflag, size = 0x4, scoped, tag = 'scoped memory for densenet2d_down_block.4']
    #allocation20 [shape = 'u8[2048]{0}', space=vmem, size = 0x800, scoped, tag = 'input window, operand 10, single buffered']
    #allocation21 [shape = 'u8[2048]{0}', space=vmem, size = 0x800, scoped, tag = 'input window, operand 11, single buffered']
    #allocation22 [shape = 's32[1]{0}', space=sflag, size = 0x4, scoped, tag = 'scoped memory for densenet2d_down_block.4']
    #allocation23 [shape = 'u8[4096]{0}', space=vmem, size = 0x1000, scoped, tag = 'input window, operand 12, single buffered']
    #allocation24 [shape = 'u8[2048]{0}', space=vmem, size = 0x800, scoped, tag = 'input window, operand 13, single buffered']
    #allocation25 [shape = 's32[1]{0}', space=sflag, size = 0x4, scoped, tag = 'scoped memory for densenet2d_down_block.4']
    #allocation26 [shape = 'u8[4096]{0}', space=vmem, size = 0x1000, scoped, tag = 'input window, operand 14, single buffered']
    #allocation27 [shape = 'u8[16384]{0}', space=vmem, size = 0x4000, scoped, tag = 'output window, operand 0']
    #allocation28 [shape = 'u8[8192]{0}', space=vmem, size = 0x2000, scoped, tag = 'output window, operand 1']
    #allocation29 [shape = 's32[2]{0}', space=sflag, size = 0x8, scoped, tag = 'scoped memory for densenet2d_down_block.4']
    #allocation30 [shape = 'u8[8192]{0}', space=vmem, size = 0x2000, scoped, tag = 'output window, operand 2']
    %23 = vsyncpa [#allocation4], 0
    %s24 = scalar_lea.sflag [#allocation4], 1
    %25 = vsyncpa %s24, 0
    %26 = vsyncpa [#allocation7], 0
    %27 = vsyncpa [#allocation10], 0
    %28 = vsyncpa [#allocation13], 0
    %29 = vsyncpa [#allocation16], 0
    %30 = vsyncpa [#allocation19], 0
    %31 = vsyncpa [#allocation22], 0
    %32 = vsyncpa [#allocation25], 0
    %33 = vsyncpa [#allocation5], 0
    %s34 = scalar_lea.sflag [#allocation5], 1
    %35 = vsyncpa %s34, 0
    %36 = vsyncpa [#allocation29], 0
    %s37 = scalar_lea.sflag [#allocation29], 1
    %38 = vsyncpa %s37, 0
    loop: start=0, step=1, limit=4
    $region2: #{densenet2d_down_block.4} parent=1 // loop_pre_header
      _
    $region3: #{densenet2d_down_block.4} parent=1 // loop_header
      %s40 = sphi 0, %s44
      %p41 = scmp.ge.s32.totalorder %s40, 4
      %s50 = sphi 0, %s52
      %s53 = sphi 0, %s50
      %s54 = sphi 0, %s53
      %s70 = sphi 0, %s54
      %s74 = sphi 0, %s74
      %s76 = sphi 0, %s74
      %s77 = sphi 0, %s76
      %s91 = sphi 0, %s77
      %s95 = sphi 0, %s95
      %s97 = sphi 0, %s95
      %s98 = sphi 0, %s97
      %s112 = sphi 0, %s98
      %s116 = sphi 0, %s116
      %s118 = sphi 0, %s116
      %s119 = sphi 0, %s118
      %s133 = sphi 0, %s119
      %s137 = sphi 0, %s137
      %s139 = sphi 0, %s137
      %s140 = sphi 0, %s139
      %s154 = sphi 0, %s140
      %s158 = sphi 0, %s158
      %s160 = sphi 0, %s158
      %s161 = sphi 0, %s160
      %s175 = sphi 0, %s161
      %s179 = sphi 0, %s179
      %s181 = sphi 0, %s179
      %s182 = sphi 0, %s181
      %s196 = sphi 0, %s182
      %s200 = sphi 0, %s200
      %s202 = sphi 0, %s200
      %s203 = sphi 0, %s202
      %s217 = sphi 0, %s203
      %s221 = sphi 0, %s221
      %s223 = sphi 0, %s221
      %s224 = sphi 0, %s223
      %s238 = sphi 0, %s224
      %s242 = sphi 0, %s242
      %s244 = sphi 0, %s242
      %s245 = sphi 0, %s244
      %s259 = sphi 0, %s245
      %s263 = sphi 0, %s263
      %s265 = sphi 0, %s263
      %s266 = sphi 0, %s265
      %s280 = sphi 0, %s266
      %s284 = sphi 0, %s284
      %s286 = sphi 0, %s284
      %s287 = sphi 0, %s286
      %s301 = sphi 0, %s287
      %s305 = sphi 0, %s305
      %s307 = sphi 0, %s305
      %s308 = sphi 0, %s307
      %s322 = sphi 0, %s308
      %s326 = sphi 0, %s326
      %s328 = sphi 0, %s326
      %s329 = sphi 0, %s328
      %s343 = sphi 0, %s329
      %s347 = sphi 0, %s347
      %s349 = sphi 0, %s347
      %s350 = sphi 0, %s349
      %s364 = sphi 0, %s350
      %s370 = sphi 0, %s372
      %s373 = sphi 0, %s370
      %s374 = sphi 0, %s373
      %s390 = sphi 0, %s374
      %s396 = sphi 0, %s398
      %s399 = sphi 0, %s396
      %s400 = sphi 0, %s399
      %s416 = sphi 0, %s400
      %s422 = sphi 0, %s424
      %s425 = sphi 0, %s422
      %s426 = sphi 0, %s425
      %s442 = sphi 0, %s426
    $region4: #{densenet2d_down_block.4} parent=1 // loop_header_branch
      %43 = sbr.rel (%p41) target = $region8
    $region5: #{densenet2d_down_block.4} parent=1 // loop_body
      %s45 = ssub.s32 %s40, 1
      %s46 = ssub.s32 %s40, 2
      %s47 = sadd.s32 %s40, 1
      %s48 = ssub.s32 %s40, %s47
      %p49 = scmp.eq.s32.totalorder %s48, 0
      %s51 = sadd.s32 %s50, 1
      %s52 = scalar_select %p49, %s50, %s51
      %p55 = pneg %p49
      %p56 = scmp.eq.s32.totalorder %s40, 1
      %p57 = por %p55, %p56
      %p58 = scmp.ne.s32.totalorder %s50, %s53
      %p59 = scmp.eq.s32.totalorder %s40, 0
      %p60 = por %p58, %p59
      %p61 = scmp.ne.s32.totalorder %s50, %s53
      %p62 = scmp.eq.s32.totalorder %s45, 1
      %p63 = por %p61, %p62
      %p64 = scmp.ne.s32.totalorder %s53, %s54
      %p65 = scmp.eq.s32.totalorder %s45, 0
      %p66 = por %p64, %p65
      %p67 = scmp.ne.s32.totalorder %s53, %s54
      %p68 = scmp.eq.s32.totalorder %s46, 1
      %p69 = por %p67, %p68
      %p71 = scmp.ne.s32.totalorder %s54, %s70
      %p72 = scmp.eq.s32.totalorder %s46, 0
      %p73 = por %p71, %p72
      %s75 = sadd.s32 %s74, 1
      %p78 = scmp.eq.s32.totalorder %s40, 1
      %p79 = scmp.ne.s32.totalorder %s74, %s76
      %p80 = scmp.eq.s32.totalorder %s40, 0
      %p81 = por %p79, %p80
      %p82 = scmp.ne.s32.totalorder %s74, %s76
      %p83 = scmp.eq.s32.totalorder %s45, 1
      %p84 = por %p82, %p83
      %p85 = scmp.ne.s32.totalorder %s76, %s77
      %p86 = scmp.eq.s32.totalorder %s45, 0
      %p87 = por %p85, %p86
      %p88 = scmp.ne.s32.totalorder %s76, %s77
      %p89 = scmp.eq.s32.totalorder %s46, 1
      %p90 = por %p88, %p89
      %p92 = scmp.ne.s32.totalorder %s77, %s91
      %p93 = scmp.eq.s32.totalorder %s46, 0
      %p94 = por %p92, %p93
      %s96 = sadd.s32 %s95, 1
      %p99 = scmp.eq.s32.totalorder %s40, 1
      %p100 = scmp.ne.s32.totalorder %s95, %s97
      %p101 = scmp.eq.s32.totalorder %s40, 0
      %p102 = por %p100, %p101
      %p103 = scmp.ne.s32.totalorder %s95, %s97
      %p104 = scmp.eq.s32.totalorder %s45, 1
      %p105 = por %p103, %p104
      %p106 = scmp.ne.s32.totalorder %s97, %s98
      %p107 = scmp.eq.s32.totalorder %s45, 0
      %p108 = por %p106, %p107
      %p109 = scmp.ne.s32.totalorder %s97, %s98
      %p110 = scmp.eq.s32.totalorder %s46, 1
      %p111 = por %p109, %p110
      %p113 = scmp.ne.s32.totalorder %s98, %s112
      %p114 = scmp.eq.s32.totalorder %s46, 0
      %p115 = por %p113, %p114
      %s117 = sadd.s32 %s116, 1
      %p120 = scmp.eq.s32.totalorder %s40, 1
      %p121 = scmp.ne.s32.totalorder %s116, %s118
      %p122 = scmp.eq.s32.totalorder %s40, 0
      %p123 = por %p121, %p122
      %p124 = scmp.ne.s32.totalorder %s116, %s118
      %p125 = scmp.eq.s32.totalorder %s45, 1
      %p126 = por %p124, %p125
      %p127 = scmp.ne.s32.totalorder %s118, %s119
      %p128 = scmp.eq.s32.totalorder %s45, 0
      %p129 = por %p127, %p128
      %p130 = scmp.ne.s32.totalorder %s118, %s119
      %p131 = scmp.eq.s32.totalorder %s46, 1
      %p132 = por %p130, %p131
      %p134 = scmp.ne.s32.totalorder %s119, %s133
      %p135 = scmp.eq.s32.totalorder %s46, 0
      %p136 = por %p134, %p135
      %s138 = sadd.s32 %s137, 1
      %p141 = scmp.eq.s32.totalorder %s40, 1
      %p142 = scmp.ne.s32.totalorder %s137, %s139
      %p143 = scmp.eq.s32.totalorder %s40, 0
      %p144 = por %p142, %p143
      %p145 = scmp.ne.s32.totalorder %s137, %s139
      %p146 = scmp.eq.s32.totalorder %s45, 1
      %p147 = por %p145, %p146
      %p148 = scmp.ne.s32.totalorder %s139, %s140
      %p149 = scmp.eq.s32.totalorder %s45, 0
      %p150 = por %p148, %p149
      %p151 = scmp.ne.s32.totalorder %s139, %s140
      %p152 = scmp.eq.s32.totalorder %s46, 1
      %p153 = por %p151, %p152
      %p155 = scmp.ne.s32.totalorder %s140, %s154
      %p156 = scmp.eq.s32.totalorder %s46, 0
      %p157 = por %p155, %p156
      %s159 = sadd.s32 %s158, 1
      %p162 = scmp.eq.s32.totalorder %s40, 1
      %p163 = scmp.ne.s32.totalorder %s158, %s160
      %p164 = scmp.eq.s32.totalorder %s40, 0
      %p165 = por %p163, %p164
      %p166 = scmp.ne.s32.totalorder %s158, %s160
      %p167 = scmp.eq.s32.totalorder %s45, 1
      %p168 = por %p166, %p167
      %p169 = scmp.ne.s32.totalorder %s160, %s161
      %p170 = scmp.eq.s32.totalorder %s45, 0
      %p171 = por %p169, %p170
      %p172 = scmp.ne.s32.totalorder %s160, %s161
      %p173 = scmp.eq.s32.totalorder %s46, 1
      %p174 = por %p172, %p173
      %p176 = scmp.ne.s32.totalorder %s161, %s175
      %p177 = scmp.eq.s32.totalorder %s46, 0
      %p178 = por %p176, %p177
      %s180 = sadd.s32 %s179, 1
      %p183 = scmp.eq.s32.totalorder %s40, 1
      %p184 = scmp.ne.s32.totalorder %s179, %s181
      %p185 = scmp.eq.s32.totalorder %s40, 0
      %p186 = por %p184, %p185
      %p187 = scmp.ne.s32.totalorder %s179, %s181
      %p188 = scmp.eq.s32.totalorder %s45, 1
      %p189 = por %p187, %p188
      %p190 = scmp.ne.s32.totalorder %s181, %s182
      %p191 = scmp.eq.s32.totalorder %s45, 0
      %p192 = por %p190, %p191
      %p193 = scmp.ne.s32.totalorder %s181, %s182
      %p194 = scmp.eq.s32.totalorder %s46, 1
      %p195 = por %p193, %p194
      %p197 = scmp.ne.s32.totalorder %s182, %s196
      %p198 = scmp.eq.s32.totalorder %s46, 0
      %p199 = por %p197, %p198
      %s201 = sadd.s32 %s200, 1
      %p204 = scmp.eq.s32.totalorder %s40, 1
      %p205 = scmp.ne.s32.totalorder %s200, %s202
      %p206 = scmp.eq.s32.totalorder %s40, 0
      %p207 = por %p205, %p206
      %p208 = scmp.ne.s32.totalorder %s200, %s202
      %p209 = scmp.eq.s32.totalorder %s45, 1
      %p210 = por %p208, %p209
      %p211 = scmp.ne.s32.totalorder %s202, %s203
      %p212 = scmp.eq.s32.totalorder %s45, 0
      %p213 = por %p211, %p212
      %p214 = scmp.ne.s32.totalorder %s202, %s203
      %p215 = scmp.eq.s32.totalorder %s46, 1
      %p216 = por %p214, %p215
      %p218 = scmp.ne.s32.totalorder %s203, %s217
      %p219 = scmp.eq.s32.totalorder %s46, 0
      %p220 = por %p218, %p219
      %s222 = sadd.s32 %s221, 1
      %p225 = scmp.eq.s32.totalorder %s40, 1
      %p226 = scmp.ne.s32.totalorder %s221, %s223
      %p227 = scmp.eq.s32.totalorder %s40, 0
      %p228 = por %p226, %p227
      %p229 = scmp.ne.s32.totalorder %s221, %s223
      %p230 = scmp.eq.s32.totalorder %s45, 1
      %p231 = por %p229, %p230
      %p232 = scmp.ne.s32.totalorder %s223, %s224
      %p233 = scmp.eq.s32.totalorder %s45, 0
      %p234 = por %p232, %p233
      %p235 = scmp.ne.s32.totalorder %s223, %s224
      %p236 = scmp.eq.s32.totalorder %s46, 1
      %p237 = por %p235, %p236
      %p239 = scmp.ne.s32.totalorder %s224, %s238
      %p240 = scmp.eq.s32.totalorder %s46, 0
      %p241 = por %p239, %p240
      %s243 = sadd.s32 %s242, 1
      %p246 = scmp.eq.s32.totalorder %s40, 1
      %p247 = scmp.ne.s32.totalorder %s242, %s244
      %p248 = scmp.eq.s32.totalorder %s40, 0
      %p249 = por %p247, %p248
      %p250 = scmp.ne.s32.totalorder %s242, %s244
      %p251 = scmp.eq.s32.totalorder %s45, 1
      %p252 = por %p250, %p251
      %p253 = scmp.ne.s32.totalorder %s244, %s245
      %p254 = scmp.eq.s32.totalorder %s45, 0
      %p255 = por %p253, %p254
      %p256 = scmp.ne.s32.totalorder %s244, %s245
      %p257 = scmp.eq.s32.totalorder %s46, 1
      %p258 = por %p256, %p257
      %p260 = scmp.ne.s32.totalorder %s245, %s259
      %p261 = scmp.eq.s32.totalorder %s46, 0
      %p262 = por %p260, %p261
      %s264 = sadd.s32 %s263, 1
      %p267 = scmp.eq.s32.totalorder %s40, 1
      %p268 = scmp.ne.s32.totalorder %s263, %s265
      %p269 = scmp.eq.s32.totalorder %s40, 0
      %p270 = por %p268, %p269
      %p271 = scmp.ne.s32.totalorder %s263, %s265
      %p272 = scmp.eq.s32.totalorder %s45, 1
      %p273 = por %p271, %p272
      %p274 = scmp.ne.s32.totalorder %s265, %s266
      %p275 = scmp.eq.s32.totalorder %s45, 0
      %p276 = por %p274, %p275
      %p277 = scmp.ne.s32.totalorder %s265, %s266
      %p278 = scmp.eq.s32.totalorder %s46, 1
      %p279 = por %p277, %p278
      %p281 = scmp.ne.s32.totalorder %s266, %s280
      %p282 = scmp.eq.s32.totalorder %s46, 0
      %p283 = por %p281, %p282
      %s285 = sadd.s32 %s284, 1
      %p288 = scmp.eq.s32.totalorder %s40, 1
      %p289 = scmp.ne.s32.totalorder %s284, %s286
      %p290 = scmp.eq.s32.totalorder %s40, 0
      %p291 = por %p289, %p290
      %p292 = scmp.ne.s32.totalorder %s284, %s286
      %p293 = scmp.eq.s32.totalorder %s45, 1
      %p294 = por %p292, %p293
      %p295 = scmp.ne.s32.totalorder %s286, %s287
      %p296 = scmp.eq.s32.totalorder %s45, 0
      %p297 = por %p295, %p296
      %p298 = scmp.ne.s32.totalorder %s286, %s287
      %p299 = scmp.eq.s32.totalorder %s46, 1
      %p300 = por %p298, %p299
      %p302 = scmp.ne.s32.totalorder %s287, %s301
      %p303 = scmp.eq.s32.totalorder %s46, 0
      %p304 = por %p302, %p303
      %s306 = sadd.s32 %s305, 1
      %p309 = scmp.eq.s32.totalorder %s40, 1
      %p310 = scmp.ne.s32.totalorder %s305, %s307
      %p311 = scmp.eq.s32.totalorder %s40, 0
      %p312 = por %p310, %p311
      %p313 = scmp.ne.s32.totalorder %s305, %s307
      %p314 = scmp.eq.s32.totalorder %s45, 1
      %p315 = por %p313, %p314
      %p316 = scmp.ne.s32.totalorder %s307, %s308
      %p317 = scmp.eq.s32.totalorder %s45, 0
      %p318 = por %p316, %p317
      %p319 = scmp.ne.s32.totalorder %s307, %s308
      %p320 = scmp.eq.s32.totalorder %s46, 1
      %p321 = por %p319, %p320
      %p323 = scmp.ne.s32.totalorder %s308, %s322
      %p324 = scmp.eq.s32.totalorder %s46, 0
      %p325 = por %p323, %p324
      %s327 = sadd.s32 %s326, 1
      %p330 = scmp.eq.s32.totalorder %s40, 1
      %p331 = scmp.ne.s32.totalorder %s326, %s328
      %p332 = scmp.eq.s32.totalorder %s40, 0
      %p333 = por %p331, %p332
      %p334 = scmp.ne.s32.totalorder %s326, %s328
      %p335 = scmp.eq.s32.totalorder %s45, 1
      %p336 = por %p334, %p335
      %p337 = scmp.ne.s32.totalorder %s328, %s329
      %p338 = scmp.eq.s32.totalorder %s45, 0
      %p339 = por %p337, %p338
      %p340 = scmp.ne.s32.totalorder %s328, %s329
      %p341 = scmp.eq.s32.totalorder %s46, 1
      %p342 = por %p340, %p341
      %p344 = scmp.ne.s32.totalorder %s329, %s343
      %p345 = scmp.eq.s32.totalorder %s46, 0
      %p346 = por %p344, %p345
      %s348 = sadd.s32 %s347, 1
      %p351 = scmp.eq.s32.totalorder %s40, 1
      %p352 = scmp.ne.s32.totalorder %s347, %s349
      %p353 = scmp.eq.s32.totalorder %s40, 0
      %p354 = por %p352, %p353
      %p355 = scmp.ne.s32.totalorder %s347, %s349
      %p356 = scmp.eq.s32.totalorder %s45, 1
      %p357 = por %p355, %p356
      %p358 = scmp.ne.s32.totalorder %s349, %s350
      %p359 = scmp.eq.s32.totalorder %s45, 0
      %p360 = por %p358, %p359
      %p361 = scmp.ne.s32.totalorder %s349, %s350
      %p362 = scmp.eq.s32.totalorder %s46, 1
      %p363 = por %p361, %p362
      %p365 = scmp.ne.s32.totalorder %s350, %s364
      %p366 = scmp.eq.s32.totalorder %s46, 0
      %p367 = por %p365, %p366
      %s368 = ssub.s32 %s40, %s47
      %p369 = scmp.eq.s32.totalorder %s368, 0
      %s371 = sadd.s32 %s370, 1
      %s372 = scalar_select %p369, %s370, %s371
      %p375 = pneg %p369
      %p376 = scmp.eq.s32.totalorder %s40, 1
      %p377 = por %p375, %p376
      %p378 = scmp.ne.s32.totalorder %s370, %s373
      %p379 = scmp.eq.s32.totalorder %s40, 0
      %p380 = por %p378, %p379
      %p381 = scmp.ne.s32.totalorder %s370, %s373
      %p382 = scmp.eq.s32.totalorder %s45, 1
      %p383 = por %p381, %p382
      %p384 = scmp.ne.s32.totalorder %s373, %s374
      %p385 = scmp.eq.s32.totalorder %s45, 0
      %p386 = por %p384, %p385
      %p387 = scmp.ne.s32.totalorder %s373, %s374
      %p388 = scmp.eq.s32.totalorder %s46, 1
      %p389 = por %p387, %p388
      %p391 = scmp.ne.s32.totalorder %s374, %s390
      %p392 = scmp.eq.s32.totalorder %s46, 0
      %p393 = por %p391, %p392
      %s394 = ssub.s32 %s40, %s47
      %p395 = scmp.eq.s32.totalorder %s394, 0
      %s397 = sadd.s32 %s396, 1
      %s398 = scalar_select %p395, %s396, %s397
      %p401 = pneg %p395
      %p402 = scmp.eq.s32.totalorder %s40, 1
      %p403 = por %p401, %p402
      %p404 = scmp.ne.s32.totalorder %s396, %s399
      %p405 = scmp.eq.s32.totalorder %s40, 0
      %p406 = por %p404, %p405
      %p407 = scmp.ne.s32.totalorder %s396, %s399
      %p408 = scmp.eq.s32.totalorder %s45, 1
      %p409 = por %p407, %p408
      %p410 = scmp.ne.s32.totalorder %s399, %s400
      %p411 = scmp.eq.s32.totalorder %s45, 0
      %p412 = por %p410, %p411
      %p413 = scmp.ne.s32.totalorder %s399, %s400
      %p414 = scmp.eq.s32.totalorder %s46, 1
      %p415 = por %p413, %p414
      %p417 = scmp.ne.s32.totalorder %s400, %s416
      %p418 = scmp.eq.s32.totalorder %s46, 0
      %p419 = por %p417, %p418
      %s420 = ssub.s32 %s40, %s47
      %p421 = scmp.eq.s32.totalorder %s420, 0
      %s423 = sadd.s32 %s422, 1
      %s424 = scalar_select %p421, %s422, %s423
      %p427 = pneg %p421
      %p428 = scmp.eq.s32.totalorder %s40, 1
      %p429 = por %p427, %p428
      %p430 = scmp.ne.s32.totalorder %s422, %s425
      %p431 = scmp.eq.s32.totalorder %s40, 0
      %p432 = por %p430, %p431
      %p433 = scmp.ne.s32.totalorder %s422, %s425
      %p434 = scmp.eq.s32.totalorder %s45, 1
      %p435 = por %p433, %p434
      %p436 = scmp.ne.s32.totalorder %s425, %s426
      %p437 = scmp.eq.s32.totalorder %s45, 0
      %p438 = por %p436, %p437
      %p439 = scmp.ne.s32.totalorder %s425, %s426
      %p440 = scmp.eq.s32.totalorder %s46, 1
      %p441 = por %p439, %p440
      %p443 = scmp.ne.s32.totalorder %s426, %s442
      %p444 = scmp.eq.s32.totalorder %s46, 0
      %p445 = por %p443, %p444
      %p446 = scmp.le.s32.totalorder 1, %s40
      %p447 = scmp.lt.s32.totalorder %s40, 3
      %p448 = pnand %p446, %p447
      %p449 = pneg %p448
      // Predicated region
      $region9: #{densenet2d_down_block.4} parent=5 // pred_check
        _
      $region10: #{densenet2d_down_block.4} parent=5 // pred_check_branch
        %451 = sbr.rel (%p448) target = $region12
      $region11: #{densenet2d_down_block.4} parent=5 // pred_region
        %s452 = ssub.s32 %s40, 1
        // Predicated region
        $region13: #{densenet2d_down_block.4} parent=11 // pred_check
          %p453 = pneg %p87
        $region14: #{densenet2d_down_block.4} parent=11 // pred_check_branch
          %455 = sbr.rel (%p453) target = $region16
        $region15: #{densenet2d_down_block.4} parent=11 // pred_region
          %s457 = ssub.s32 288, 288
          %458 = vsyncadd [#allocation7], %s457
          %s459 = sshll.u32 [#allocation6], 4
          %s460 = int_to_ptr.vmem [resolvable:$true] %s459
          %465 = dma.hbm_to_vmem [thread:$0]  %s1, 288, %s460, [#allocation7], 32, 32, 2
        $region16: #{densenet2d_down_block.4} parent=11 // pred_fallthru
          _
        // Predicated region
        $region17: #{densenet2d_down_block.4} parent=11 // pred_check
          %p466 = pneg %p108
        $region18: #{densenet2d_down_block.4} parent=11 // pred_check_branch
          %468 = sbr.rel (%p466) target = $region20
        $region19: #{densenet2d_down_block.4} parent=11 // pred_region
          %s470 = ssub.s32 64, 64
          %471 = vsyncadd [#allocation7], %s470
          %s473 = sshll.u32 [#allocation8], 4
          %s474 = int_to_ptr.vmem [resolvable:$true] %s473
          %476 = dma.hbm_to_vmem [thread:$0]  %s2, 64, %s474, [#allocation7]
        $region20: #{densenet2d_down_block.4} parent=11 // pred_fallthru
          _
        // Predicated region
        $region21: #{densenet2d_down_block.4} parent=11 // pred_check
          %p477 = pneg %p129
        $region22: #{densenet2d_down_block.4} parent=11 // pred_check_branch
          %479 = sbr.rel (%p477) target = $region24
        $region23: #{densenet2d_down_block.4} parent=11 // pred_region
          %s481 = ssub.s32 128, 128
          %482 = vsyncadd [#allocation10], %s481
          %s484 = sshll.u32 [#allocation9], 4
          %s485 = int_to_ptr.vmem [resolvable:$true] %s484
          %487 = dma.hbm_to_vmem [thread:$0]  %s3, 128, %s485, [#allocation10]
        $region24: #{densenet2d_down_block.4} parent=11 // pred_fallthru
          _
        // Predicated region
        $region25: #{densenet2d_down_block.4} parent=11 // pred_check
          %p488 = pneg %p150
        $region26: #{densenet2d_down_block.4} parent=11 // pred_check_branch
          %490 = sbr.rel (%p488) target = $region28
        $region27: #{densenet2d_down_block.4} parent=11 // pred_region
          %s492 = ssub.s32 64, 64
          %493 = vsyncadd [#allocation10], %s492
          %s495 = sshll.u32 [#allocation11], 4
          %s496 = int_to_ptr.vmem [resolvable:$true] %s495
          %498 = dma.hbm_to_vmem [thread:$0]  %s4, 64, %s496, [#allocation10]
        $region28: #{densenet2d_down_block.4} parent=11 // pred_fallthru
          _
        // Predicated region
        $region29: #{densenet2d_down_block.4} parent=11 // pred_check
          %p499 = pneg %p171
        $region30: #{densenet2d_down_block.4} parent=11 // pred_check_branch
          %501 = sbr.rel (%p499) target = $region32
        $region31: #{densenet2d_down_block.4} parent=11 // pred_region
          %s503 = ssub.s32 64, 64
          %504 = vsyncadd [#allocation13], %s503
          %s506 = sshll.u32 [#allocation12], 4
          %s507 = int_to_ptr.vmem [resolvable:$true] %s506
          %509 = dma.hbm_to_vmem [thread:$0]  %s5, 64, %s507, [#allocation13]
        $region32: #{densenet2d_down_block.4} parent=11 // pred_fallthru
          _
        // Predicated region
        $region33: #{densenet2d_down_block.4} parent=11 // pred_check
          %p510 = pneg %p192
        $region34: #{densenet2d_down_block.4} parent=11 // pred_check_branch
          %512 = sbr.rel (%p510) target = $region36
        $region35: #{densenet2d_down_block.4} parent=11 // pred_region
          %s514 = ssub.s32 128, 128
          %515 = vsyncadd [#allocation13], %s514
          %s517 = sshll.u32 [#allocation14], 4
          %s518 = int_to_ptr.vmem [resolvable:$true] %s517
          %520 = dma.hbm_to_vmem [thread:$0]  %s6, 128, %s518, [#allocation13]
        $region36: #{densenet2d_down_block.4} parent=11 // pred_fallthru
          _
        // Predicated region
        $region37: #{densenet2d_down_block.4} parent=11 // pred_check
          %p521 = pneg %p213
        $region38: #{densenet2d_down_block.4} parent=11 // pred_check_branch
          %523 = sbr.rel (%p521) target = $region40
        $region39: #{densenet2d_down_block.4} parent=11 // pred_region
          %s525 = ssub.s32 64, 64
          %526 = vsyncadd [#allocation16], %s525
          %s528 = sshll.u32 [#allocation15], 4
          %s529 = int_to_ptr.vmem [resolvable:$true] %s528
          %531 = dma.hbm_to_vmem [thread:$0]  %s7, 64, %s529, [#allocation16]
        $region40: #{densenet2d_down_block.4} parent=11 // pred_fallthru
          _
        // Predicated region
        $region41: #{densenet2d_down_block.4} parent=11 // pred_check
          %p532 = pneg %p234
        $region42: #{densenet2d_down_block.4} parent=11 // pred_check_branch
          %534 = sbr.rel (%p532) target = $region44
        $region43: #{densenet2d_down_block.4} parent=11 // pred_region
          %s536 = ssub.s32 128, 128
          %537 = vsyncadd [#allocation16], %s536
          %s539 = sshll.u32 [#allocation17], 4
          %s540 = int_to_ptr.vmem [resolvable:$true] %s539
          %542 = dma.hbm_to_vmem [thread:$0]  %s8, 128, %s540, [#allocation16]
        $region44: #{densenet2d_down_block.4} parent=11 // pred_fallthru
          _
        // Predicated region
        $region45: #{densenet2d_down_block.4} parent=11 // pred_check
          %p543 = pneg %p255
        $region46: #{densenet2d_down_block.4} parent=11 // pred_check_branch
          %545 = sbr.rel (%p543) target = $region48
        $region47: #{densenet2d_down_block.4} parent=11 // pred_region
          %s547 = ssub.s32 64, 64
          %548 = vsyncadd [#allocation19], %s547
          %s550 = sshll.u32 [#allocation18], 4
          %s551 = int_to_ptr.vmem [resolvable:$true] %s550
          %553 = dma.hbm_to_vmem [thread:$0]  %s9, 64, %s551, [#allocation19]
        $region48: #{densenet2d_down_block.4} parent=11 // pred_fallthru
          _
        // Predicated region
        $region49: #{densenet2d_down_block.4} parent=11 // pred_check
          %p554 = pneg %p276
        $region50: #{densenet2d_down_block.4} parent=11 // pred_check_branch
          %556 = sbr.rel (%p554) target = $region52
        $region51: #{densenet2d_down_block.4} parent=11 // pred_region
          %s558 = ssub.s32 64, 64
          %559 = vsyncadd [#allocation19], %s558
          %s561 = sshll.u32 [#allocation20], 4
          %s562 = int_to_ptr.vmem [resolvable:$true] %s561
          %564 = dma.hbm_to_vmem [thread:$0]  %s10, 64, %s562, [#allocation19]
        $region52: #{densenet2d_down_block.4} parent=11 // pred_fallthru
          _
        // Predicated region
        $region53: #{densenet2d_down_block.4} parent=11 // pred_check
          %p565 = pneg %p297
        $region54: #{densenet2d_down_block.4} parent=11 // pred_check_branch
          %567 = sbr.rel (%p565) target = $region56
        $region55: #{densenet2d_down_block.4} parent=11 // pred_region
          %s569 = ssub.s32 64, 64
          %570 = vsyncadd [#allocation22], %s569
          %s572 = sshll.u32 [#allocation21], 4
          %s573 = int_to_ptr.vmem [resolvable:$true] %s572
          %575 = dma.hbm_to_vmem [thread:$0]  %s11, 64, %s573, [#allocation22]
        $region56: #{densenet2d_down_block.4} parent=11 // pred_fallthru
          _
        // Predicated region
        $region57: #{densenet2d_down_block.4} parent=11 // pred_check
          %p576 = pneg %p318
        $region58: #{densenet2d_down_block.4} parent=11 // pred_check_branch
          %578 = sbr.rel (%p576) target = $region60
        $region59: #{densenet2d_down_block.4} parent=11 // pred_region
          %s580 = ssub.s32 128, 128
          %581 = vsyncadd [#allocation22], %s580
          %s583 = sshll.u32 [#allocation23], 4
          %s584 = int_to_ptr.vmem [resolvable:$true] %s583
          %586 = dma.hbm_to_vmem [thread:$0]  %s12, 128, %s584, [#allocation22]
        $region60: #{densenet2d_down_block.4} parent=11 // pred_fallthru
          _
        // Predicated region
        $region61: #{densenet2d_down_block.4} parent=11 // pred_check
          %p587 = pneg %p339
        $region62: #{densenet2d_down_block.4} parent=11 // pred_check_branch
          %589 = sbr.rel (%p587) target = $region64
        $region63: #{densenet2d_down_block.4} parent=11 // pred_region
          %s591 = ssub.s32 64, 64
          %592 = vsyncadd [#allocation25], %s591
          %s594 = sshll.u32 [#allocation24], 4
          %s595 = int_to_ptr.vmem [resolvable:$true] %s594
          %597 = dma.hbm_to_vmem [thread:$0]  %s13, 64, %s595, [#allocation25]
        $region64: #{densenet2d_down_block.4} parent=11 // pred_fallthru
          _
        // Predicated region
        $region65: #{densenet2d_down_block.4} parent=11 // pred_check
          %p598 = pneg %p360
        $region66: #{densenet2d_down_block.4} parent=11 // pred_check_branch
          %600 = sbr.rel (%p598) target = $region68
        $region67: #{densenet2d_down_block.4} parent=11 // pred_region
          %s602 = ssub.s32 128, 128
          %603 = vsyncadd [#allocation25], %s602
          %s605 = sshll.u32 [#allocation26], 4
          %s606 = int_to_ptr.vmem [resolvable:$true] %s605
          %608 = dma.hbm_to_vmem [thread:$0]  %s14, 128, %s606, [#allocation25]
        $region68: #{densenet2d_down_block.4} parent=11 // pred_fallthru
          _
      $region12: #{densenet2d_down_block.4} parent=5 // pred_fallthru
        _
      %p609 = scmp.lt.s32.totalorder %s40, 2
      // Predicated region
      $region69: #{densenet2d_down_block.4} parent=5 // pred_check
        %p610 = pneg %p609
      $region70: #{densenet2d_down_block.4} parent=5 // pred_check_branch
        %612 = sbr.rel (%p610) target = $region72
      $region71: #{densenet2d_down_block.4} parent=5 // pred_region
        // Predicated region
        $region73: #{densenet2d_down_block.4} parent=71 // pred_check
          %p613 = pneg %p60
        $region74: #{densenet2d_down_block.4} parent=71 // pred_check_branch
          %615 = sbr.rel (%p613) target = $region76
        $region75: #{densenet2d_down_block.4} parent=71 // pred_region
          %s616 = sand.u32 %s50, 1
          %s617 = scalar_lea.sflag [#allocation4], %s616
          %s618 = sand.u32 %s50, 1
          %s619 = smul.addr %s618, 16
          %s620 = scalar_lea.vmem [#allocation3], %s619
          %s622 = ssub.s32 256, 256
          %623 = vsyncadd %s617, %s622
          %s624 = smul.addr %s40, 2
          %s625 = smul.addr %s624, 128
          %s626 = scalar_lea.hbm %s0, %s625
          %s628 = sshll.u32 %s620, 4
          %s629 = int_to_ptr.vmem [resolvable:$true] %s628
          %631 = dma.hbm_to_vmem [thread:$0]  %s626, 256, %s629, %s617
        $region76: #{densenet2d_down_block.4} parent=71 // pred_fallthru
          _
      $region72: #{densenet2d_down_block.4} parent=5 // pred_fallthru
        _
      %p632 = scmp.le.s32.totalorder 1, %s40
      %p633 = scmp.lt.s32.totalorder %s40, 3
      %p634 = pnand %p632, %p633
      %p635 = pneg %p634
      // Predicated region
      $region77: #{densenet2d_down_block.4} parent=5 // pred_check
        _
      $region78: #{densenet2d_down_block.4} parent=5 // pred_check_branch
        %637 = sbr.rel (%p634) target = $region80
      $region79: #{densenet2d_down_block.4} parent=5 // pred_region
        %s638 = ssub.s32 %s40, 1
        %s639 = sand.u32 %s53, 1
        %s640 = scalar_lea.sflag [#allocation4], %s639
        %s641 = sand.u32 %s53, 1
        %s642 = smul.addr %s641, 16
        %s643 = scalar_lea.vmem [#allocation3], %s642
        // Predicated region
        $region81: #{densenet2d_down_block.4} parent=79 // pred_check
          %p644 = pneg %p66
        $region82: #{densenet2d_down_block.4} parent=79 // pred_check_branch
          %646 = sbr.rel (%p644) target = $region84
        $region83: #{densenet2d_down_block.4} parent=79 // pred_region
          %647 = dma.done %s640, 256
        $region84: #{densenet2d_down_block.4} parent=79 // pred_fallthru
          _
        // Predicated region
        $region85: #{densenet2d_down_block.4} parent=79 // pred_check
          %p648 = pneg %p87
        $region86: #{densenet2d_down_block.4} parent=79 // pred_check_branch
          %650 = sbr.rel (%p648) target = $region88
        $region87: #{densenet2d_down_block.4} parent=79 // pred_region
          %651 = dma.done [#allocation7], 288
        $region88: #{densenet2d_down_block.4} parent=79 // pred_fallthru
          _
        // Predicated region
        $region89: #{densenet2d_down_block.4} parent=79 // pred_check
          %p652 = pneg %p108
        $region90: #{densenet2d_down_block.4} parent=79 // pred_check_branch
          %654 = sbr.rel (%p652) target = $region92
        $region91: #{densenet2d_down_block.4} parent=79 // pred_region
          %655 = dma.done [#allocation7], 64
        $region92: #{densenet2d_down_block.4} parent=79 // pred_fallthru
          _
        // Predicated region
        $region93: #{densenet2d_down_block.4} parent=79 // pred_check
          %p656 = pneg %p129
        $region94: #{densenet2d_down_block.4} parent=79 // pred_check_branch
          %658 = sbr.rel (%p656) target = $region96
        $region95: #{densenet2d_down_block.4} parent=79 // pred_region
          %659 = dma.done [#allocation10], 128
        $region96: #{densenet2d_down_block.4} parent=79 // pred_fallthru
          _
        // Predicated region
        $region97: #{densenet2d_down_block.4} parent=79 // pred_check
          %p660 = pneg %p150
        $region98: #{densenet2d_down_block.4} parent=79 // pred_check_branch
          %662 = sbr.rel (%p660) target = $region100
        $region99: #{densenet2d_down_block.4} parent=79 // pred_region
          %663 = dma.done [#allocation10], 64
        $region100: #{densenet2d_down_block.4} parent=79 // pred_fallthru
          _
        // Predicated region
        $region101: #{densenet2d_down_block.4} parent=79 // pred_check
          %p664 = pneg %p171
        $region102: #{densenet2d_down_block.4} parent=79 // pred_check_branch
          %666 = sbr.rel (%p664) target = $region104
        $region103: #{densenet2d_down_block.4} parent=79 // pred_region
          %667 = dma.done [#allocation13], 64
        $region104: #{densenet2d_down_block.4} parent=79 // pred_fallthru
          _
        // Predicated region
        $region105: #{densenet2d_down_block.4} parent=79 // pred_check
          %p668 = pneg %p192
        $region106: #{densenet2d_down_block.4} parent=79 // pred_check_branch
          %670 = sbr.rel (%p668) target = $region108
        $region107: #{densenet2d_down_block.4} parent=79 // pred_region
          %671 = dma.done [#allocation13], 128
        $region108: #{densenet2d_down_block.4} parent=79 // pred_fallthru
          _
        // Predicated region
        $region109: #{densenet2d_down_block.4} parent=79 // pred_check
          %p672 = pneg %p213
        $region110: #{densenet2d_down_block.4} parent=79 // pred_check_branch
          %674 = sbr.rel (%p672) target = $region112
        $region111: #{densenet2d_down_block.4} parent=79 // pred_region
          %675 = dma.done [#allocation16], 64
        $region112: #{densenet2d_down_block.4} parent=79 // pred_fallthru
          _
        // Predicated region
        $region113: #{densenet2d_down_block.4} parent=79 // pred_check
          %p676 = pneg %p234
        $region114: #{densenet2d_down_block.4} parent=79 // pred_check_branch
          %678 = sbr.rel (%p676) target = $region116
        $region115: #{densenet2d_down_block.4} parent=79 // pred_region
          %679 = dma.done [#allocation16], 128
        $region116: #{densenet2d_down_block.4} parent=79 // pred_fallthru
          _
        // Predicated region
        $region117: #{densenet2d_down_block.4} parent=79 // pred_check
          %p680 = pneg %p255
        $region118: #{densenet2d_down_block.4} parent=79 // pred_check_branch
          %682 = sbr.rel (%p680) target = $region120
        $region119: #{densenet2d_down_block.4} parent=79 // pred_region
          %683 = dma.done [#allocation19], 64
        $region120: #{densenet2d_down_block.4} parent=79 // pred_fallthru
          _
        // Predicated region
        $region121: #{densenet2d_down_block.4} parent=79 // pred_check
          %p684 = pneg %p276
        $region122: #{densenet2d_down_block.4} parent=79 // pred_check_branch
          %686 = sbr.rel (%p684) target = $region124
        $region123: #{densenet2d_down_block.4} parent=79 // pred_region
          %687 = dma.done [#allocation19], 64
        $region124: #{densenet2d_down_block.4} parent=79 // pred_fallthru
          _
        // Predicated region
        $region125: #{densenet2d_down_block.4} parent=79 // pred_check
          %p688 = pneg %p297
        $region126: #{densenet2d_down_block.4} parent=79 // pred_check_branch
          %690 = sbr.rel (%p688) target = $region128
        $region127: #{densenet2d_down_block.4} parent=79 // pred_region
          %691 = dma.done [#allocation22], 64
        $region128: #{densenet2d_down_block.4} parent=79 // pred_fallthru
          _
        // Predicated region
        $region129: #{densenet2d_down_block.4} parent=79 // pred_check
          %p692 = pneg %p318
        $region130: #{densenet2d_down_block.4} parent=79 // pred_check_branch
          %694 = sbr.rel (%p692) target = $region132
        $region131: #{densenet2d_down_block.4} parent=79 // pred_region
          %695 = dma.done [#allocation22], 128
        $region132: #{densenet2d_down_block.4} parent=79 // pred_fallthru
          _
        // Predicated region
        $region133: #{densenet2d_down_block.4} parent=79 // pred_check
          %p696 = pneg %p339
        $region134: #{densenet2d_down_block.4} parent=79 // pred_check_branch
          %698 = sbr.rel (%p696) target = $region136
        $region135: #{densenet2d_down_block.4} parent=79 // pred_region
          %699 = dma.done [#allocation25], 64
        $region136: #{densenet2d_down_block.4} parent=79 // pred_fallthru
          _
        // Predicated region
        $region137: #{densenet2d_down_block.4} parent=79 // pred_check
          %p700 = pneg %p360
        $region138: #{densenet2d_down_block.4} parent=79 // pred_check_branch
          %702 = sbr.rel (%p700) target = $region140
        $region139: #{densenet2d_down_block.4} parent=79 // pred_region
          %703 = dma.done [#allocation25], 128
        $region140: #{densenet2d_down_block.4} parent=79 // pred_fallthru
          _
        %s704 = sand.u32 %s53, 1
        %s705 = scalar_lea.sflag [#allocation4], %s704
        %s706 = sand.u32 %s53, 1
        %s707 = smul.addr %s706, 16
        %s708 = scalar_lea.vmem [#allocation3], %s707
        %p709 = pneg %p66
        %p710 = pneg %p63
        %p711 = pneg %p87
        %p712 = pneg %p84
        %p713 = pneg %p108
        %p714 = pneg %p105
        %p715 = pneg %p129
        %p716 = pneg %p126
        %p717 = pneg %p150
        %p718 = pneg %p147
        %p719 = pneg %p171
        %p720 = pneg %p168
        %p721 = pneg %p192
        %p722 = pneg %p189
        %p723 = pneg %p213
        %p724 = pneg %p210
        %p725 = pneg %p234
        %p726 = pneg %p231
        %p727 = pneg %p255
        %p728 = pneg %p252
        %p729 = pneg %p276
        %p730 = pneg %p273
        %p731 = pneg %p297
        %p732 = pneg %p294
        %p733 = pneg %p318
        %p734 = pneg %p315
        %p735 = pneg %p339
        %p736 = pneg %p336
        %p737 = pneg %p360
        %p738 = pneg %p357
        %p739 = pneg %p386
        %p740 = pneg %p383
        %s741 = sand.u32 %s373, 1
        %s742 = scalar_lea.sflag [#allocation5], %s741
        %s743 = sand.u32 %s373, 1
        %s744 = smul.addr %s743, 16
        %s745 = scalar_lea.vmem [#allocation27], %s744
        %p746 = pneg %p412
        %p747 = pneg %p409
        %s748 = sand.u32 %s45, 1
        %s749 = scalar_lea.sflag [#allocation29], %s748
        %s750 = sand.u32 %s399, 1
        %s751 = smul.addr %s750, 8
        %s752 = scalar_lea.vmem [#allocation28], %s751
        %p753 = pneg %p438
        %p754 = pneg %p435
        %s755 = sand.u32 %s45, 1
        %s756 = scalar_lea.sflag [#allocation29], %s755
        %s757 = sand.u32 %s425, 1
        %s758 = smul.addr %s757, 8
        %s759 = scalar_lea.vmem [#allocation30], %s758
        %v761 = vld [vmem:[%s643] sm:$0xff]
        %v762 = vld [vmem:[%s643 + $0x8] sm:$0xff]
        %v763 = vpack.c.bf16 %v761, %v761
        %v764 = vpack.c.bf16 %v762, %v762
        %765 = vrot.lane.b32.xlu0 %v761, 17
        %v766 = vpop.permute.xlu0 %765
        %767 = vrot.lane.b32.xlu0 %v762, 17
        %v768 = vpop.permute.xlu0 %767
        %v769 = vlaneseq
        %v770 = vand.u32 %v769, 127
        %vm771 = vcmp.lt.s32.totalorder %v770, 17
        %v772 = vsel %vm771, %v766, %v768
        %v773 = vsel %vm771, %v768, %v766
        %v774 = vld [vmem:[#allocation6] sm:$0x3]
        %v776 = vlaneseq
        %v777 = vshrl.u32 %v776, 7
        %v778 = vsub.s32 0, %v777
        %v779 = vrot.slane %v774, %v778
        %v780 = vlaneseq
        %v781 = vshrl.u32 %v780, 7
        %v782 = vsub.s32 1, %v781
        %v783 = vrot.slane %v774, %v782
        %v786 = vmul.f32 %v773, %v779
        %v787 = vmul.f32 %v772, %v783
        %788 = vst [vmem:[#allocation2] sm:$0xff] %v786
        %789 = vst [vmem:[#allocation2 + $0x8] sm:$0xff] %v787
        %790 = vrot.lane.b32.xlu0 %v761, 16
        %v791 = vpop.permute.xlu0 %790
        %792 = vrot.lane.b32.xlu0 %v762, 16
        %v793 = vpop.permute.xlu0 %792
        %vm794 = vcmp.lt.s32.totalorder %v770, 16
        %v795 = vsel %vm794, %v791, %v793
        %v796 = vsel %vm794, %v793, %v791
        %s797 = scalar_lea.vmem [#allocation6], 2
        %v798 = vld [vmem:[%s797] sm:$0x3]
        %v800 = vlaneseq
        %v801 = vshrl.u32 %v800, 7
        %v802 = vsub.s32 0, %v801
        %v803 = vrot.slane %v798, %v802
        %v804 = vlaneseq
        %v805 = vshrl.u32 %v804, 7
        %v806 = vsub.s32 1, %v805
        %v807 = vrot.slane %v798, %v806
        %v810 = vmul.f32 %v796, %v803
        %v811 = vmul.f32 %v795, %v807
        %812 = vst [vmem:[#allocation2 + $0x10] sm:$0xff] %v810
        %813 = vst [vmem:[#allocation2 + $0x18] sm:$0xff] %v811
        %814 = vrot.lane.b32.xlu0 %v761, 15
        %v815 = vpop.permute.xlu0 %814
        %816 = vrot.lane.b32.xlu0 %v762, 15
        %v817 = vpop.permute.xlu0 %816
        %vm818 = vcmp.lt.s32.totalorder %v770, 15
        %v819 = vsel %vm818, %v815, %v817
        %v820 = vsel %vm818, %v817, %v815
        %s821 = scalar_lea.vmem [#allocation6], 4
        %v822 = vld [vmem:[%s821] sm:$0x3]
        %v824 = vlaneseq
        %v825 = vshrl.u32 %v824, 7
        %v826 = vsub.s32 0, %v825
        %v827 = vrot.slane %v822, %v826
        %v828 = vlaneseq
        %v829 = vshrl.u32 %v828, 7
        %v830 = vsub.s32 1, %v829
        %v831 = vrot.slane %v822, %v830
        %v834 = vmul.f32 %v820, %v827
        %v835 = vmul.f32 %v819, %v831
        %836 = vst [vmem:[#allocation2 + $0x20] sm:$0xff] %v834
        %837 = vst [vmem:[#allocation2 + $0x28] sm:$0xff] %v835
        %838 = vrot.lane.b32.xlu0 %v761, 1
        %v839 = vpop.permute.xlu0 %838
        %840 = vrot.lane.b32.xlu0 %v762, 1
        %v841 = vpop.permute.xlu0 %840
        %vm842 = vcmp.lt.s32.totalorder %v770, 1
        %v843 = vsel %vm842, %v839, %v841
        %v844 = vsel %vm842, %v841, %v839
        %s845 = scalar_lea.vmem [#allocation6], 6
        %v846 = vld [vmem:[%s845] sm:$0x3]
        %v848 = vlaneseq
        %v849 = vshrl.u32 %v848, 7
        %v850 = vsub.s32 0, %v849
        %v851 = vrot.slane %v846, %v850
        %v852 = vlaneseq
        %v853 = vshrl.u32 %v852, 7
        %v854 = vsub.s32 1, %v853
        %v855 = vrot.slane %v846, %v854
        %v858 = vmul.f32 %v844, %v851
        %v859 = vmul.f32 %v843, %v855
        %860 = vst [vmem:[#allocation2 + $0x30] sm:$0xff] %v858
        %861 = vst [vmem:[#allocation2 + $0x38] sm:$0xff] %v859
        %s862 = scalar_lea.vmem [#allocation6], 8
        %v863 = vld [vmem:[%s862] sm:$0x3]
        %v865 = vlaneseq
        %v866 = vshrl.u32 %v865, 7
        %v867 = vsub.s32 0, %v866
        %v868 = vrot.slane %v863, %v867
        %v869 = vlaneseq
        %v870 = vshrl.u32 %v869, 7
        %v871 = vsub.s32 1, %v870
        %v872 = vrot.slane %v863, %v871
        %v875 = vmul.f32 %v761, %v868
        %v876 = vmul.f32 %v762, %v872
        %877 = vst [vmem:[#allocation2 + $0x40] sm:$0xff] %v875
        %878 = vst [vmem:[#allocation2 + $0x48] sm:$0xff] %v876
        %879 = vrot.lane.b32.xlu0 %v761, 127
        %v880 = vpop.permute.xlu0 %879
        %881 = vrot.lane.b32.xlu0 %v762, 127
        %v882 = vpop.permute.xlu0 %881
        %vm883 = vcmp.lt.s32.totalorder %v770, 127
        %v884 = vsel %vm883, %v880, %v882
        %v885 = vsel %vm883, %v882, %v880
        %s886 = scalar_lea.vmem [#allocation6], 10
        %v887 = vld [vmem:[%s886] sm:$0x3]
        %v889 = vlaneseq
        %v890 = vshrl.u32 %v889, 7
        %v891 = vsub.s32 0, %v890
        %v892 = vrot.slane %v887, %v891
        %v893 = vlaneseq
        %v894 = vshrl.u32 %v893, 7
        %v895 = vsub.s32 1, %v894
        %v896 = vrot.slane %v887, %v895
        %v899 = vmul.f32 %v884, %v892
        %v900 = vmul.f32 %v885, %v896
        %901 = vst [vmem:[#allocation2 + $0x50] sm:$0xff] %v899
        %902 = vst [vmem:[#allocation2 + $0x58] sm:$0xff] %v900
        %903 = vrot.lane.b32.xlu0 %v761, 113
        %v904 = vpop.permute.xlu0 %903
        %905 = vrot.lane.b32.xlu0 %v762, 113
        %v906 = vpop.permute.xlu0 %905
        %vm907 = vcmp.lt.s32.totalorder %v770, 113
        %v908 = vsel %vm907, %v904, %v906
        %v909 = vsel %vm907, %v906, %v904
        %s910 = scalar_lea.vmem [#allocation6], 12
        %v911 = vld [vmem:[%s910] sm:$0x3]
        %v913 = vlaneseq
        %v914 = vshrl.u32 %v913, 7
        %v915 = vsub.s32 0, %v914
        %v916 = vrot.slane %v911, %v915
        %v917 = vlaneseq
        %v918 = vshrl.u32 %v917, 7
        %v919 = vsub.s32 1, %v918
        %v920 = vrot.slane %v911, %v919
        %v923 = vmul.f32 %v908, %v916
        %v924 = vmul.f32 %v909, %v920
        %925 = vst [vmem:[#allocation2 + $0x60] sm:$0xff] %v923
        %926 = vst [vmem:[#allocation2 + $0x68] sm:$0xff] %v924
        %927 = vrot.lane.b32.xlu0 %v761, 112
        %v928 = vpop.permute.xlu0 %927
        %929 = vrot.lane.b32.xlu0 %v762, 112
        %v930 = vpop.permute.xlu0 %929
        %vm931 = vcmp.lt.s32.totalorder %v770, 112
        %v932 = vsel %vm931, %v928, %v930
        %v933 = vsel %vm931, %v930, %v928
        %s934 = scalar_lea.vmem [#allocation6], 14
        %v935 = vld [vmem:[%s934] sm:$0x3]
        %v937 = vlaneseq
        %v938 = vshrl.u32 %v937, 7
        %v939 = vsub.s32 0, %v938
        %v940 = vrot.slane %v935, %v939
        %v941 = vlaneseq
        %v942 = vshrl.u32 %v941, 7
        %v943 = vsub.s32 1, %v942
        %v944 = vrot.slane %v935, %v943
        %v947 = vmul.f32 %v932, %v940
        %v948 = vmul.f32 %v933, %v944
        %949 = vst [vmem:[#allocation2 + $0x70] sm:$0xff] %v947
        %950 = vst [vmem:[#allocation2 + $0x78] sm:$0xff] %v948
        %951 = vrot.lane.b32.xlu0 %v761, 111
        %v952 = vpop.permute.xlu0 %951
        %953 = vrot.lane.b32.xlu0 %v762, 111
        %v954 = vpop.permute.xlu0 %953
        %vm955 = vcmp.lt.s32.totalorder %v770, 111
        %v956 = vsel %vm955, %v952, %v954
        %v957 = vsel %vm955, %v954, %v952
        %s958 = scalar_lea.vmem [#allocation6], 16
        %v959 = vld [vmem:[%s958] sm:$0x3]
        %v961 = vlaneseq
        %v962 = vshrl.u32 %v961, 7
        %v963 = vsub.s32 0, %v962
        %v964 = vrot.slane %v959, %v963
        %v965 = vlaneseq
        %v966 = vshrl.u32 %v965, 7
        %v967 = vsub.s32 1, %v966
        %v968 = vrot.slane %v959, %v967
        %v971 = vmul.f32 %v956, %v964
        %v972 = vmul.f32 %v957, %v968
        %973 = vst [vmem:[#allocation2 + $0x80] sm:$0xff] %v971
        %974 = vst [vmem:[#allocation2 + $0x88] sm:$0xff] %v972
        %v975 = vld [vmem:[#allocation2] sm:$0xff]
        %v976 = vld [vmem:[#allocation2 + $0x8] sm:$0xff]
        %v977 = vld [vmem:[#allocation2 + $0x10] sm:$0xff]
        %v978 = vld [vmem:[#allocation2 + $0x18] sm:$0xff]
        %v979 = vld [vmem:[#allocation2 + $0x20] sm:$0xff]
        %v980 = vld [vmem:[#allocation2 + $0x28] sm:$0xff]
        %v981 = vld [vmem:[#allocation2 + $0x30] sm:$0xff]
        %v982 = vld [vmem:[#allocation2 + $0x38] sm:$0xff]
        %v983 = vld [vmem:[#allocation2 + $0x40] sm:$0xff]
        %v984 = vld [vmem:[#allocation2 + $0x48] sm:$0xff]
        %v985 = vld [vmem:[#allocation2 + $0x50] sm:$0xff]
        %v986 = vld [vmem:[#allocation2 + $0x58] sm:$0xff]
        %v987 = vld [vmem:[#allocation2 + $0x60] sm:$0xff]
        %v988 = vld [vmem:[#allocation2 + $0x68] sm:$0xff]
        %v989 = vld [vmem:[#allocation2 + $0x70] sm:$0xff]
        %v990 = vld [vmem:[#allocation2 + $0x78] sm:$0xff]
        %v991 = vld [vmem:[#allocation2 + $0x80] sm:$0xff]
        %v992 = vld [vmem:[#allocation2 + $0x88] sm:$0xff]
        %v993 = vpack.c.bf16 %v977, %v975
        %v994 = vpack.c.bf16 %v978, %v976
        %v995 = vpack.c.bf16 %v981, %v979
        %v996 = vpack.c.bf16 %v982, %v980
        %v997 = vpack.c.bf16 %v985, %v983
        %v998 = vpack.c.bf16 %v986, %v984
        %v999 = vpack.c.bf16 %v989, %v987
        %v1000 = vpack.c.bf16 %v990, %v988
        %v1001 = vpack.c.bf16 %v991, %v991
        %v1002 = vpack.c.bf16 %v992, %v992
        %v1003 = vld [vmem:[#allocation8] sm:$0xf]
        %v1004 = vld [vmem:[#allocation9] sm:$0xff]
        %1006 = vset.pattern.permute.xlu0 0
        %1007 = vperm.xlu0 %1006, %v1004
        %v1008 = vpop.permute.xlu0 %1007
        %vm1010 = vcmask 588800
        %v1012 = vsel %vm1010, %v1003, 0
        %vm1014 = vcmask 1043456
        %v1016 = vsel %vm1014, %v1001, 0
        %v1019 = vsel %vm1014, %v1002, 0
        %1021 = vmatprep.subr.bf16.mxu0 %v994
        %1022 = vmatpush1.bf16.msra.mxu0 %v993
        %1023 = vmatprep.subr.bf16.mxu0 %v996
        %1024 = vmatpush1.bf16.msra.mxu0 %v995
        %1025 = vmatprep.subr.bf16.mxu0 %v998
        %1026 = vmatpush1.bf16.msra.mxu0 %v997
        %1027 = vmatprep.subr.bf16.mxu0 %v1000
        %1028 = vmatpush1.bf16.msra.mxu0 %v999
        %1029 = vmatprep.subr.bf16.mxu0 %v1019
        %1030 = vmatpush1.bf16.msra.mxu0 %v1016
        %1031 = vmatprep.subr.bf16.mxu0 0
        %1032 = vmatpush1.bf16.msra.mxu0 0
        %1033 = vmatprep.subr.bf16.mxu0 0
        %1034 = vmatpush1.bf16.msra.mxu0 0
        %1035 = vmatprep.subr.bf16.mxu0 0
        %1036 = vmatpush1.bf16.msra.mxu0 0
        %1037 = vmatprep.subr.bf16.mxu0 0
        %1038 = vmatpush1.bf16.msra.mxu0 0
        %1039 = vmatprep.subr.bf16.mxu0 0
        %1040 = vmatpush1.bf16.msra.mxu0 0
        %1041 = vmatprep.subr.bf16.mxu0 0
        %1042 = vmatpush1.bf16.msra.mxu0 0
        %1043 = vmatprep.subr.bf16.mxu0 0
        %1044 = vmatpush1.bf16.msra.mxu0 0
        %1045 = vmatprep.subr.bf16.mxu0 0
        %1046 = vmatpush1.bf16.msra.mxu0 0
        %1047 = vmatprep.subr.bf16.mxu0 0
        %1048 = vmatpush1.bf16.msra.mxu0 0
        %1049 = vmatprep.subr.bf16.mxu0 0
        %1050 = vmatpush1.bf16.msra.mxu0 0
        %1051 = vmatprep.subr.bf16.mxu0 0
        %1052 = vmatpush1.bf16.msra.mxu0 0
        %1053 = vmatprep.mubr.bf16.mxu0 0
        %1054 = vmatmul.mubr.bf16.gmra.mrb[0].mxu0 %v1012
        %v1055 = vpop.f32.mrb[0].mxu0
        %v1056 = vadd.f32 %v1008, %v1055
        %v1057 = vpop.f32.mrb[0].mxu0
        %v1058 = vadd.f32 %v1008, %v1057
        %v1059 = vpop.f32.mrb[0].mxu0
        %v1060 = vpop.f32.mrb[0].mxu0
        %1061 = vdwg.mxu0
        %vm1062 = vcmp.ge.f32.partialorder %v1056, 0.0
        %vm1063 = vcmp.ge.f32.partialorder %v1058, 0.0
        %v1064 = vmul.f32 %v1056, 0.01
        %v1065 = vmul.f32 %v1058, 0.01
        %v1066 = vsel %vm1062, %v1056, %v1064
        %v1067 = vsel %vm1063, %v1058, %v1065
        %v1068 = vpack.c.bf16 %v1066, %v1066
        %v1069 = vpack.c.bf16 %v1067, %v1067
        %v1070 = vld [vmem:[#allocation11] sm:$0xf]
        %v1071 = vld [vmem:[#allocation12] sm:$0xf]
        %vm1072 = vcmask 64512
        %v1074 = vsel %vm1072, %v1071, 0
        %v1077 = vsel %vm1014, %v1068, 0
        %v1080 = vsel %vm1014, %v1069, 0
        %1082 = vmatprep.subr.bf16.mxu0 %v1080
        %1083 = vmatpush1.bf16.msra.mxu0 %v1077
        %1084 = vmatprep.subr.bf16.mxu0 0
        %1085 = vmatpush1.bf16.msra.mxu0 0
        %1086 = vmatprep.subr.bf16.mxu0 0
        %1087 = vmatpush1.bf16.msra.mxu0 0
        %1088 = vmatprep.subr.bf16.mxu0 0
        %1089 = vmatpush1.bf16.msra.mxu0 0
        %1090 = vmatprep.subr.bf16.mxu0 0
        %1091 = vmatpush1.bf16.msra.mxu0 0
        %1092 = vmatprep.subr.bf16.mxu0 0
        %1093 = vmatpush1.bf16.msra.mxu0 0
        %1094 = vmatprep.subr.bf16.mxu0 0
        %1095 = vmatpush1.bf16.msra.mxu0 0
        %1096 = vmatprep.subr.bf16.mxu0 0
        %1097 = vmatpush1.bf16.msra.mxu0 0
        %1098 = vmatprep.subr.bf16.mxu0 0
        %1099 = vmatpush1.bf16.msra.mxu0 0
        %1100 = vmatprep.subr.bf16.mxu0 0
        %1101 = vmatpush1.bf16.msra.mxu0 0
        %1102 = vmatprep.subr.bf16.mxu0 0
        %1103 = vmatpush1.bf16.msra.mxu0 0
        %1104 = vmatprep.subr.bf16.mxu0 0
        %1105 = vmatpush1.bf16.msra.mxu0 0
        %1106 = vmatprep.subr.bf16.mxu0 0
        %1107 = vmatpush1.bf16.msra.mxu0 0
        %1108 = vmatprep.subr.bf16.mxu0 0
        %1109 = vmatpush1.bf16.msra.mxu0 0
        %1110 = vmatprep.subr.bf16.mxu0 0
        %1111 = vmatpush1.bf16.msra.mxu0 0
        %1112 = vmatprep.subr.bf16.mxu0 0
        %1113 = vmatpush1.bf16.msra.mxu0 0
        %1114 = vmatprep.mubr.bf16.mxu0 0
        %1115 = vmatmul.mubr.bf16.gmra.mrb[0].mxu0 %v1074
        %v1116 = vpop.f32.mrb[0].mxu0
        %v1117 = vadd.f32 0.0, %v1116
        %v1118 = vpop.f32.mrb[0].mxu0
        %v1119 = vadd.f32 0.0, %v1118
        %v1120 = vpop.f32.mrb[0].mxu0
        %v1121 = vpop.f32.mrb[0].mxu0
        %1122 = vdwg.mxu0
        %v1124 = vsel %vm1072, %v1070, 0
        %v1127 = vsel %vm1014, %v763, 0
        %v1130 = vsel %vm1014, %v764, 0
        %1132 = vmatprep.subr.bf16.mxu0 %v1130
        %1133 = vmatpush1.bf16.msra.mxu0 %v1127
        %1134 = vmatprep.subr.bf16.mxu0 0
        %1135 = vmatpush1.bf16.msra.mxu0 0
        %1136 = vmatprep.subr.bf16.mxu0 0
        %1137 = vmatpush1.bf16.msra.mxu0 0
        %1138 = vmatprep.subr.bf16.mxu0 0
        %1139 = vmatpush1.bf16.msra.mxu0 0
        %1140 = vmatprep.subr.bf16.mxu0 0
        %1141 = vmatpush1.bf16.msra.mxu0 0
        %1142 = vmatprep.subr.bf16.mxu0 0
        %1143 = vmatpush1.bf16.msra.mxu0 0
        %1144 = vmatprep.subr.bf16.mxu0 0
        %1145 = vmatpush1.bf16.msra.mxu0 0
        %1146 = vmatprep.subr.bf16.mxu0 0
        %1147 = vmatpush1.bf16.msra.mxu0 0
        %1148 = vmatprep.subr.bf16.mxu0 0
        %1149 = vmatpush1.bf16.msra.mxu0 0
        %1150 = vmatprep.subr.bf16.mxu0 0
        %1151 = vmatpush1.bf16.msra.mxu0 0
        %1152 = vmatprep.subr.bf16.mxu0 0
        %1153 = vmatpush1.bf16.msra.mxu0 0
        %1154 = vmatprep.subr.bf16.mxu0 0
        %1155 = vmatpush1.bf16.msra.mxu0 0
        %1156 = vmatprep.subr.bf16.mxu0 0
        %1157 = vmatpush1.bf16.msra.mxu0 0
        %1158 = vmatprep.subr.bf16.mxu0 0
        %1159 = vmatpush1.bf16.msra.mxu0 0
        %1160 = vmatprep.subr.bf16.mxu0 0
        %1161 = vmatpush1.bf16.msra.mxu0 0
        %1162 = vmatprep.subr.bf16.mxu0 0
        %1163 = vmatpush1.bf16.msra.mxu0 0
        %1164 = vmatprep.mubr.bf16.mxu0 0
        %1165 = vmatmul.mubr.bf16.gmra.mrb[0].mxu0 %v1124
        %v1166 = vpop.f32.mrb[0].mxu0
        %v1167 = vadd.f32 %v1117, %v1166
        %v1168 = vpop.f32.mrb[0].mxu0
        %v1169 = vadd.f32 %v1119, %v1168
        %v1170 = vpop.f32.mrb[0].mxu0
        %v1171 = vpop.f32.mrb[0].mxu0
        %1172 = vdwg.mxu0
        %v1173 = vld [vmem:[#allocation14] sm:$0xff]
        %1175 = vset.pattern.permute.xlu0 0
        %1176 = vperm.xlu0 %1175, %v1173
        %v1177 = vpop.permute.xlu0 %1176
        %v1179 = vadd.f32 %v1167, %v1177
        %v1180 = vadd.f32 %v1169, %v1177
        %1181 = vrot.lane.b32.xlu0 %v1179, 17
        %v1182 = vpop.permute.xlu0 %1181
        %1183 = vrot.lane.b32.xlu0 %v1180, 17
        %v1184 = vpop.permute.xlu0 %1183
        %v1185 = vsel %vm771, %v1182, %v1184
        %v1186 = vsel %vm771, %v1184, %v1182
        %v1187 = vld [vmem:[#allocation6] sm:$0x3]
        %v1189 = vlaneseq
        %v1190 = vshrl.u32 %v1189, 7
        %v1191 = vsub.s32 0, %v1190
        %v1192 = vrot.slane %v1187, %v1191
        %v1193 = vlaneseq
        %v1194 = vshrl.u32 %v1193, 7
        %v1195 = vsub.s32 1, %v1194
        %v1196 = vrot.slane %v1187, %v1195
        %v1199 = vmul.f32 %v1186, %v1192
        %v1200 = vmul.f32 %v1185, %v1196
        %1201 = vst [vmem:[#allocation2] sm:$0xff] %v1199
        %1202 = vst [vmem:[#allocation2 + $0x8] sm:$0xff] %v1200
        %1203 = vrot.lane.b32.xlu0 %v1179, 16
        %v1204 = vpop.permute.xlu0 %1203
        %1205 = vrot.lane.b32.xlu0 %v1180, 16
        %v1206 = vpop.permute.xlu0 %1205
        %v1207 = vsel %vm794, %v1204, %v1206
        %v1208 = vsel %vm794, %v1206, %v1204
        %v1209 = vld [vmem:[%s797] sm:$0x3]
        %v1211 = vlaneseq
        %v1212 = vshrl.u32 %v1211, 7
        %v1213 = vsub.s32 0, %v1212
        %v1214 = vrot.slane %v1209, %v1213
        %v1215 = vlaneseq
        %v1216 = vshrl.u32 %v1215, 7
        %v1217 = vsub.s32 1, %v1216
        %v1218 = vrot.slane %v1209, %v1217
        %v1221 = vmul.f32 %v1208, %v1214
        %v1222 = vmul.f32 %v1207, %v1218
        %1223 = vst [vmem:[#allocation2 + $0x10] sm:$0xff] %v1221
        %1224 = vst [vmem:[#allocation2 + $0x18] sm:$0xff] %v1222
        %1225 = vrot.lane.b32.xlu0 %v1179, 15
        %v1226 = vpop.permute.xlu0 %1225
        %1227 = vrot.lane.b32.xlu0 %v1180, 15
        %v1228 = vpop.permute.xlu0 %1227
        %v1229 = vsel %vm818, %v1226, %v1228
        %v1230 = vsel %vm818, %v1228, %v1226
        %v1231 = vld [vmem:[%s821] sm:$0x3]
        %v1233 = vlaneseq
        %v1234 = vshrl.u32 %v1233, 7
        %v1235 = vsub.s32 0, %v1234
        %v1236 = vrot.slane %v1231, %v1235
        %v1237 = vlaneseq
        %v1238 = vshrl.u32 %v1237, 7
        %v1239 = vsub.s32 1, %v1238
        %v1240 = vrot.slane %v1231, %v1239
        %v1243 = vmul.f32 %v1230, %v1236
        %v1244 = vmul.f32 %v1229, %v1240
        %1245 = vst [vmem:[#allocation2 + $0x20] sm:$0xff] %v1243
        %1246 = vst [vmem:[#allocation2 + $0x28] sm:$0xff] %v1244
        %1247 = vrot.lane.b32.xlu0 %v1179, 1
        %v1248 = vpop.permute.xlu0 %1247
        %1249 = vrot.lane.b32.xlu0 %v1180, 1
        %v1250 = vpop.permute.xlu0 %1249
        %v1251 = vsel %vm842, %v1248, %v1250
        %v1252 = vsel %vm842, %v1250, %v1248
        %v1253 = vld [vmem:[%s845] sm:$0x3]
        %v1255 = vlaneseq
        %v1256 = vshrl.u32 %v1255, 7
        %v1257 = vsub.s32 0, %v1256
        %v1258 = vrot.slane %v1253, %v1257
        %v1259 = vlaneseq
        %v1260 = vshrl.u32 %v1259, 7
        %v1261 = vsub.s32 1, %v1260
        %v1262 = vrot.slane %v1253, %v1261
        %v1265 = vmul.f32 %v1252, %v1258
        %v1266 = vmul.f32 %v1251, %v1262
        %1267 = vst [vmem:[#allocation2 + $0x30] sm:$0xff] %v1265
        %1268 = vst [vmem:[#allocation2 + $0x38] sm:$0xff] %v1266
        %v1269 = vld [vmem:[%s862] sm:$0x3]
        %v1271 = vlaneseq
        %v1272 = vshrl.u32 %v1271, 7
        %v1273 = vsub.s32 0, %v1272
        %v1274 = vrot.slane %v1269, %v1273
        %v1275 = vlaneseq
        %v1276 = vshrl.u32 %v1275, 7
        %v1277 = vsub.s32 1, %v1276
        %v1278 = vrot.slane %v1269, %v1277
        %v1281 = vmul.f32 %v1179, %v1274
        %v1282 = vmul.f32 %v1180, %v1278
        %1283 = vst [vmem:[#allocation2 + $0x40] sm:$0xff] %v1281
        %1284 = vst [vmem:[#allocation2 + $0x48] sm:$0xff] %v1282
        %1285 = vrot.lane.b32.xlu0 %v1179, 127
        %v1286 = vpop.permute.xlu0 %1285
        %1287 = vrot.lane.b32.xlu0 %v1180, 127
        %v1288 = vpop.permute.xlu0 %1287
        %v1289 = vsel %vm883, %v1286, %v1288
        %v1290 = vsel %vm883, %v1288, %v1286
        %v1291 = vld [vmem:[%s886] sm:$0x3]
        %v1293 = vlaneseq
        %v1294 = vshrl.u32 %v1293, 7
        %v1295 = vsub.s32 0, %v1294
        %v1296 = vrot.slane %v1291, %v1295
        %v1297 = vlaneseq
        %v1298 = vshrl.u32 %v1297, 7
        %v1299 = vsub.s32 1, %v1298
        %v1300 = vrot.slane %v1291, %v1299
        %v1303 = vmul.f32 %v1289, %v1296
        %v1304 = vmul.f32 %v1290, %v1300
        %1305 = vst [vmem:[#allocation2 + $0x50] sm:$0xff] %v1303
        %1306 = vst [vmem:[#allocation2 + $0x58] sm:$0xff] %v1304
        %1307 = vrot.lane.b32.xlu0 %v1179, 113
        %v1308 = vpop.permute.xlu0 %1307
        %1309 = vrot.lane.b32.xlu0 %v1180, 113
        %v1310 = vpop.permute.xlu0 %1309
        %v1311 = vsel %vm907, %v1308, %v1310
        %v1312 = vsel %vm907, %v1310, %v1308
        %v1313 = vld [vmem:[%s910] sm:$0x3]
        %v1315 = vlaneseq
        %v1316 = vshrl.u32 %v1315, 7
        %v1317 = vsub.s32 0, %v1316
        %v1318 = vrot.slane %v1313, %v1317
        %v1319 = vlaneseq
        %v1320 = vshrl.u32 %v1319, 7
        %v1321 = vsub.s32 1, %v1320
        %v1322 = vrot.slane %v1313, %v1321
        %v1325 = vmul.f32 %v1311, %v1318
        %v1326 = vmul.f32 %v1312, %v1322
        %1327 = vst [vmem:[#allocation2 + $0x60] sm:$0xff] %v1325
        %1328 = vst [vmem:[#allocation2 + $0x68] sm:$0xff] %v1326
        %1329 = vrot.lane.b32.xlu0 %v1179, 112
        %v1330 = vpop.permute.xlu0 %1329
        %1331 = vrot.lane.b32.xlu0 %v1180, 112
        %v1332 = vpop.permute.xlu0 %1331
        %v1333 = vsel %vm931, %v1330, %v1332
        %v1334 = vsel %vm931, %v1332, %v1330
        %v1335 = vld [vmem:[%s934] sm:$0x3]
        %v1337 = vlaneseq
        %v1338 = vshrl.u32 %v1337, 7
        %v1339 = vsub.s32 0, %v1338
        %v1340 = vrot.slane %v1335, %v1339
        %v1341 = vlaneseq
        %v1342 = vshrl.u32 %v1341, 7
        %v1343 = vsub.s32 1, %v1342
        %v1344 = vrot.slane %v1335, %v1343
        %v1347 = vmul.f32 %v1333, %v1340
        %v1348 = vmul.f32 %v1334, %v1344
        %1349 = vst [vmem:[#allocation2 + $0x70] sm:$0xff] %v1347
        %1350 = vst [vmem:[#allocation2 + $0x78] sm:$0xff] %v1348
        %1351 = vrot.lane.b32.xlu0 %v1179, 111
        %v1352 = vpop.permute.xlu0 %1351
        %1353 = vrot.lane.b32.xlu0 %v1180, 111
        %v1354 = vpop.permute.xlu0 %1353
        %v1355 = vsel %vm955, %v1352, %v1354
        %v1356 = vsel %vm955, %v1354, %v1352
        %v1357 = vld [vmem:[%s958] sm:$0x3]
        %v1359 = vlaneseq
        %v1360 = vshrl.u32 %v1359, 7
        %v1361 = vsub.s32 0, %v1360
        %v1362 = vrot.slane %v1357, %v1361
        %v1363 = vlaneseq
        %v1364 = vshrl.u32 %v1363, 7
        %v1365 = vsub.s32 1, %v1364
        %v1366 = vrot.slane %v1357, %v1365
        %v1369 = vmul.f32 %v1355, %v1362
        %v1370 = vmul.f32 %v1356, %v1366
        %1371 = vst [vmem:[#allocation2 + $0x80] sm:$0xff] %v1369
        %1372 = vst [vmem:[#allocation2 + $0x88] sm:$0xff] %v1370
        %v1373 = vld [vmem:[#allocation2] sm:$0xff]
        %v1374 = vld [vmem:[#allocation2 + $0x8] sm:$0xff]
        %v1375 = vld [vmem:[#allocation2 + $0x10] sm:$0xff]
        %v1376 = vld [vmem:[#allocation2 + $0x18] sm:$0xff]
        %v1377 = vld [vmem:[#allocation2 + $0x20] sm:$0xff]
        %v1378 = vld [vmem:[#allocation2 + $0x28] sm:$0xff]
        %v1379 = vld [vmem:[#allocation2 + $0x30] sm:$0xff]
        %v1380 = vld [vmem:[#allocation2 + $0x38] sm:$0xff]
        %v1381 = vld [vmem:[#allocation2 + $0x40] sm:$0xff]
        %v1382 = vld [vmem:[#allocation2 + $0x48] sm:$0xff]
        %v1383 = vld [vmem:[#allocation2 + $0x50] sm:$0xff]
        %v1384 = vld [vmem:[#allocation2 + $0x58] sm:$0xff]
        %v1385 = vld [vmem:[#allocation2 + $0x60] sm:$0xff]
        %v1386 = vld [vmem:[#allocation2 + $0x68] sm:$0xff]
        %v1387 = vld [vmem:[#allocation2 + $0x70] sm:$0xff]
        %v1388 = vld [vmem:[#allocation2 + $0x78] sm:$0xff]
        %v1389 = vld [vmem:[#allocation2 + $0x80] sm:$0xff]
        %v1390 = vld [vmem:[#allocation2 + $0x88] sm:$0xff]
        %v1391 = vpack.c.bf16 %v1375, %v1373
        %v1392 = vpack.c.bf16 %v1376, %v1374
        %v1393 = vpack.c.bf16 %v1379, %v1377
        %v1394 = vpack.c.bf16 %v1380, %v1378
        %v1395 = vpack.c.bf16 %v1383, %v1381
        %v1396 = vpack.c.bf16 %v1384, %v1382
        %v1397 = vpack.c.bf16 %v1387, %v1385
        %v1398 = vpack.c.bf16 %v1388, %v1386
        %v1399 = vpack.c.bf16 %v1389, %v1389
        %v1400 = vpack.c.bf16 %v1390, %v1390
        %v1401 = vld [vmem:[#allocation15] sm:$0xf]
        %v1402 = vld [vmem:[#allocation17] sm:$0xff]
        %1404 = vset.pattern.permute.xlu0 0
        %1405 = vperm.xlu0 %1404, %v1402
        %v1406 = vpop.permute.xlu0 %1405
        %v1409 = vsel %vm1010, %v1401, 0
        %v1412 = vsel %vm1014, %v1399, 0
        %v1415 = vsel %vm1014, %v1400, 0
        %1417 = vmatprep.subr.bf16.mxu0 %v1392
        %1418 = vmatpush1.bf16.msra.mxu0 %v1391
        %1419 = vmatprep.subr.bf16.mxu0 %v1394
        %1420 = vmatpush1.bf16.msra.mxu0 %v1393
        %1421 = vmatprep.subr.bf16.mxu0 %v1396
        %1422 = vmatpush1.bf16.msra.mxu0 %v1395
        %1423 = vmatprep.subr.bf16.mxu0 %v1398
        %1424 = vmatpush1.bf16.msra.mxu0 %v1397
        %1425 = vmatprep.subr.bf16.mxu0 %v1415
        %1426 = vmatpush1.bf16.msra.mxu0 %v1412
        %1427 = vmatprep.subr.bf16.mxu0 0
        %1428 = vmatpush1.bf16.msra.mxu0 0
        %1429 = vmatprep.subr.bf16.mxu0 0
        %1430 = vmatpush1.bf16.msra.mxu0 0
        %1431 = vmatprep.subr.bf16.mxu0 0
        %1432 = vmatpush1.bf16.msra.mxu0 0
        %1433 = vmatprep.subr.bf16.mxu0 0
        %1434 = vmatpush1.bf16.msra.mxu0 0
        %1435 = vmatprep.subr.bf16.mxu0 0
        %1436 = vmatpush1.bf16.msra.mxu0 0
        %1437 = vmatprep.subr.bf16.mxu0 0
        %1438 = vmatpush1.bf16.msra.mxu0 0
        %1439 = vmatprep.subr.bf16.mxu0 0
        %1440 = vmatpush1.bf16.msra.mxu0 0
        %1441 = vmatprep.subr.bf16.mxu0 0
        %1442 = vmatpush1.bf16.msra.mxu0 0
        %1443 = vmatprep.subr.bf16.mxu0 0
        %1444 = vmatpush1.bf16.msra.mxu0 0
        %1445 = vmatprep.subr.bf16.mxu0 0
        %1446 = vmatpush1.bf16.msra.mxu0 0
        %1447 = vmatprep.subr.bf16.mxu0 0
        %1448 = vmatpush1.bf16.msra.mxu0 0
        %1449 = vmatprep.mubr.bf16.mxu0 0
        %1450 = vmatmul.mubr.bf16.gmra.mrb[0].mxu0 %v1409
        %v1451 = vpop.f32.mrb[0].mxu0
        %v1452 = vadd.f32 %v1406, %v1451
        %v1453 = vpop.f32.mrb[0].mxu0
        %v1454 = vadd.f32 %v1406, %v1453
        %v1455 = vpop.f32.mrb[0].mxu0
        %v1456 = vpop.f32.mrb[0].mxu0
        %1457 = vdwg.mxu0
        %vm1458 = vcmp.ge.f32.partialorder %v1452, 0.0
        %vm1459 = vcmp.ge.f32.partialorder %v1454, 0.0
        %v1460 = vmul.f32 %v1452, 0.01
        %v1461 = vmul.f32 %v1454, 0.01
        %v1462 = vsel %vm1458, %v1452, %v1460
        %v1463 = vsel %vm1459, %v1454, %v1461
        %v1464 = vpack.c.bf16 %v1462, %v1462
        %v1465 = vpack.c.bf16 %v1463, %v1463
        %v1466 = vld [vmem:[#allocation18] sm:$0xf]
        %v1467 = vld [vmem:[#allocation20] sm:$0xf]
        %v1469 = vsel %vm1072, %v1467, 0
        %1471 = vmatprep.subr.bf16.mxu0 %v1080
        %1472 = vmatpush1.bf16.msra.mxu0 %v1077
        %1473 = vmatprep.subr.bf16.mxu0 0
        %1474 = vmatpush1.bf16.msra.mxu0 0
        %1475 = vmatprep.subr.bf16.mxu0 0
        %1476 = vmatpush1.bf16.msra.mxu0 0
        %1477 = vmatprep.subr.bf16.mxu0 0
        %1478 = vmatpush1.bf16.msra.mxu0 0
        %1479 = vmatprep.subr.bf16.mxu0 0
        %1480 = vmatpush1.bf16.msra.mxu0 0
        %1481 = vmatprep.subr.bf16.mxu0 0
        %1482 = vmatpush1.bf16.msra.mxu0 0
        %1483 = vmatprep.subr.bf16.mxu0 0
        %1484 = vmatpush1.bf16.msra.mxu0 0
        %1485 = vmatprep.subr.bf16.mxu0 0
        %1486 = vmatpush1.bf16.msra.mxu0 0
        %1487 = vmatprep.subr.bf16.mxu0 0
        %1488 = vmatpush1.bf16.msra.mxu0 0
        %1489 = vmatprep.subr.bf16.mxu0 0
        %1490 = vmatpush1.bf16.msra.mxu0 0
        %1491 = vmatprep.subr.bf16.mxu0 0
        %1492 = vmatpush1.bf16.msra.mxu0 0
        %1493 = vmatprep.subr.bf16.mxu0 0
        %1494 = vmatpush1.bf16.msra.mxu0 0
        %1495 = vmatprep.subr.bf16.mxu0 0
        %1496 = vmatpush1.bf16.msra.mxu0 0
        %1497 = vmatprep.subr.bf16.mxu0 0
        %1498 = vmatpush1.bf16.msra.mxu0 0
        %1499 = vmatprep.subr.bf16.mxu0 0
        %1500 = vmatpush1.bf16.msra.mxu0 0
        %1501 = vmatprep.subr.bf16.mxu0 0
        %1502 = vmatpush1.bf16.msra.mxu0 0
        %1503 = vmatprep.mubr.bf16.mxu0 0
        %1504 = vmatmul.mubr.bf16.gmra.mrb[0].mxu0 %v1469
        %v1505 = vpop.f32.mrb[0].mxu0
        %v1506 = vadd.f32 0.0, %v1505
        %v1507 = vpop.f32.mrb[0].mxu0
        %v1508 = vadd.f32 0.0, %v1507
        %v1509 = vpop.f32.mrb[0].mxu0
        %v1510 = vpop.f32.mrb[0].mxu0
        %1511 = vdwg.mxu0
        %v1513 = vsel %vm1072, %v1466, 0
        %1515 = vmatprep.subr.bf16.mxu0 %v1130
        %1516 = vmatpush1.bf16.msra.mxu0 %v1127
        %1517 = vmatprep.subr.bf16.mxu0 0
        %1518 = vmatpush1.bf16.msra.mxu0 0
        %1519 = vmatprep.subr.bf16.mxu0 0
        %1520 = vmatpush1.bf16.msra.mxu0 0
        %1521 = vmatprep.subr.bf16.mxu0 0
        %1522 = vmatpush1.bf16.msra.mxu0 0
        %1523 = vmatprep.subr.bf16.mxu0 0
        %1524 = vmatpush1.bf16.msra.mxu0 0
        %1525 = vmatprep.subr.bf16.mxu0 0
        %1526 = vmatpush1.bf16.msra.mxu0 0
        %1527 = vmatprep.subr.bf16.mxu0 0
        %1528 = vmatpush1.bf16.msra.mxu0 0
        %1529 = vmatprep.subr.bf16.mxu0 0
        %1530 = vmatpush1.bf16.msra.mxu0 0
        %1531 = vmatprep.subr.bf16.mxu0 0
        %1532 = vmatpush1.bf16.msra.mxu0 0
        %1533 = vmatprep.subr.bf16.mxu0 0
        %1534 = vmatpush1.bf16.msra.mxu0 0
        %1535 = vmatprep.subr.bf16.mxu0 0
        %1536 = vmatpush1.bf16.msra.mxu0 0
        %1537 = vmatprep.subr.bf16.mxu0 0
        %1538 = vmatpush1.bf16.msra.mxu0 0
        %1539 = vmatprep.subr.bf16.mxu0 0
        %1540 = vmatpush1.bf16.msra.mxu0 0
        %1541 = vmatprep.subr.bf16.mxu0 0
        %1542 = vmatpush1.bf16.msra.mxu0 0
        %1543 = vmatprep.subr.bf16.mxu0 0
        %1544 = vmatpush1.bf16.msra.mxu0 0
        %1545 = vmatprep.subr.bf16.mxu0 0
        %1546 = vmatpush1.bf16.msra.mxu0 0
        %1547 = vmatprep.mubr.bf16.mxu0 0
        %1548 = vmatmul.mubr.bf16.gmra.mrb[0].mxu0 %v1513
        %v1549 = vpop.f32.mrb[0].mxu0
        %v1550 = vadd.f32 %v1506, %v1549
        %v1551 = vpop.f32.mrb[0].mxu0
        %v1552 = vadd.f32 %v1508, %v1551
        %v1553 = vpop.f32.mrb[0].mxu0
        %v1554 = vpop.f32.mrb[0].mxu0
        %1555 = vdwg.mxu0
        %v1556 = vld [vmem:[#allocation21] sm:$0xf]
        %v1558 = vsel %vm1072, %v1556, 0
        %v1561 = vsel %vm1014, %v1464, 0
        %v1564 = vsel %vm1014, %v1465, 0
        %1566 = vmatprep.subr.bf16.mxu0 %v1564
        %1567 = vmatpush1.bf16.msra.mxu0 %v1561
        %1568 = vmatprep.subr.bf16.mxu0 0
        %1569 = vmatpush1.bf16.msra.mxu0 0
        %1570 = vmatprep.subr.bf16.mxu0 0
        %1571 = vmatpush1.bf16.msra.mxu0 0
        %1572 = vmatprep.subr.bf16.mxu0 0
        %1573 = vmatpush1.bf16.msra.mxu0 0
        %1574 = vmatprep.subr.bf16.mxu0 0
        %1575 = vmatpush1.bf16.msra.mxu0 0
        %1576 = vmatprep.subr.bf16.mxu0 0
        %1577 = vmatpush1.bf16.msra.mxu0 0
        %1578 = vmatprep.subr.bf16.mxu0 0
        %1579 = vmatpush1.bf16.msra.mxu0 0
        %1580 = vmatprep.subr.bf16.mxu0 0
        %1581 = vmatpush1.bf16.msra.mxu0 0
        %1582 = vmatprep.subr.bf16.mxu0 0
        %1583 = vmatpush1.bf16.msra.mxu0 0
        %1584 = vmatprep.subr.bf16.mxu0 0
        %1585 = vmatpush1.bf16.msra.mxu0 0
        %1586 = vmatprep.subr.bf16.mxu0 0
        %1587 = vmatpush1.bf16.msra.mxu0 0
        %1588 = vmatprep.subr.bf16.mxu0 0
        %1589 = vmatpush1.bf16.msra.mxu0 0
        %1590 = vmatprep.subr.bf16.mxu0 0
        %1591 = vmatpush1.bf16.msra.mxu0 0
        %1592 = vmatprep.subr.bf16.mxu0 0
        %1593 = vmatpush1.bf16.msra.mxu0 0
        %1594 = vmatprep.subr.bf16.mxu0 0
        %1595 = vmatpush1.bf16.msra.mxu0 0
        %1596 = vmatprep.subr.bf16.mxu0 0
        %1597 = vmatpush1.bf16.msra.mxu0 0
        %1598 = vmatprep.mubr.bf16.mxu0 0
        %1599 = vmatmul.mubr.bf16.gmra.mrb[0].mxu0 %v1558
        %v1600 = vpop.f32.mrb[0].mxu0
        %v1601 = vadd.f32 0.0, %v1600
        %v1602 = vpop.f32.mrb[0].mxu0
        %v1603 = vadd.f32 0.0, %v1602
        %v1604 = vpop.f32.mrb[0].mxu0
        %v1605 = vpop.f32.mrb[0].mxu0
        %1606 = vdwg.mxu0
        %v1607 = vadd.f32 %v1550, %v1601
        %v1608 = vadd.f32 %v1552, %v1603
        %v1609 = vld [vmem:[#allocation23] sm:$0xff]
        %1611 = vset.pattern.permute.xlu0 0
        %1612 = vperm.xlu0 %1611, %v1609
        %v1613 = vpop.permute.xlu0 %1612
        %v1615 = vadd.f32 %v1607, %v1613
        %v1616 = vadd.f32 %v1608, %v1613
        %1617 = vrot.lane.b32.xlu0 %v1615, 17
        %v1618 = vpop.permute.xlu0 %1617
        %1619 = vrot.lane.b32.xlu0 %v1616, 17
        %v1620 = vpop.permute.xlu0 %1619
        %v1621 = vsel %vm771, %v1618, %v1620
        %v1622 = vsel %vm771, %v1620, %v1618
        %v1623 = vld [vmem:[#allocation6] sm:$0x3]
        %v1625 = vlaneseq
        %v1626 = vshrl.u32 %v1625, 7
        %v1627 = vsub.s32 0, %v1626
        %v1628 = vrot.slane %v1623, %v1627
        %v1629 = vlaneseq
        %v1630 = vshrl.u32 %v1629, 7
        %v1631 = vsub.s32 1, %v1630
        %v1632 = vrot.slane %v1623, %v1631
        %v1635 = vmul.f32 %v1622, %v1628
        %v1636 = vmul.f32 %v1621, %v1632
        %1637 = vst [vmem:[#allocation2] sm:$0xff] %v1635
        %1638 = vst [vmem:[#allocation2 + $0x8] sm:$0xff] %v1636
        %1639 = vrot.lane.b32.xlu0 %v1615, 16
        %v1640 = vpop.permute.xlu0 %1639
        %1641 = vrot.lane.b32.xlu0 %v1616, 16
        %v1642 = vpop.permute.xlu0 %1641
        %v1643 = vsel %vm794, %v1640, %v1642
        %v1644 = vsel %vm794, %v1642, %v1640
        %v1645 = vld [vmem:[%s797] sm:$0x3]
        %v1647 = vlaneseq
        %v1648 = vshrl.u32 %v1647, 7
        %v1649 = vsub.s32 0, %v1648
        %v1650 = vrot.slane %v1645, %v1649
        %v1651 = vlaneseq
        %v1652 = vshrl.u32 %v1651, 7
        %v1653 = vsub.s32 1, %v1652
        %v1654 = vrot.slane %v1645, %v1653
        %v1657 = vmul.f32 %v1644, %v1650
        %v1658 = vmul.f32 %v1643, %v1654
        %1659 = vst [vmem:[#allocation2 + $0x10] sm:$0xff] %v1657
        %1660 = vst [vmem:[#allocation2 + $0x18] sm:$0xff] %v1658
        %1661 = vrot.lane.b32.xlu0 %v1615, 15
        %v1662 = vpop.permute.xlu0 %1661
        %1663 = vrot.lane.b32.xlu0 %v1616, 15
        %v1664 = vpop.permute.xlu0 %1663
        %v1665 = vsel %vm818, %v1662, %v1664
        %v1666 = vsel %vm818, %v1664, %v1662
        %v1667 = vld [vmem:[%s821] sm:$0x3]
        %v1669 = vlaneseq
        %v1670 = vshrl.u32 %v1669, 7
        %v1671 = vsub.s32 0, %v1670
        %v1672 = vrot.slane %v1667, %v1671
        %v1673 = vlaneseq
        %v1674 = vshrl.u32 %v1673, 7
        %v1675 = vsub.s32 1, %v1674
        %v1676 = vrot.slane %v1667, %v1675
        %v1679 = vmul.f32 %v1666, %v1672
        %v1680 = vmul.f32 %v1665, %v1676
        %1681 = vst [vmem:[#allocation2 + $0x20] sm:$0xff] %v1679
        %1682 = vst [vmem:[#allocation2 + $0x28] sm:$0xff] %v1680
        %1683 = vrot.lane.b32.xlu0 %v1615, 1
        %v1684 = vpop.permute.xlu0 %1683
        %1685 = vrot.lane.b32.xlu0 %v1616, 1
        %v1686 = vpop.permute.xlu0 %1685
        %v1687 = vsel %vm842, %v1684, %v1686
        %v1688 = vsel %vm842, %v1686, %v1684
        %v1689 = vld [vmem:[%s845] sm:$0x3]
        %v1691 = vlaneseq
        %v1692 = vshrl.u32 %v1691, 7
        %v1693 = vsub.s32 0, %v1692
        %v1694 = vrot.slane %v1689, %v1693
        %v1695 = vlaneseq
        %v1696 = vshrl.u32 %v1695, 7
        %v1697 = vsub.s32 1, %v1696
        %v1698 = vrot.slane %v1689, %v1697
        %v1701 = vmul.f32 %v1688, %v1694
        %v1702 = vmul.f32 %v1687, %v1698
        %1703 = vst [vmem:[#allocation2 + $0x30] sm:$0xff] %v1701
        %1704 = vst [vmem:[#allocation2 + $0x38] sm:$0xff] %v1702
        %v1705 = vld [vmem:[%s862] sm:$0x3]
        %v1707 = vlaneseq
        %v1708 = vshrl.u32 %v1707, 7
        %v1709 = vsub.s32 0, %v1708
        %v1710 = vrot.slane %v1705, %v1709
        %v1711 = vlaneseq
        %v1712 = vshrl.u32 %v1711, 7
        %v1713 = vsub.s32 1, %v1712
        %v1714 = vrot.slane %v1705, %v1713
        %v1717 = vmul.f32 %v1615, %v1710
        %v1718 = vmul.f32 %v1616, %v1714
        %1719 = vst [vmem:[#allocation2 + $0x40] sm:$0xff] %v1717
        %1720 = vst [vmem:[#allocation2 + $0x48] sm:$0xff] %v1718
        %1721 = vrot.lane.b32.xlu0 %v1615, 127
        %v1722 = vpop.permute.xlu0 %1721
        %1723 = vrot.lane.b32.xlu0 %v1616, 127
        %v1724 = vpop.permute.xlu0 %1723
        %v1725 = vsel %vm883, %v1722, %v1724
        %v1726 = vsel %vm883, %v1724, %v1722
        %v1727 = vld [vmem:[%s886] sm:$0x3]
        %v1729 = vlaneseq
        %v1730 = vshrl.u32 %v1729, 7
        %v1731 = vsub.s32 0, %v1730
        %v1732 = vrot.slane %v1727, %v1731
        %v1733 = vlaneseq
        %v1734 = vshrl.u32 %v1733, 7
        %v1735 = vsub.s32 1, %v1734
        %v1736 = vrot.slane %v1727, %v1735
        %v1739 = vmul.f32 %v1725, %v1732
        %v1740 = vmul.f32 %v1726, %v1736
        %1741 = vst [vmem:[#allocation2 + $0x50] sm:$0xff] %v1739
        %1742 = vst [vmem:[#allocation2 + $0x58] sm:$0xff] %v1740
        %1743 = vrot.lane.b32.xlu0 %v1615, 113
        %v1744 = vpop.permute.xlu0 %1743
        %1745 = vrot.lane.b32.xlu0 %v1616, 113
        %v1746 = vpop.permute.xlu0 %1745
        %v1747 = vsel %vm907, %v1744, %v1746
        %v1748 = vsel %vm907, %v1746, %v1744
        %v1749 = vld [vmem:[%s910] sm:$0x3]
        %v1751 = vlaneseq
        %v1752 = vshrl.u32 %v1751, 7
        %v1753 = vsub.s32 0, %v1752
        %v1754 = vrot.slane %v1749, %v1753
        %v1755 = vlaneseq
        %v1756 = vshrl.u32 %v1755, 7
        %v1757 = vsub.s32 1, %v1756
        %v1758 = vrot.slane %v1749, %v1757
        %v1761 = vmul.f32 %v1747, %v1754
        %v1762 = vmul.f32 %v1748, %v1758
        %1763 = vst [vmem:[#allocation2 + $0x60] sm:$0xff] %v1761
        %1764 = vst [vmem:[#allocation2 + $0x68] sm:$0xff] %v1762
        %1765 = vrot.lane.b32.xlu0 %v1615, 112
        %v1766 = vpop.permute.xlu0 %1765
        %1767 = vrot.lane.b32.xlu0 %v1616, 112
        %v1768 = vpop.permute.xlu0 %1767
        %v1769 = vsel %vm931, %v1766, %v1768
        %v1770 = vsel %vm931, %v1768, %v1766
        %v1771 = vld [vmem:[%s934] sm:$0x3]
        %v1773 = vlaneseq
        %v1774 = vshrl.u32 %v1773, 7
        %v1775 = vsub.s32 0, %v1774
        %v1776 = vrot.slane %v1771, %v1775
        %v1777 = vlaneseq
        %v1778 = vshrl.u32 %v1777, 7
        %v1779 = vsub.s32 1, %v1778
        %v1780 = vrot.slane %v1771, %v1779
        %v1783 = vmul.f32 %v1769, %v1776
        %v1784 = vmul.f32 %v1770, %v1780
        %1785 = vst [vmem:[#allocation2 + $0x70] sm:$0xff] %v1783
        %1786 = vst [vmem:[#allocation2 + $0x78] sm:$0xff] %v1784
        %1787 = vrot.lane.b32.xlu0 %v1615, 111
        %v1788 = vpop.permute.xlu0 %1787
        %1789 = vrot.lane.b32.xlu0 %v1616, 111
        %v1790 = vpop.permute.xlu0 %1789
        %v1791 = vsel %vm955, %v1788, %v1790
        %v1792 = vsel %vm955, %v1790, %v1788
        %v1793 = vld [vmem:[%s958] sm:$0x3]
        %v1795 = vlaneseq
        %v1796 = vshrl.u32 %v1795, 7
        %v1797 = vsub.s32 0, %v1796
        %v1798 = vrot.slane %v1793, %v1797
        %v1799 = vlaneseq
        %v1800 = vshrl.u32 %v1799, 7
        %v1801 = vsub.s32 1, %v1800
        %v1802 = vrot.slane %v1793, %v1801
        %v1805 = vmul.f32 %v1791, %v1798
        %v1806 = vmul.f32 %v1792, %v1802
        %1807 = vst [vmem:[#allocation2 + $0x80] sm:$0xff] %v1805
        %1808 = vst [vmem:[#allocation2 + $0x88] sm:$0xff] %v1806
        %v1809 = vld [vmem:[#allocation2] sm:$0xff]
        %v1810 = vld [vmem:[#allocation2 + $0x8] sm:$0xff]
        %v1811 = vld [vmem:[#allocation2 + $0x10] sm:$0xff]
        %v1812 = vld [vmem:[#allocation2 + $0x18] sm:$0xff]
        %v1813 = vld [vmem:[#allocation2 + $0x20] sm:$0xff]
        %v1814 = vld [vmem:[#allocation2 + $0x28] sm:$0xff]
        %v1815 = vld [vmem:[#allocation2 + $0x30] sm:$0xff]
        %v1816 = vld [vmem:[#allocation2 + $0x38] sm:$0xff]
        %v1817 = vld [vmem:[#allocation2 + $0x40] sm:$0xff]
        %v1818 = vld [vmem:[#allocation2 + $0x48] sm:$0xff]
        %v1819 = vld [vmem:[#allocation2 + $0x50] sm:$0xff]
        %v1820 = vld [vmem:[#allocation2 + $0x58] sm:$0xff]
        %v1821 = vld [vmem:[#allocation2 + $0x60] sm:$0xff]
        %v1822 = vld [vmem:[#allocation2 + $0x68] sm:$0xff]
        %v1823 = vld [vmem:[#allocation2 + $0x70] sm:$0xff]
        %v1824 = vld [vmem:[#allocation2 + $0x78] sm:$0xff]
        %v1825 = vld [vmem:[#allocation2 + $0x80] sm:$0xff]
        %v1826 = vld [vmem:[#allocation2 + $0x88] sm:$0xff]
        %v1827 = vpack.c.bf16 %v1811, %v1809
        %v1828 = vpack.c.bf16 %v1812, %v1810
        %v1829 = vpack.c.bf16 %v1815, %v1813
        %v1830 = vpack.c.bf16 %v1816, %v1814
        %v1831 = vpack.c.bf16 %v1819, %v1817
        %v1832 = vpack.c.bf16 %v1820, %v1818
        %v1833 = vpack.c.bf16 %v1823, %v1821
        %v1834 = vpack.c.bf16 %v1824, %v1822
        %v1835 = vpack.c.bf16 %v1825, %v1825
        %v1836 = vpack.c.bf16 %v1826, %v1826
        %v1837 = vld [vmem:[#allocation24] sm:$0xf]
        %v1838 = vld [vmem:[#allocation26] sm:$0xff]
        %1840 = vset.pattern.permute.xlu0 0
        %1841 = vperm.xlu0 %1840, %v1838
        %v1842 = vpop.permute.xlu0 %1841
        %v1845 = vsel %vm1010, %v1837, 0
        %v1848 = vsel %vm1014, %v1835, 0
        %v1851 = vsel %vm1014, %v1836, 0
        %1853 = vmatprep.subr.bf16.mxu0 %v1828
        %1854 = vmatpush1.bf16.msra.mxu0 %v1827
        %1855 = vmatprep.subr.bf16.mxu0 %v1830
        %1856 = vmatpush1.bf16.msra.mxu0 %v1829
        %1857 = vmatprep.subr.bf16.mxu0 %v1832
        %1858 = vmatpush1.bf16.msra.mxu0 %v1831
        %1859 = vmatprep.subr.bf16.mxu0 %v1834
        %1860 = vmatpush1.bf16.msra.mxu0 %v1833
        %1861 = vmatprep.subr.bf16.mxu0 %v1851
        %1862 = vmatpush1.bf16.msra.mxu0 %v1848
        %1863 = vmatprep.subr.bf16.mxu0 0
        %1864 = vmatpush1.bf16.msra.mxu0 0
        %1865 = vmatprep.subr.bf16.mxu0 0
        %1866 = vmatpush1.bf16.msra.mxu0 0
        %1867 = vmatprep.subr.bf16.mxu0 0
        %1868 = vmatpush1.bf16.msra.mxu0 0
        %1869 = vmatprep.subr.bf16.mxu0 0
        %1870 = vmatpush1.bf16.msra.mxu0 0
        %1871 = vmatprep.subr.bf16.mxu0 0
        %1872 = vmatpush1.bf16.msra.mxu0 0
        %1873 = vmatprep.subr.bf16.mxu0 0
        %1874 = vmatpush1.bf16.msra.mxu0 0
        %1875 = vmatprep.subr.bf16.mxu0 0
        %1876 = vmatpush1.bf16.msra.mxu0 0
        %1877 = vmatprep.subr.bf16.mxu0 0
        %1878 = vmatpush1.bf16.msra.mxu0 0
        %1879 = vmatprep.subr.bf16.mxu0 0
        %1880 = vmatpush1.bf16.msra.mxu0 0
        %1881 = vmatprep.subr.bf16.mxu0 0
        %1882 = vmatpush1.bf16.msra.mxu0 0
        %1883 = vmatprep.subr.bf16.mxu0 0
        %1884 = vmatpush1.bf16.msra.mxu0 0
        %1885 = vmatprep.mubr.bf16.mxu0 0
        %1886 = vmatmul.mubr.bf16.gmra.mrb[0].mxu0 %v1845
        %v1887 = vpop.f32.mrb[0].mxu0
        %v1888 = vadd.f32 %v1842, %v1887
        %v1889 = vpop.f32.mrb[0].mxu0
        %v1890 = vadd.f32 %v1842, %v1889
        %v1891 = vpop.f32.mrb[0].mxu0
        %v1892 = vpop.f32.mrb[0].mxu0
        %1893 = vdwg.mxu0
        %vm1894 = vcmp.ge.f32.partialorder %v1888, 0.0
        %vm1895 = vcmp.ge.f32.partialorder %v1890, 0.0
        %v1896 = vmul.f32 %v1888, 0.01
        %v1897 = vmul.f32 %v1890, 0.01
        %v1898 = vsel %vm1894, %v1888, %v1896
        %v1899 = vsel %vm1895, %v1890, %v1897
        %1900 = vst [vmem:[%s745] sm:$0xff] %v1898
        %1901 = vst [vmem:[%s745 + $0x8] sm:$0xff] %v1899
        %v1902 = vadd.f32 %v1898, %v1899
        %1903 = vadd.xlane.f32.xlu0 %v1902
        %v1904 = vpop.xlane.xlu0 %1903
        %vm1905 = vcmask 7168
        %1906 = vst.msk [vmem:[%s752] sm:$0xff] %vm1905, %v1904
        %v1907 = vmul.f32 %v1898, %v1898
        %v1908 = vmul.f32 %v1899, %v1899
        %v1909 = vadd.f32 %v1907, %v1908
        %1910 = vadd.xlane.f32.xlu0 %v1909
        %v1911 = vpop.xlane.xlu0 %1910
        %1912 = vst.msk [vmem:[%s759] sm:$0xff] %vm1905, %v1911
        %s1913 = sand.u32 %s373, 1
        %s1914 = scalar_lea.sflag [#allocation5], %s1913
        %s1915 = sand.u32 %s373, 1
        %s1916 = smul.addr %s1915, 16
        %s1917 = scalar_lea.vmem [#allocation27], %s1916
        %s1918 = sand.u32 %s45, 1
        %s1919 = scalar_lea.sflag [#allocation29], %s1918
        %s1920 = sand.u32 %s399, 1
        %s1921 = smul.addr %s1920, 8
        %s1922 = scalar_lea.vmem [#allocation28], %s1921
        %s1923 = sand.u32 %s45, 1
        %s1924 = scalar_lea.sflag [#allocation29], %s1923
        %s1925 = sand.u32 %s425, 1
        %s1926 = smul.addr %s1925, 8
        %s1927 = scalar_lea.vmem [#allocation30], %s1926
        // Predicated region
        $region141: #{densenet2d_down_block.4} parent=79 // pred_check
          %p1928 = pneg %p383
        $region142: #{densenet2d_down_block.4} parent=79 // pred_check_branch
          %1930 = sbr.rel (%p1928) target = $region144
        $region143: #{densenet2d_down_block.4} parent=79 // pred_region
          %s1932 = ssub.s32 256, 256
          %1933 = vsyncadd %s1914, %s1932
          %s1934 = smul.addr %s45, 2
          %s1935 = smul.addr %s1934, 128
          %s1936 = scalar_lea.hbm %s15, %s1935
          %s1938 = sshll.u32 %s1917, 4
          %s1939 = int_to_ptr.vmem [resolvable:$true] %s1938
          %1941 = dma.vmem_to_hbm [thread:$0]  %s1939, 256, %s1936, %s1914
        $region144: #{densenet2d_down_block.4} parent=79 // pred_fallthru
          _
        // Predicated region
        $region145: #{densenet2d_down_block.4} parent=79 // pred_check
          %p1942 = pneg %p409
        $region146: #{densenet2d_down_block.4} parent=79 // pred_check_branch
          %1944 = sbr.rel (%p1942) target = $region148
        $region147: #{densenet2d_down_block.4} parent=79 // pred_region
          %s1946 = ssub.s32 128, 128
          %1947 = vsyncadd %s1919, %s1946
          %s1948 = smul.addr %s45, 128
          %s1949 = scalar_lea.hbm %s16, %s1948
          %s1951 = sshll.u32 %s1922, 4
          %s1952 = int_to_ptr.vmem [resolvable:$true] %s1951
          %1954 = dma.vmem_to_hbm [thread:$0]  %s1952, 128, %s1949, %s1919
        $region148: #{densenet2d_down_block.4} parent=79 // pred_fallthru
          _
        // Predicated region
        $region149: #{densenet2d_down_block.4} parent=79 // pred_check
          %p1955 = pneg %p435
        $region150: #{densenet2d_down_block.4} parent=79 // pred_check_branch
          %1957 = sbr.rel (%p1955) target = $region152
        $region151: #{densenet2d_down_block.4} parent=79 // pred_region
          %s1959 = ssub.s32 128, 128
          %1960 = vsyncadd %s1924, %s1959
          %s1961 = smul.addr %s45, 128
          %s1962 = scalar_lea.hbm %s17, %s1961
          %s1964 = sshll.u32 %s1927, 4
          %s1965 = int_to_ptr.vmem [resolvable:$true] %s1964
          %1967 = dma.vmem_to_hbm [thread:$0]  %s1965, 128, %s1962, %s1924
        $region152: #{densenet2d_down_block.4} parent=79 // pred_fallthru
          _
      $region80: #{densenet2d_down_block.4} parent=5 // pred_fallthru
        _
      %p1968 = scmp.le.s32.totalorder 2, %s40
      // Predicated region
      $region153: #{densenet2d_down_block.4} parent=5 // pred_check
        %p1969 = pneg %p1968
      $region154: #{densenet2d_down_block.4} parent=5 // pred_check_branch
        %1971 = sbr.rel (%p1969) target = $region156
      $region155: #{densenet2d_down_block.4} parent=5 // pred_region
        %s1972 = ssub.s32 %s40, 2
        // Predicated region
        $region157: #{densenet2d_down_block.4} parent=155 // pred_check
          %p1973 = pneg %p389
        $region158: #{densenet2d_down_block.4} parent=155 // pred_check_branch
          %1975 = sbr.rel (%p1973) target = $region160
        $region159: #{densenet2d_down_block.4} parent=155 // pred_region
          %s1976 = sand.u32 %s374, 1
          %s1977 = scalar_lea.sflag [#allocation5], %s1976
          %s1978 = sand.u32 %s374, 1
          %s1979 = smul.addr %s1978, 16
          %s1980 = scalar_lea.vmem [#allocation27], %s1979
          %1981 = dma.done %s1977, 256
        $region160: #{densenet2d_down_block.4} parent=155 // pred_fallthru
          _
        // Predicated region
        $region161: #{densenet2d_down_block.4} parent=155 // pred_check
          %p1982 = pneg %p415
        $region162: #{densenet2d_down_block.4} parent=155 // pred_check_branch
          %1984 = sbr.rel (%p1982) target = $region164
        $region163: #{densenet2d_down_block.4} parent=155 // pred_region
          %s1985 = sand.u32 %s46, 1
          %s1986 = scalar_lea.sflag [#allocation29], %s1985
          %s1987 = sand.u32 %s400, 1
          %s1988 = smul.addr %s1987, 8
          %s1989 = scalar_lea.vmem [#allocation28], %s1988
          %1990 = dma.done %s1986, 128
        $region164: #{densenet2d_down_block.4} parent=155 // pred_fallthru
          _
        // Predicated region
        $region165: #{densenet2d_down_block.4} parent=155 // pred_check
          %p1991 = pneg %p441
        $region166: #{densenet2d_down_block.4} parent=155 // pred_check_branch
          %1993 = sbr.rel (%p1991) target = $region168
        $region167: #{densenet2d_down_block.4} parent=155 // pred_region
          %s1994 = sand.u32 %s46, 1
          %s1995 = scalar_lea.sflag [#allocation29], %s1994
          %s1996 = sand.u32 %s426, 1
          %s1997 = smul.addr %s1996, 8
          %s1998 = scalar_lea.vmem [#allocation30], %s1997
          %1999 = dma.done %s1995, 128
        $region168: #{densenet2d_down_block.4} parent=155 // pred_fallthru
          _
      $region156: #{densenet2d_down_block.4} parent=5 // pred_fallthru
        _
    $region6: #{densenet2d_down_block.4} parent=1 // loop_footer
      %s44 = sadd.s32 1, %s40
    $region7: #{densenet2d_down_block.4} parent=1 // loop_footer_branch
      %39 = sbr.rel target = $region3
    $region8: #{densenet2d_down_block.4} parent=1 // loop_exit
      _
    %2000 = vsyncpa [#allocation4], 1
    %s2001 = scalar_lea.sflag [#allocation4], 1
    %2002 = vsyncpa %s2001, 1
    %2003 = vsyncpa [#allocation7], 1
    %2004 = vsyncpa [#allocation10], 1
    %2005 = vsyncpa [#allocation13], 1
    %2006 = vsyncpa [#allocation16], 1
    %2007 = vsyncpa [#allocation19], 1
    %2008 = vsyncpa [#allocation22], 1
    %2009 = vsyncpa [#allocation25], 1
    %2010 = vsyncpa [#allocation5], 1
    %s2011 = scalar_lea.sflag [#allocation5], 1
    %2012 = vsyncpa %s2011, 1
    %2013 = vsyncpa [#allocation29], 1
    %s2014 = scalar_lea.sflag [#allocation29], 1
    %2015 = vsyncpa %s2014, 1

</llo_original>
